<compile_context>
chip_gen: v6e
topology: v6e:2x2x1
jax: 0.10.0
libtpu: 0.0.40
codegen_flags: <defaults>
</compile_context>

<pallas_src>
import jax
import jax.numpy as jnp
from jax import lax
from jax.experimental import pallas as pl
from jax.experimental.pallas import tpu as pltpu

BN_EPS = 1e-5  # torch.nn.BatchNorm2d default eps


def _hswish(v):
    return v * (jnp.clip(v + 3.0, 0.0, 6.0) * (1.0 / 6.0))


def _hsigmoid(v):
    return jnp.clip(v + 3.0, 0.0, 6.0) * (1.0 / 6.0)


def _mxu_mix(w, x):
    """(cout, cin) @ (cin, L) on the MXU; HIGHEST precision keeps f32 accuracy."""
    return jnp.dot(w, x, precision=lax.Precision.HIGHEST,
                   preferred_element_type=jnp.float32)


def _vpu_mix(w, x):
    """Tiny channel mix (lane dim == 1, SE FCs) as VPU broadcast-FMAs with two
    independent accumulator chains (MXU is pointless at L == 1)."""
    _, cin = w.shape
    acc0 = w[:, 0:1] * x[0:1, :]
    acc1 = jnp.zeros_like(acc0)
    for ci in range(1, cin):
        term = w[:, ci:ci + 1] * x[ci:ci + 1, :]
        if ci % 2:
            acc1 = acc1 + term
        else:
            acc0 = acc0 + term
    return acc0 + acc1


def _make_kernel(*, inp, hidden, oup, red, ksize, H, W, use_se, use_hs,
                 identity, off):
    HW = H * W
    pad = (ksize - 1) // 2

    def act(v):
        return _hswish(v) if use_hs else jnp.maximum(v, 0.0)

    def kernel(x_ref, pack_ref, masks_ref, o_ref):
        # --- unpack BN-folded params (one wide DMA; static slices) ----------
        w1 = pack_ref[0:hidden, off["w1"]:off["w1"] + inp]           # s1 folded
        b1 = pack_ref[0:hidden, off["b1"]:off["b1"] + 1]
        wdw = pack_ref[0:hidden, off["wdw"]:off["wdw"] + ksize * ksize]  # s2 folded
        b2 = pack_ref[0:hidden, off["b2"]:off["b2"] + 1]
        w3 = pack_ref[0:oup, off["w3"]:off["w3"] + hidden]           # s3 folded
        b3 = pack_ref[0:oup, off["b3"]:off["b3"] + 1]
        if use_se:
            fc1w = pack_ref[0:red, off["fc1w"]:off["fc1w"] + hidden]
            fc1b = pack_ref[0:red, off["fc1b"]:off["fc1b"] + 1]
            fc2w = pack_ref[0:hidden, off["fc2w"]:off["fc2w"] + red]
            fc2b = pack_ref[0:hidden, off["fc2b"]:off["fc2b"] + 1]
        masks = masks_ref[...]                                       # (k*k, HW)

        nb = x_ref.shape[0]       # static: 1 (grid over batch) or N (one step)
        for b in range(nb):
            x = x_ref[b]                                             # (inp, HW)

            # ---- 1x1 expand conv (MXU) + BN1 shift + activation ------------
            y = act(_mxu_mix(w1, x) + b1)                            # (hidden, HW)

            # ---- depthwise kxk conv, stride 1: k*k XLU lane-rolls with -----
            # ---- precomputed boundary masks; 3 independent acc chains ------
            accs = [jnp.zeros((hidden, HW), jnp.float32) for _ in range(3)]
            t = 0
            for kh in range(ksize):
                for kw in range(ksize):
                    dh, dw = kh - pad, kw - pad
                    wtap = wdw[:, t:t + 1]                           # (hidden, 1)
                    if dh == 0 and dw == 0:
                        tap = y
                    else:
                        shift = (-(dh * W + dw)) % HW                # np.roll semantics
                        tap = pltpu.roll(y, shift, 1) * masks[t:t + 1, :]
                    accs[t % 3] = accs[t % 3] + wtap * tap
                    t += 1
            z = (accs[0] + accs[1]) + (accs[2] + b2)                 # BN2 shift

            # ---- squeeze-and-excite (tiny, lane dim 1 -> VPU) ---------------
            if use_se:
                pooled = jnp.mean(z, axis=1, keepdims=True)          # (hidden, 1)
                h1 = jnp.maximum(_vpu_mix(fc1w, pooled) + fc1b, 0.0)
                gate = _hsigmoid(_vpu_mix(fc2w, h1) + fc2b)
                z = z * gate
            z = act(z)

            # ---- 1x1 project conv (MXU) + BN3 shift (+ residual) ------------
            out = _mxu_mix(w3, z) + b3                               # (oup, HW)
            if identity:
                out = out + x
            o_ref[b] = out.astype(o_ref.dtype)

    return kernel


def _round_up(v, m):
    return (v + m - 1) // m * m


def _pack_params(entries, rmax):
    """Pack small 2-D f32 params (row-padded to rmax) into one lane-dense array."""
    off, cols, c = {}, [], 0
    for name, a in entries:
        a = jnp.asarray(a, jnp.float32)
        r, k = a.shape
        off[name] = c
        cols.append(jnp.pad(a, ((0, rmax - r), (0, 0))))
        c += k
    pack = jnp.concatenate(cols, axis=1)
    pack = jnp.pad(pack, ((0, 0), (0, _round_up(c, 128) - c)))
    return pack, off


def _single_grid_step():
    # v5e / v6e: single TensorCore -> one grid step over the whole batch halves
    # fixed per-step overhead.  v7x (and unknown): keep grid=(N,) "parallel".
    try:
        dk = jax.devices()[0].device_kind.lower()
    except Exception:
        return False
    return any(t in dk for t in
               ("v5e", "v5 lite", "v5lite", "v6e", "v6 lite", "trillium"))


def mobilenet_block(x, params, *, inp, oup, hidden_dim, kernel_size, stride,
                    use_se, use_hs):
    """MobileNet_Block forward (eval mode) as a single fused Pallas kernel."""
    assert stride in (1, 2)
    if stride != 1:
        # TODO(synk): stride=2 needs a lane-strided spatial subsample of the depthwise output.
        raise NotImplementedError("Pallas MobileNet_Block kernel supports stride=1 only")
    if inp == hidden_dim:
        # TODO(synk): no-expansion branch (inp == hidden_dim) not wired up in the Pallas path.
        raise NotImplementedError("Pallas MobileNet_Block kernel expects inp != hidden_dim")

    N, C, H, W = x.shape
    assert C == inp
    HW = H * W                                   # lane-dense when a multiple of 128
    pad = (kernel_size - 1) // 2
    identity = (stride == 1 and inp == oup)
    red = params["se_fc1_w"].shape[0] if use_se else 0

    def fold_bn(gamma, beta, mean, var):
        s = gamma / jnp.sqrt(var + BN_EPS)
        return s.reshape(-1, 1), (beta - mean * s).reshape(-1, 1)

    s1, b1 = fold_bn(*params["bn1"])
    s2, b2 = fold_bn(*params["bn2"])
    s3, b3 = fold_bn(*params["bn3"])

    # BN scales folded into the conv weights (exact algebraic fold, once, host).
    w1 = params["conv1_w"].reshape(hidden_dim, inp) * s1
    wdw = params["dw_w"].reshape(hidden_dim, kernel_size * kernel_size) * s2
    w3 = params["conv3_w"].reshape(oup, hidden_dim) * s3

    entries = [("w1", w1), ("b1", b1), ("wdw", wdw), ("b2", b2),
               ("w3", w3), ("b3", b3)]
    if use_se:
        entries += [("fc1w", params["se_fc1_w"]),
                    ("fc1b", params["se_fc1_b"].reshape(-1, 1)),
                    ("fc2w", params["se_fc2_w"]),
                    ("fc2b", params["se_fc2_b"].reshape(-1, 1))]
    rmax = _round_up(max(hidden_dim, oup, inp, max(red, 1)), 8)
    pack, off = _pack_params(entries, rmax)

    # Precomputed depthwise boundary masks: one (k*k, HW) f32 load replaces the
    # per-tap iota / div / mod / compare chains on the saturated VALU slot.
    lane = jnp.arange(HW, dtype=jnp.int32)
    row, col = lane // W, lane % W
    mrows = []
    for kh in range(kernel_size):
        for kw in range(kernel_size):
            dh, dw = kh - pad, kw - pad
            valid = ((row + dh >= 0) & (row + dh < H) &
                     (col + dw >= 0) & (col + dw < W))
            mrows.append(valid.astype(jnp.float32))
    masks = jnp.stack(mrows, axis=0)                          # (k*k, HW)

    # Free reshape: NCHW kept, spatial flattened onto the minor (lane) axis.
    x2 = x.reshape(N, inp, HW).astype(jnp.float32)

    kernel = _make_kernel(inp=inp, hidden=hidden_dim, oup=oup, red=red,
                          ksize=kernel_size, H=H, W=W, use_se=use_se,
                          use_hs=use_hs, identity=identity, off=off)

    if _single_grid_step() or N == 1:
        grid, nb = (1,), N
        xmap = lambda n: (0, 0, 0)
    else:
        grid, nb = (N,), 1
        xmap = lambda n: (n, 0, 0)

    out = pl.pallas_call(
        kernel,
        out_shape=jax.ShapeDtypeStruct((N, oup, HW), x.dtype),
        grid_spec=pltpu.PrefetchScalarGridSpec(
            num_scalar_prefetch=0,
            grid=grid,
            in_specs=[
                pl.BlockSpec((nb, inp, HW), xmap),            # x
                pl.BlockSpec(pack.shape, lambda n: (0, 0)),   # packed params
                pl.BlockSpec(masks.shape, lambda n: (0, 0)),  # depthwise masks
            ],
            out_specs=pl.BlockSpec((nb, oup, HW), xmap),
        ),
        compiler_params=pltpu.CompilerParams(
            dimension_semantics=("parallel",)),
    )(x2, pack, masks)

    return out.reshape(N, oup, H, W)


def mobilenet_block_reference(x, params, *, inp, oup, hidden_dim, kernel_size,
                              stride, use_se, use_hs):
    """Plain-JAX reference matching the PyTorch module semantics (eval mode)."""
    pad = (kernel_size - 1) // 2
    dn = ("NCHW", "OIHW", "NCHW")
    hi = lax.Precision.HIGHEST

    def bn(y, gamma, beta, mean, var):
        s = gamma / jnp.sqrt(var + BN_EPS)
        return y * s[None, :, None, None] + (beta - mean * s)[None, :, None, None]

    act = _hswish if use_hs else (lambda v: jnp.maximum(v, 0.0))

    y = lax.conv_general_dilated(x, params["conv1_w"], (1, 1), "VALID",
                                 dimension_numbers=dn, precision=hi)
    y = act(bn(y, *params["bn1"]))
    y = lax.conv_general_dilated(y, params["dw_w"], (stride, stride),
                                 [(pad, pad), (pad, pad)], dimension_numbers=dn,
                                 feature_group_count=hidden_dim, precision=hi)
    y = bn(y, *params["bn2"])
    if use_se:
        pooled = jnp.mean(y, axis=(2, 3))                       # (N, hidden)
        h = jnp.maximum(jnp.dot(pooled, params["se_fc1_w"].T, precision=hi)
                        + params["se_fc1_b"], 0.0)
        g = _hsigmoid(jnp.dot(h, params["se_fc2_w"].T, precision=hi)
                      + params["se_fc2_b"])
        y = y * g[:, :, None, None]
    y = act(y)
    y = lax.conv_general_dilated(y, params["conv3_w"], (1, 1), "VALID",
                                 dimension_numbers=dn, precision=hi)
    y = bn(y, *params["bn3"])
    if stride == 1 and inp == oup:
        y = y + x
    return y


if __name__ == "__main__":
    # MobileNet_Block(inp=16, oup=16, hidden_dim=32, kernel_size=3, stride=1,
    #                 use_se=True, use_hs=True) on NCHW input (2, 16, 16, 16).
    N, H, W = 2, 16, 16
    inp, oup, hidden_dim, kernel_size, stride = 16, 16, 32, 3, 1
    use_se, use_hs = True, True
    red = hidden_dim // 4                                   # SELayer reduction=4

    key = jax.random.PRNGKey(0)
    ks = jax.random.split(key, 11)

    def bn_init(k, c):
        k1, k2, k3, k4 = jax.random.split(k, 4)
        gamma = 1.0 + 0.1 * jax.random.normal(k1, (c,), jnp.float32)
        beta = 0.1 * jax.random.normal(k2, (c,), jnp.float32)
        mean = 0.1 * jax.random.normal(k3, (c,), jnp.float32)
        var = jnp.abs(jax.random.normal(k4, (c,), jnp.float32)) + 0.5
        return (gamma, beta, mean, var)

    x = jax.random.normal(ks[0], (N, inp, H, W), jnp.float32)
    params = {
        "conv1_w": jax.random.normal(ks[1], (hidden_dim, inp, 1, 1), jnp.float32) * (inp ** -0.5),
        "bn1": bn_init(ks[2], hidden_dim),
        "dw_w": jax.random.normal(ks[3], (hidden_dim, 1, kernel_size, kernel_size), jnp.float32) / kernel_size,
        "bn2": bn_init(ks[4], hidden_dim),
        "se_fc1_w": jax.random.normal(ks[5], (red, hidden_dim), jnp.float32) * (hidden_dim ** -0.5),
        "se_fc1_b": 0.1 * jax.random.normal(ks[6], (red,), jnp.float32),
        "se_fc2_w": jax.random.normal(ks[7], (hidden_dim, red), jnp.float32) * (red ** -0.5),
        "se_fc2_b": 0.1 * jax.random.normal(ks[8], (hidden_dim,), jnp.float32),
        "conv3_w": jax.random.normal(ks[9], (oup, hidden_dim, 1, 1), jnp.float32) * (hidden_dim ** -0.5),
        "bn3": bn_init(ks[10], oup),
    }

    cfg = dict(inp=inp, oup=oup, hidden_dim=hidden_dim, kernel_size=kernel_size,
               stride=stride, use_se=use_se, use_hs=use_hs)

    out = mobilenet_block(x, params, **cfg)
    out = jax.block_until_ready(out)

    ref = mobilenet_block_reference(x, params, **cfg)
    assert out.shape == (N, oup, H, W)
    max_err = float(jnp.max(jnp.abs(out - ref)))
    assert jnp.allclose(out, ref, rtol=5e-4, atol=5e-4), (
        f"mismatch vs reference (max abs err {max_err})")

    print("KERNEL_OK")
</pallas_src>

<mosaic_0001>
module attributes {stable_mosaic.version = 11 : i64} {
  func.func @kernel(%arg0: i32, %arg1: memref<1x16x256xf32, #tpu.memory_space<vmem>>, %arg2: memref<32x128xf32, #tpu.memory_space<vmem>>, %arg3: memref<9x256xf32, #tpu.memory_space<vmem>>, %arg4: memref<1x16x256xf32, #tpu.memory_space<vmem>>) attributes {dimension_semantics = [#tpu.dimension_semantics<parallel>], iteration_bounds = array<i64: 2>, scalar_prefetch = 0 : i64, scratch_operands = 0 : i64, tpu.core_type = #tpu.core_type<tc>, window_params = [{transform_indices = @transform_0, window_bounds = array<i64: 1, 16, 256>}, {pipeline_mode = #tpu.pipeline_mode<synchronous>, transform_indices = @transform_1, window_bounds = array<i64: 32, 128>}, {pipeline_mode = #tpu.pipeline_mode<synchronous>, transform_indices = @transform_2, window_bounds = array<i64: 9, 256>}, {transform_indices = @transform_3, window_bounds = array<i64: 1, 16, 256>}]} {
    %c0 = arith.constant 0 : index
    %c0_0 = arith.constant 0 : index
    %0 = vector.load %arg2[%c0, %c0_0] : memref<32x128xf32, #tpu.memory_space<vmem>>, vector<32x16xf32>
    %c0_1 = arith.constant 0 : index
    %c16 = arith.constant 16 : index
    %1 = vector.load %arg2[%c0_1, %c16] : memref<32x128xf32, #tpu.memory_space<vmem>>, vector<32x1xf32>
    %c0_2 = arith.constant 0 : index
    %c17 = arith.constant 17 : index
    %2 = vector.load %arg2[%c0_2, %c17] : memref<32x128xf32, #tpu.memory_space<vmem>>, vector<32x9xf32>
    %c0_3 = arith.constant 0 : index
    %c26 = arith.constant 26 : index
    %3 = vector.load %arg2[%c0_3, %c26] : memref<32x128xf32, #tpu.memory_space<vmem>>, vector<32x1xf32>
    %c0_4 = arith.constant 0 : index
    %c27 = arith.constant 27 : index
    %4 = vector.load %arg2[%c0_4, %c27] : memref<32x128xf32, #tpu.memory_space<vmem>>, vector<16x32xf32>
    %c0_5 = arith.constant 0 : index
    %c59 = arith.constant 59 : index
    %5 = vector.load %arg2[%c0_5, %c59] : memref<32x128xf32, #tpu.memory_space<vmem>>, vector<16x1xf32>
    %c0_6 = arith.constant 0 : index
    %c60 = arith.constant 60 : index
    %6 = vector.load %arg2[%c0_6, %c60] : memref<32x128xf32, #tpu.memory_space<vmem>>, vector<8x32xf32>
    %c0_7 = arith.constant 0 : index
    %c92 = arith.constant 92 : index
    %7 = vector.load %arg2[%c0_7, %c92] : memref<32x128xf32, #tpu.memory_space<vmem>>, vector<8x1xf32>
    %c0_8 = arith.constant 0 : index
    %c93 = arith.constant 93 : index
    %8 = vector.load %arg2[%c0_8, %c93] : memref<32x128xf32, #tpu.memory_space<vmem>>, vector<32x8xf32>
    %c0_9 = arith.constant 0 : index
    %c101 = arith.constant 101 : index
    %9 = vector.load %arg2[%c0_9, %c101] : memref<32x128xf32, #tpu.memory_space<vmem>>, vector<32x1xf32>
    %c0_10 = arith.constant 0 : index
    %c0_11 = arith.constant 0 : index
    %10 = vector.load %arg3[%c0_10, %c0_11] : memref<9x256xf32, #tpu.memory_space<vmem>>, vector<9x256xf32>
    %c0_12 = arith.constant 0 : index
    %c0_13 = arith.constant 0 : index
    %c0_14 = arith.constant 0 : index
    %11 = vector.load %arg1[%c0_12, %c0_13, %c0_14] : memref<1x16x256xf32, #tpu.memory_space<vmem>>, vector<1x16x256xf32>
    %12 = vector.shape_cast %11 : vector<1x16x256xf32> to vector<16x256xf32>
    %cst = arith.constant dense<0.000000e+00> : vector<32x256xf32>
    %13 = tpu.matmul %0, %12, %cst {dimension_numbers = #tpu.dot_dimension_numbers<[1], [0], [0], [1], [0, 0, 1, 1], [], []>, precision = #tpu.contract_precision<fp32>} : vector<32x16xf32>, vector<16x256xf32>, vector<32x256xf32> -> vector<32x256xf32>
    %14 = vector.broadcast %1 : vector<32x1xf32> to vector<32x256xf32>
    %15 = arith.addf %13, %14 : vector<32x256xf32>
    %cst_15 = arith.constant 3.000000e+00 : f32
    %16 = vector.broadcast %cst_15 : f32 to vector<32x256xf32>
    %17 = arith.addf %15, %16 : vector<32x256xf32>
    %cst_16 = arith.constant 0.000000e+00 : f32
    %cst_17 = arith.constant 6.000000e+00 : f32
    %18 = vector.broadcast %cst_16 : f32 to vector<32x256xf32>
    %19 = arith.maximumf %18, %17 : vector<32x256xf32>
    %20 = vector.broadcast %cst_17 : f32 to vector<32x256xf32>
    %21 = arith.minimumf %20, %19 : vector<32x256xf32>
    %cst_18 = arith.constant 0.166666672 : f32
    %22 = vector.broadcast %cst_18 : f32 to vector<32x256xf32>
    %23 = arith.mulf %21, %22 : vector<32x256xf32>
    %24 = arith.mulf %15, %23 : vector<32x256xf32>
    %cst_19 = arith.constant 0.000000e+00 : f32
    %25 = vector.broadcast %cst_19 : f32 to vector<32x256xf32>
    %cst_20 = arith.constant 0.000000e+00 : f32
    %26 = vector.broadcast %cst_20 : f32 to vector<32x256xf32>
    %cst_21 = arith.constant 0.000000e+00 : f32
    %27 = vector.broadcast %cst_21 : f32 to vector<32x256xf32>
    %28 = vector.extract_strided_slice %2 {offsets = [0, 0], sizes = [32, 1], strides = [1, 1]} : vector<32x9xf32> to vector<32x1xf32>
    %c17_i32 = arith.constant 17 : i32
    %29 = tpu.dynamic_rotate %24 by %c17_i32 dim 1 : vector<32x256xf32>, i32 -> vector<32x256xf32>
    %30 = vector.extract_strided_slice %10 {offsets = [0, 0], sizes = [1, 256], strides = [1, 1]} : vector<9x256xf32> to vector<1x256xf32>
    %31 = vector.broadcast %30 : vector<1x256xf32> to vector<32x256xf32>
    %32 = arith.mulf %29, %31 : vector<32x256xf32>
    %33 = vector.broadcast %28 : vector<32x1xf32> to vector<32x256xf32>
    %34 = arith.mulf %33, %32 : vector<32x256xf32>
    %35 = arith.addf %25, %34 : vector<32x256xf32>
    %36 = vector.extract_strided_slice %2 {offsets = [0, 1], sizes = [32, 1], strides = [1, 1]} : vector<32x9xf32> to vector<32x1xf32>
    %c16_i32 = arith.constant 16 : i32
    %37 = tpu.dynamic_rotate %24 by %c16_i32 dim 1 : vector<32x256xf32>, i32 -> vector<32x256xf32>
    %38 = vector.extract_strided_slice %10 {offsets = [1, 0], sizes = [1, 256], strides = [1, 1]} : vector<9x256xf32> to vector<1x256xf32>
    %39 = vector.broadcast %38 : vector<1x256xf32> to vector<32x256xf32>
    %40 = arith.mulf %37, %39 : vector<32x256xf32>
    %41 = vector.broadcast %36 : vector<32x1xf32> to vector<32x256xf32>
    %42 = arith.mulf %41, %40 : vector<32x256xf32>
    %43 = arith.addf %26, %42 : vector<32x256xf32>
    %44 = vector.extract_strided_slice %2 {offsets = [0, 2], sizes = [32, 1], strides = [1, 1]} : vector<32x9xf32> to vector<32x1xf32>
    %c15_i32 = arith.constant 15 : i32
    %45 = tpu.dynamic_rotate %24 by %c15_i32 dim 1 : vector<32x256xf32>, i32 -> vector<32x256xf32>
    %46 = vector.extract_strided_slice %10 {offsets = [2, 0], sizes = [1, 256], strides = [1, 1]} : vector<9x256xf32> to vector<1x256xf32>
    %47 = vector.broadcast %46 : vector<1x256xf32> to vector<32x256xf32>
    %48 = arith.mulf %45, %47 : vector<32x256xf32>
    %49 = vector.broadcast %44 : vector<32x1xf32> to vector<32x256xf32>
    %50 = arith.mulf %49, %48 : vector<32x256xf32>
    %51 = arith.addf %27, %50 : vector<32x256xf32>
    %52 = vector.extract_strided_slice %2 {offsets = [0, 3], sizes = [32, 1], strides = [1, 1]} : vector<32x9xf32> to vector<32x1xf32>
    %c1_i32 = arith.constant 1 : i32
    %53 = tpu.dynamic_rotate %24 by %c1_i32 dim 1 : vector<32x256xf32>, i32 -> vector<32x256xf32>
    %54 = vector.extract_strided_slice %10 {offsets = [3, 0], sizes = [1, 256], strides = [1, 1]} : vector<9x256xf32> to vector<1x256xf32>
    %55 = vector.broadcast %54 : vector<1x256xf32> to vector<32x256xf32>
    %56 = arith.mulf %53, %55 : vector<32x256xf32>
    %57 = vector.broadcast %52 : vector<32x1xf32> to vector<32x256xf32>
    %58 = arith.mulf %57, %56 : vector<32x256xf32>
    %59 = arith.addf %35, %58 : vector<32x256xf32>
    %60 = vector.extract_strided_slice %2 {offsets = [0, 4], sizes = [32, 1], strides = [1, 1]} : vector<32x9xf32> to vector<32x1xf32>
    %61 = vector.broadcast %60 : vector<32x1xf32> to vector<32x256xf32>
    %62 = arith.mulf %61, %24 : vector<32x256xf32>
    %63 = arith.addf %43, %62 : vector<32x256xf32>
    %64 = vector.extract_strided_slice %2 {offsets = [0, 5], sizes = [32, 1], strides = [1, 1]} : vector<32x9xf32> to vector<32x1xf32>
    %c255_i32 = arith.constant 255 : i32
    %65 = tpu.dynamic_rotate %24 by %c255_i32 dim 1 : vector<32x256xf32>, i32 -> vector<32x256xf32>
    %66 = vector.extract_strided_slice %10 {offsets = [5, 0], sizes = [1, 256], strides = [1, 1]} : vector<9x256xf32> to vector<1x256xf32>
    %67 = vector.broadcast %66 : vector<1x256xf32> to vector<32x256xf32>
    %68 = arith.mulf %65, %67 : vector<32x256xf32>
    %69 = vector.broadcast %64 : vector<32x1xf32> to vector<32x256xf32>
    %70 = arith.mulf %69, %68 : vector<32x256xf32>
    %71 = arith.addf %51, %70 : vector<32x256xf32>
    %72 = vector.extract_strided_slice %2 {offsets = [0, 6], sizes = [32, 1], strides = [1, 1]} : vector<32x9xf32> to vector<32x1xf32>
    %c241_i32 = arith.constant 241 : i32
    %73 = tpu.dynamic_rotate %24 by %c241_i32 dim 1 : vector<32x256xf32>, i32 -> vector<32x256xf32>
    %74 = vector.extract_strided_slice %10 {offsets = [6, 0], sizes = [1, 256], strides = [1, 1]} : vector<9x256xf32> to vector<1x256xf32>
    %75 = vector.broadcast %74 : vector<1x256xf32> to vector<32x256xf32>
    %76 = arith.mulf %73, %75 : vector<32x256xf32>
    %77 = vector.broadcast %72 : vector<32x1xf32> to vector<32x256xf32>
    %78 = arith.mulf %77, %76 : vector<32x256xf32>
    %79 = arith.addf %59, %78 : vector<32x256xf32>
    %80 = vector.extract_strided_slice %2 {offsets = [0, 7], sizes = [32, 1], strides = [1, 1]} : vector<32x9xf32> to vector<32x1xf32>
    %c240_i32 = arith.constant 240 : i32
    %81 = tpu.dynamic_rotate %24 by %c240_i32 dim 1 : vector<32x256xf32>, i32 -> vector<32x256xf32>
    %82 = vector.extract_strided_slice %10 {offsets = [7, 0], sizes = [1, 256], strides = [1, 1]} : vector<9x256xf32> to vector<1x256xf32>
    %83 = vector.broadcast %82 : vector<1x256xf32> to vector<32x256xf32>
    %84 = arith.mulf %81, %83 : vector<32x256xf32>
    %85 = vector.broadcast %80 : vector<32x1xf32> to vector<32x256xf32>
    %86 = arith.mulf %85, %84 : vector<32x256xf32>
    %87 = arith.addf %63, %86 : vector<32x256xf32>
    %88 = vector.extract_strided_slice %2 {offsets = [0, 8], sizes = [32, 1], strides = [1, 1]} : vector<32x9xf32> to vector<32x1xf32>
    %c239_i32 = arith.constant 239 : i32
    %89 = tpu.dynamic_rotate %24 by %c239_i32 dim 1 : vector<32x256xf32>, i32 -> vector<32x256xf32>
    %90 = vector.extract_strided_slice %10 {offsets = [8, 0], sizes = [1, 256], strides = [1, 1]} : vector<9x256xf32> to vector<1x256xf32>
    %91 = vector.broadcast %90 : vector<1x256xf32> to vector<32x256xf32>
    %92 = arith.mulf %89, %91 : vector<32x256xf32>
    %93 = vector.broadcast %88 : vector<32x1xf32> to vector<32x256xf32>
    %94 = arith.mulf %93, %92 : vector<32x256xf32>
    %95 = arith.addf %71, %94 : vector<32x256xf32>
    %96 = arith.addf %79, %87 : vector<32x256xf32>
    %97 = vector.broadcast %3 : vector<32x1xf32> to vector<32x256xf32>
    %98 = arith.addf %95, %97 : vector<32x256xf32>
    %99 = arith.addf %96, %98 : vector<32x256xf32>
    %cst_22 = arith.constant dense<0.000000e+00> : vector<32xf32>
    %100 = vector.multi_reduction <add>, %99, %cst_22 [1] : vector<32x256xf32> to vector<32xf32>
    %101 = vector.shape_cast %100 : vector<32xf32> to vector<32x1xf32>
    %cst_23 = arith.constant 2.560000e+02 : f32
    %102 = vector.broadcast %cst_23 : f32 to vector<32x1xf32>
    %103 = arith.divf %101, %102 : vector<32x1xf32>
    %104 = vector.extract_strided_slice %6 {offsets = [0, 0], sizes = [8, 1], strides = [1, 1]} : vector<8x32xf32> to vector<8x1xf32>
    %105 = vector.extract_strided_slice %103 {offsets = [0, 0], sizes = [1, 1], strides = [1, 1]} : vector<32x1xf32> to vector<1x1xf32>
    %106 = vector.broadcast %105 : vector<1x1xf32> to vector<8x1xf32>
    %107 = arith.mulf %104, %106 : vector<8x1xf32>
    %cst_24 = arith.constant 0.000000e+00 : f32
    %108 = vector.broadcast %cst_24 : f32 to vector<8x1xf32>
    %109 = vector.extract_strided_slice %6 {offsets = [0, 1], sizes = [8, 1], strides = [1, 1]} : vector<8x32xf32> to vector<8x1xf32>
    %110 = vector.extract_strided_slice %103 {offsets = [1, 0], sizes = [1, 1], strides = [1, 1]} : vector<32x1xf32> to vector<1x1xf32>
    %111 = vector.broadcast %110 : vector<1x1xf32> to vector<8x1xf32>
    %112 = arith.mulf %109, %111 : vector<8x1xf32>
    %113 = arith.addf %108, %112 : vector<8x1xf32>
    %114 = vector.extract_strided_slice %6 {offsets = [0, 2], sizes = [8, 1], strides = [1, 1]} : vector<8x32xf32> to vector<8x1xf32>
    %115 = vector.extract_strided_slice %103 {offsets = [2, 0], sizes = [1, 1], strides = [1, 1]} : vector<32x1xf32> to vector<1x1xf32>
    %116 = vector.broadcast %115 : vector<1x1xf32> to vector<8x1xf32>
    %117 = arith.mulf %114, %116 : vector<8x1xf32>
    %118 = arith.addf %107, %117 : vector<8x1xf32>
    %119 = vector.extract_strided_slice %6 {offsets = [0, 3], sizes = [8, 1], strides = [1, 1]} : vector<8x32xf32> to vector<8x1xf32>
    %120 = vector.extract_strided_slice %103 {offsets = [3, 0], sizes = [1, 1], strides = [1, 1]} : vector<32x1xf32> to vector<1x1xf32>
    %121 = vector.broadcast %120 : vector<1x1xf32> to vector<8x1xf32>
    %122 = arith.mulf %119, %121 : vector<8x1xf32>
    %123 = arith.addf %113, %122 : vector<8x1xf32>
    %124 = vector.extract_strided_slice %6 {offsets = [0, 4], sizes = [8, 1], strides = [1, 1]} : vector<8x32xf32> to vector<8x1xf32>
    %125 = vector.extract_strided_slice %103 {offsets = [4, 0], sizes = [1, 1], strides = [1, 1]} : vector<32x1xf32> to vector<1x1xf32>
    %126 = vector.broadcast %125 : vector<1x1xf32> to vector<8x1xf32>
    %127 = arith.mulf %124, %126 : vector<8x1xf32>
    %128 = arith.addf %118, %127 : vector<8x1xf32>
    %129 = vector.extract_strided_slice %6 {offsets = [0, 5], sizes = [8, 1], strides = [1, 1]} : vector<8x32xf32> to vector<8x1xf32>
    %130 = vector.extract_strided_slice %103 {offsets = [5, 0], sizes = [1, 1], strides = [1, 1]} : vector<32x1xf32> to vector<1x1xf32>
    %131 = vector.broadcast %130 : vector<1x1xf32> to vector<8x1xf32>
    %132 = arith.mulf %129, %131 : vector<8x1xf32>
    %133 = arith.addf %123, %132 : vector<8x1xf32>
    %134 = vector.extract_strided_slice %6 {offsets = [0, 6], sizes = [8, 1], strides = [1, 1]} : vector<8x32xf32> to vector<8x1xf32>
    %135 = vector.extract_strided_slice %103 {offsets = [6, 0], sizes = [1, 1], strides = [1, 1]} : vector<32x1xf32> to vector<1x1xf32>
    %136 = vector.broadcast %135 : vector<1x1xf32> to vector<8x1xf32>
    %137 = arith.mulf %134, %136 : vector<8x1xf32>
    %138 = arith.addf %128, %137 : vector<8x1xf32>
    %139 = vector.extract_strided_slice %6 {offsets = [0, 7], sizes = [8, 1], strides = [1, 1]} : vector<8x32xf32> to vector<8x1xf32>
    %140 = vector.extract_strided_slice %103 {offsets = [7, 0], sizes = [1, 1], strides = [1, 1]} : vector<32x1xf32> to vector<1x1xf32>
    %141 = vector.broadcast %140 : vector<1x1xf32> to vector<8x1xf32>
    %142 = arith.mulf %139, %141 : vector<8x1xf32>
    %143 = arith.addf %133, %142 : vector<8x1xf32>
    %144 = vector.extract_strided_slice %6 {offsets = [0, 8], sizes = [8, 1], strides = [1, 1]} : vector<8x32xf32> to vector<8x1xf32>
    %145 = vector.extract_strided_slice %103 {offsets = [8, 0], sizes = [1, 1], strides = [1, 1]} : vector<32x1xf32> to vector<1x1xf32>
    %146 = vector.broadcast %145 : vector<1x1xf32> to vector<8x1xf32>
    %147 = arith.mulf %144, %146 : vector<8x1xf32>
    %148 = arith.addf %138, %147 : vector<8x1xf32>
    %149 = vector.extract_strided_slice %6 {offsets = [0, 9], sizes = [8, 1], strides = [1, 1]} : vector<8x32xf32> to vector<8x1xf32>
    %150 = vector.extract_strided_slice %103 {offsets = [9, 0], sizes = [1, 1], strides = [1, 1]} : vector<32x1xf32> to vector<1x1xf32>
    %151 = vector.broadcast %150 : vector<1x1xf32> to vector<8x1xf32>
    %152 = arith.mulf %149, %151 : vector<8x1xf32>
    %153 = arith.addf %143, %152 : vector<8x1xf32>
    %154 = vector.extract_strided_slice %6 {offsets = [0, 10], sizes = [8, 1], strides = [1, 1]} : vector<8x32xf32> to vector<8x1xf32>
    %155 = vector.extract_strided_slice %103 {offsets = [10, 0], sizes = [1, 1], strides = [1, 1]} : vector<32x1xf32> to vector<1x1xf32>
    %156 = vector.broadcast %155 : vector<1x1xf32> to vector<8x1xf32>
    %157 = arith.mulf %154, %156 : vector<8x1xf32>
    %158 = arith.addf %148, %157 : vector<8x1xf32>
    %159 = vector.extract_strided_slice %6 {offsets = [0, 11], sizes = [8, 1], strides = [1, 1]} : vector<8x32xf32> to vector<8x1xf32>
    %160 = vector.extract_strided_slice %103 {offsets = [11, 0], sizes = [1, 1], strides = [1, 1]} : vector<32x1xf32> to vector<1x1xf32>
    %161 = vector.broadcast %160 : vector<1x1xf32> to vector<8x1xf32>
    %162 = arith.mulf %159, %161 : vector<8x1xf32>
    %163 = arith.addf %153, %162 : vector<8x1xf32>
    %164 = vector.extract_strided_slice %6 {offsets = [0, 12], sizes = [8, 1], strides = [1, 1]} : vector<8x32xf32> to vector<8x1xf32>
    %165 = vector.extract_strided_slice %103 {offsets = [12, 0], sizes = [1, 1], strides = [1, 1]} : vector<32x1xf32> to vector<1x1xf32>
    %166 = vector.broadcast %165 : vector<1x1xf32> to vector<8x1xf32>
    %167 = arith.mulf %164, %166 : vector<8x1xf32>
    %168 = arith.addf %158, %167 : vector<8x1xf32>
    %169 = vector.extract_strided_slice %6 {offsets = [0, 13], sizes = [8, 1], strides = [1, 1]} : vector<8x32xf32> to vector<8x1xf32>
    %170 = vector.extract_strided_slice %103 {offsets = [13, 0], sizes = [1, 1], strides = [1, 1]} : vector<32x1xf32> to vector<1x1xf32>
    %171 = vector.broadcast %170 : vector<1x1xf32> to vector<8x1xf32>
    %172 = arith.mulf %169, %171 : vector<8x1xf32>
    %173 = arith.addf %163, %172 : vector<8x1xf32>
    %174 = vector.extract_strided_slice %6 {offsets = [0, 14], sizes = [8, 1], strides = [1, 1]} : vector<8x32xf32> to vector<8x1xf32>
    %175 = vector.extract_strided_slice %103 {offsets = [14, 0], sizes = [1, 1], strides = [1, 1]} : vector<32x1xf32> to vector<1x1xf32>
    %176 = vector.broadcast %175 : vector<1x1xf32> to vector<8x1xf32>
    %177 = arith.mulf %174, %176 : vector<8x1xf32>
    %178 = arith.addf %168, %177 : vector<8x1xf32>
    %179 = vector.extract_strided_slice %6 {offsets = [0, 15], sizes = [8, 1], strides = [1, 1]} : vector<8x32xf32> to vector<8x1xf32>
    %180 = vector.extract_strided_slice %103 {offsets = [15, 0], sizes = [1, 1], strides = [1, 1]} : vector<32x1xf32> to vector<1x1xf32>
    %181 = vector.broadcast %180 : vector<1x1xf32> to vector<8x1xf32>
    %182 = arith.mulf %179, %181 : vector<8x1xf32>
    %183 = arith.addf %173, %182 : vector<8x1xf32>
    %184 = vector.extract_strided_slice %6 {offsets = [0, 16], sizes = [8, 1], strides = [1, 1]} : vector<8x32xf32> to vector<8x1xf32>
    %185 = vector.extract_strided_slice %103 {offsets = [16, 0], sizes = [1, 1], strides = [1, 1]} : vector<32x1xf32> to vector<1x1xf32>
    %186 = vector.broadcast %185 : vector<1x1xf32> to vector<8x1xf32>
    %187 = arith.mulf %184, %186 : vector<8x1xf32>
    %188 = arith.addf %178, %187 : vector<8x1xf32>
    %189 = vector.extract_strided_slice %6 {offsets = [0, 17], sizes = [8, 1], strides = [1, 1]} : vector<8x32xf32> to vector<8x1xf32>
    %190 = vector.extract_strided_slice %103 {offsets = [17, 0], sizes = [1, 1], strides = [1, 1]} : vector<32x1xf32> to vector<1x1xf32>
    %191 = vector.broadcast %190 : vector<1x1xf32> to vector<8x1xf32>
    %192 = arith.mulf %189, %191 : vector<8x1xf32>
    %193 = arith.addf %183, %192 : vector<8x1xf32>
    %194 = vector.extract_strided_slice %6 {offsets = [0, 18], sizes = [8, 1], strides = [1, 1]} : vector<8x32xf32> to vector<8x1xf32>
    %195 = vector.extract_strided_slice %103 {offsets = [18, 0], sizes = [1, 1], strides = [1, 1]} : vector<32x1xf32> to vector<1x1xf32>
    %196 = vector.broadcast %195 : vector<1x1xf32> to vector<8x1xf32>
    %197 = arith.mulf %194, %196 : vector<8x1xf32>
    %198 = arith.addf %188, %197 : vector<8x1xf32>
    %199 = vector.extract_strided_slice %6 {offsets = [0, 19], sizes = [8, 1], strides = [1, 1]} : vector<8x32xf32> to vector<8x1xf32>
    %200 = vector.extract_strided_slice %103 {offsets = [19, 0], sizes = [1, 1], strides = [1, 1]} : vector<32x1xf32> to vector<1x1xf32>
    %201 = vector.broadcast %200 : vector<1x1xf32> to vector<8x1xf32>
    %202 = arith.mulf %199, %201 : vector<8x1xf32>
    %203 = arith.addf %193, %202 : vector<8x1xf32>
    %204 = vector.extract_strided_slice %6 {offsets = [0, 20], sizes = [8, 1], strides = [1, 1]} : vector<8x32xf32> to vector<8x1xf32>
    %205 = vector.extract_strided_slice %103 {offsets = [20, 0], sizes = [1, 1], strides = [1, 1]} : vector<32x1xf32> to vector<1x1xf32>
    %206 = vector.broadcast %205 : vector<1x1xf32> to vector<8x1xf32>
    %207 = arith.mulf %204, %206 : vector<8x1xf32>
    %208 = arith.addf %198, %207 : vector<8x1xf32>
    %209 = vector.extract_strided_slice %6 {offsets = [0, 21], sizes = [8, 1], strides = [1, 1]} : vector<8x32xf32> to vector<8x1xf32>
    %210 = vector.extract_strided_slice %103 {offsets = [21, 0], sizes = [1, 1], strides = [1, 1]} : vector<32x1xf32> to vector<1x1xf32>
    %211 = vector.broadcast %210 : vector<1x1xf32> to vector<8x1xf32>
    %212 = arith.mulf %209, %211 : vector<8x1xf32>
    %213 = arith.addf %203, %212 : vector<8x1xf32>
    %214 = vector.extract_strided_slice %6 {offsets = [0, 22], sizes = [8, 1], strides = [1, 1]} : vector<8x32xf32> to vector<8x1xf32>
    %215 = vector.extract_strided_slice %103 {offsets = [22, 0], sizes = [1, 1], strides = [1, 1]} : vector<32x1xf32> to vector<1x1xf32>
    %216 = vector.broadcast %215 : vector<1x1xf32> to vector<8x1xf32>
    %217 = arith.mulf %214, %216 : vector<8x1xf32>
    %218 = arith.addf %208, %217 : vector<8x1xf32>
    %219 = vector.extract_strided_slice %6 {offsets = [0, 23], sizes = [8, 1], strides = [1, 1]} : vector<8x32xf32> to vector<8x1xf32>
    %220 = vector.extract_strided_slice %103 {offsets = [23, 0], sizes = [1, 1], strides = [1, 1]} : vector<32x1xf32> to vector<1x1xf32>
    %221 = vector.broadcast %220 : vector<1x1xf32> to vector<8x1xf32>
    %222 = arith.mulf %219, %221 : vector<8x1xf32>
    %223 = arith.addf %213, %222 : vector<8x1xf32>
    %224 = vector.extract_strided_slice %6 {offsets = [0, 24], sizes = [8, 1], strides = [1, 1]} : vector<8x32xf32> to vector<8x1xf32>
    %225 = vector.extract_strided_slice %103 {offsets = [24, 0], sizes = [1, 1], strides = [1, 1]} : vector<32x1xf32> to vector<1x1xf32>
    %226 = vector.broadcast %225 : vector<1x1xf32> to vector<8x1xf32>
    %227 = arith.mulf %224, %226 : vector<8x1xf32>
    %228 = arith.addf %218, %227 : vector<8x1xf32>
    %229 = vector.extract_strided_slice %6 {offsets = [0, 25], sizes = [8, 1], strides = [1, 1]} : vector<8x32xf32> to vector<8x1xf32>
    %230 = vector.extract_strided_slice %103 {offsets = [25, 0], sizes = [1, 1], strides = [1, 1]} : vector<32x1xf32> to vector<1x1xf32>
    %231 = vector.broadcast %230 : vector<1x1xf32> to vector<8x1xf32>
    %232 = arith.mulf %229, %231 : vector<8x1xf32>
    %233 = arith.addf %223, %232 : vector<8x1xf32>
    %234 = vector.extract_strided_slice %6 {offsets = [0, 26], sizes = [8, 1], strides = [1, 1]} : vector<8x32xf32> to vector<8x1xf32>
    %235 = vector.extract_strided_slice %103 {offsets = [26, 0], sizes = [1, 1], strides = [1, 1]} : vector<32x1xf32> to vector<1x1xf32>
    %236 = vector.broadcast %235 : vector<1x1xf32> to vector<8x1xf32>
    %237 = arith.mulf %234, %236 : vector<8x1xf32>
    %238 = arith.addf %228, %237 : vector<8x1xf32>
    %239 = vector.extract_strided_slice %6 {offsets = [0, 27], sizes = [8, 1], strides = [1, 1]} : vector<8x32xf32> to vector<8x1xf32>
    %240 = vector.extract_strided_slice %103 {offsets = [27, 0], sizes = [1, 1], strides = [1, 1]} : vector<32x1xf32> to vector<1x1xf32>
    %241 = vector.broadcast %240 : vector<1x1xf32> to vector<8x1xf32>
    %242 = arith.mulf %239, %241 : vector<8x1xf32>
    %243 = arith.addf %233, %242 : vector<8x1xf32>
    %244 = vector.extract_strided_slice %6 {offsets = [0, 28], sizes = [8, 1], strides = [1, 1]} : vector<8x32xf32> to vector<8x1xf32>
    %245 = vector.extract_strided_slice %103 {offsets = [28, 0], sizes = [1, 1], strides = [1, 1]} : vector<32x1xf32> to vector<1x1xf32>
    %246 = vector.broadcast %245 : vector<1x1xf32> to vector<8x1xf32>
    %247 = arith.mulf %244, %246 : vector<8x1xf32>
    %248 = arith.addf %238, %247 : vector<8x1xf32>
    %249 = vector.extract_strided_slice %6 {offsets = [0, 29], sizes = [8, 1], strides = [1, 1]} : vector<8x32xf32> to vector<8x1xf32>
    %250 = vector.extract_strided_slice %103 {offsets = [29, 0], sizes = [1, 1], strides = [1, 1]} : vector<32x1xf32> to vector<1x1xf32>
    %251 = vector.broadcast %250 : vector<1x1xf32> to vector<8x1xf32>
    %252 = arith.mulf %249, %251 : vector<8x1xf32>
    %253 = arith.addf %243, %252 : vector<8x1xf32>
    %254 = vector.extract_strided_slice %6 {offsets = [0, 30], sizes = [8, 1], strides = [1, 1]} : vector<8x32xf32> to vector<8x1xf32>
    %255 = vector.extract_strided_slice %103 {offsets = [30, 0], sizes = [1, 1], strides = [1, 1]} : vector<32x1xf32> to vector<1x1xf32>
    %256 = vector.broadcast %255 : vector<1x1xf32> to vector<8x1xf32>
    %257 = arith.mulf %254, %256 : vector<8x1xf32>
    %258 = arith.addf %248, %257 : vector<8x1xf32>
    %259 = vector.extract_strided_slice %6 {offsets = [0, 31], sizes = [8, 1], strides = [1, 1]} : vector<8x32xf32> to vector<8x1xf32>
    %260 = vector.extract_strided_slice %103 {offsets = [31, 0], sizes = [1, 1], strides = [1, 1]} : vector<32x1xf32> to vector<1x1xf32>
    %261 = vector.broadcast %260 : vector<1x1xf32> to vector<8x1xf32>
    %262 = arith.mulf %259, %261 : vector<8x1xf32>
    %263 = arith.addf %253, %262 : vector<8x1xf32>
    %264 = arith.addf %258, %263 : vector<8x1xf32>
    %265 = arith.addf %264, %7 : vector<8x1xf32>
    %cst_25 = arith.constant 0.000000e+00 : f32
    %266 = vector.broadcast %cst_25 : f32 to vector<8x1xf32>
    %267 = arith.maximumf %265, %266 : vector<8x1xf32>
    %268 = vector.extract_strided_slice %8 {offsets = [0, 0], sizes = [32, 1], strides = [1, 1]} : vector<32x8xf32> to vector<32x1xf32>
    %269 = vector.extract_strided_slice %267 {offsets = [0, 0], sizes = [1, 1], strides = [1, 1]} : vector<8x1xf32> to vector<1x1xf32>
    %270 = vector.broadcast %269 : vector<1x1xf32> to vector<32x1xf32>
    %271 = arith.mulf %268, %270 : vector<32x1xf32>
    %cst_26 = arith.constant 0.000000e+00 : f32
    %272 = vector.broadcast %cst_26 : f32 to vector<32x1xf32>
    %273 = vector.extract_strided_slice %8 {offsets = [0, 1], sizes = [32, 1], strides = [1, 1]} : vector<32x8xf32> to vector<32x1xf32>
    %274 = vector.extract_strided_slice %267 {offsets = [1, 0], sizes = [1, 1], strides = [1, 1]} : vector<8x1xf32> to vector<1x1xf32>
    %275 = vector.broadcast %274 : vector<1x1xf32> to vector<32x1xf32>
    %276 = arith.mulf %273, %275 : vector<32x1xf32>
    %277 = arith.addf %272, %276 : vector<32x1xf32>
    %278 = vector.extract_strided_slice %8 {offsets = [0, 2], sizes = [32, 1], strides = [1, 1]} : vector<32x8xf32> to vector<32x1xf32>
    %279 = vector.extract_strided_slice %267 {offsets = [2, 0], sizes = [1, 1], strides = [1, 1]} : vector<8x1xf32> to vector<1x1xf32>
    %280 = vector.broadcast %279 : vector<1x1xf32> to vector<32x1xf32>
    %281 = arith.mulf %278, %280 : vector<32x1xf32>
    %282 = arith.addf %271, %281 : vector<32x1xf32>
    %283 = vector.extract_strided_slice %8 {offsets = [0, 3], sizes = [32, 1], strides = [1, 1]} : vector<32x8xf32> to vector<32x1xf32>
    %284 = vector.extract_strided_slice %267 {offsets = [3, 0], sizes = [1, 1], strides = [1, 1]} : vector<8x1xf32> to vector<1x1xf32>
    %285 = vector.broadcast %284 : vector<1x1xf32> to vector<32x1xf32>
    %286 = arith.mulf %283, %285 : vector<32x1xf32>
    %287 = arith.addf %277, %286 : vector<32x1xf32>
    %288 = vector.extract_strided_slice %8 {offsets = [0, 4], sizes = [32, 1], strides = [1, 1]} : vector<32x8xf32> to vector<32x1xf32>
    %289 = vector.extract_strided_slice %267 {offsets = [4, 0], sizes = [1, 1], strides = [1, 1]} : vector<8x1xf32> to vector<1x1xf32>
    %290 = vector.broadcast %289 : vector<1x1xf32> to vector<32x1xf32>
    %291 = arith.mulf %288, %290 : vector<32x1xf32>
    %292 = arith.addf %282, %291 : vector<32x1xf32>
    %293 = vector.extract_strided_slice %8 {offsets = [0, 5], sizes = [32, 1], strides = [1, 1]} : vector<32x8xf32> to vector<32x1xf32>
    %294 = vector.extract_strided_slice %267 {offsets = [5, 0], sizes = [1, 1], strides = [1, 1]} : vector<8x1xf32> to vector<1x1xf32>
    %295 = vector.broadcast %294 : vector<1x1xf32> to vector<32x1xf32>
    %296 = arith.mulf %293, %295 : vector<32x1xf32>
    %297 = arith.addf %287, %296 : vector<32x1xf32>
    %298 = vector.extract_strided_slice %8 {offsets = [0, 6], sizes = [32, 1], strides = [1, 1]} : vector<32x8xf32> to vector<32x1xf32>
    %299 = vector.extract_strided_slice %267 {offsets = [6, 0], sizes = [1, 1], strides = [1, 1]} : vector<8x1xf32> to vector<1x1xf32>
    %300 = vector.broadcast %299 : vector<1x1xf32> to vector<32x1xf32>
    %301 = arith.mulf %298, %300 : vector<32x1xf32>
    %302 = arith.addf %292, %301 : vector<32x1xf32>
    %303 = vector.extract_strided_slice %8 {offsets = [0, 7], sizes = [32, 1], strides = [1, 1]} : vector<32x8xf32> to vector<32x1xf32>
    %304 = vector.extract_strided_slice %267 {offsets = [7, 0], sizes = [1, 1], strides = [1, 1]} : vector<8x1xf32> to vector<1x1xf32>
    %305 = vector.broadcast %304 : vector<1x1xf32> to vector<32x1xf32>
    %306 = arith.mulf %303, %305 : vector<32x1xf32>
    %307 = arith.addf %297, %306 : vector<32x1xf32>
    %308 = arith.addf %302, %307 : vector<32x1xf32>
    %309 = arith.addf %308, %9 : vector<32x1xf32>
    %cst_27 = arith.constant 3.000000e+00 : f32
    %310 = vector.broadcast %cst_27 : f32 to vector<32x1xf32>
    %311 = arith.addf %309, %310 : vector<32x1xf32>
    %cst_28 = arith.constant 0.000000e+00 : f32
    %cst_29 = arith.constant 6.000000e+00 : f32
    %312 = vector.broadcast %cst_28 : f32 to vector<32x1xf32>
    %313 = arith.maximumf %312, %311 : vector<32x1xf32>
    %314 = vector.broadcast %cst_29 : f32 to vector<32x1xf32>
    %315 = arith.minimumf %314, %313 : vector<32x1xf32>
    %cst_30 = arith.constant 0.166666672 : f32
    %316 = vector.broadcast %cst_30 : f32 to vector<32x1xf32>
    %317 = arith.mulf %315, %316 : vector<32x1xf32>
    %318 = vector.broadcast %317 : vector<32x1xf32> to vector<32x256xf32>
    %319 = arith.mulf %99, %318 : vector<32x256xf32>
    %cst_31 = arith.constant 3.000000e+00 : f32
    %320 = vector.broadcast %cst_31 : f32 to vector<32x256xf32>
    %321 = arith.addf %319, %320 : vector<32x256xf32>
    %cst_32 = arith.constant 0.000000e+00 : f32
    %cst_33 = arith.constant 6.000000e+00 : f32
    %322 = vector.broadcast %cst_32 : f32 to vector<32x256xf32>
    %323 = arith.maximumf %322, %321 : vector<32x256xf32>
    %324 = vector.broadcast %cst_33 : f32 to vector<32x256xf32>
    %325 = arith.minimumf %324, %323 : vector<32x256xf32>
    %cst_34 = arith.constant 0.166666672 : f32
    %326 = vector.broadcast %cst_34 : f32 to vector<32x256xf32>
    %327 = arith.mulf %325, %326 : vector<32x256xf32>
    %328 = arith.mulf %319, %327 : vector<32x256xf32>
    %cst_35 = arith.constant dense<0.000000e+00> : vector<16x256xf32>
    %329 = tpu.matmul %4, %328, %cst_35 {dimension_numbers = #tpu.dot_dimension_numbers<[1], [0], [0], [1], [0, 0, 1, 1], [], []>, precision = #tpu.contract_precision<fp32>} : vector<16x32xf32>, vector<32x256xf32>, vector<16x256xf32> -> vector<16x256xf32>
    %330 = vector.broadcast %5 : vector<16x1xf32> to vector<16x256xf32>
    %331 = arith.addf %329, %330 : vector<16x256xf32>
    %332 = arith.addf %331, %12 : vector<16x256xf32>
    %c0_36 = arith.constant 0 : index
    %c0_37 = arith.constant 0 : index
    %c0_38 = arith.constant 0 : index
    %333 = vector.load %arg4[%c0_36, %c0_37, %c0_38] : memref<1x16x256xf32, #tpu.memory_space<vmem>>, vector<1x16x256xf32>
    %334 = vector.shape_cast %333 : vector<1x16x256xf32> to vector<16x256xf32>
    %335 = vector.shape_cast %332 : vector<16x256xf32> to vector<1x16x256xf32>
    tpu.vector_store %arg4[%c0_36, %c0_37, %c0_38], %335 {strides = array<i32>} : memref<1x16x256xf32, #tpu.memory_space<vmem>>, vector<1x16x256xf32>,
    return
  }
  func.func @transform_0(%arg0: i32) -> (i32, i32, i32) {
    %c0_i32 = arith.constant 0 : i32
    %c0_i32_0 = arith.constant 0 : i32
    %c0_i32_1 = arith.constant 0 : i32
    return %arg0, %c0_i32, %c0_i32_0 : i32, i32, i32
  }
  func.func @transform_1(%arg0: i32) -> (i32, i32) {
    %c0_i32 = arith.constant 0 : i32
    %c0_i32_0 = arith.constant 0 : i32
    %c0_i32_1 = arith.constant 0 : i32
    return %c0_i32, %c0_i32_0 : i32, i32
  }
  func.func @transform_2(%arg0: i32) -> (i32, i32) {
    %c0_i32 = arith.constant 0 : i32
    %c0_i32_0 = arith.constant 0 : i32
    %c0_i32_1 = arith.constant 0 : i32
    return %c0_i32, %c0_i32_0 : i32, i32
  }
  func.func @transform_3(%arg0: i32) -> (i32, i32, i32) {
    %c0_i32 = arith.constant 0 : i32
    %c0_i32_0 = arith.constant 0 : i32
    %c0_i32_1 = arith.constant 0 : i32
    return %arg0, %c0_i32, %c0_i32_0 : i32, i32, i32
  }
}

</mosaic_0001>

<llo_original>
// kernel: tpu_custom_call.1
$region0: #{tpu_custom_call.1}
  #allocation0 [shape = 'u32[]', space=smem, size = 0x4, offset = 0x4, fixed_abs, tag = 'smem constant byte address 0x4 - core index']
  #allocation1 [shape = 'u32[144,128]{1,0:T(1,128)}', space=vmem, size = 0x12000, scoped, tag = 'internal scratch']
  %s0 = inlined_call_operand.hbm [shape: f32[2,16,256], index: 0, kind: input, shape index: {}]
  %s1 = inlined_call_operand.hbm [shape: f32[32,128], index: 1, kind: input, shape index: {}]
  %s2 = inlined_call_operand.hbm [shape: f32[9,256], index: 2, kind: input, shape index: {}]
  %s3 = inlined_call_operand.hbm [shape: f32[2,16,256], index: 3, kind: output, shape index: {}]
  %s4 = sld [smem:[#allocation0]]
  $region57: #{tpu_custom_call.1} parent=0
    _
  %s6 = ssub.s32 1, %s4
  %s7 = scalar_select 0, %s6, %s4
  $region1: #{tpu_custom_call.1} parent=0
    #allocation2 [shape = 'u8[32768]{0}', space=vmem, size = 0x8000, scoped, tag = 'input window, operand 0']
    #allocation3 [shape = 's32[2]{0}', space=sflag, size = 0x8, scoped, tag = 'scoped memory for tpu_custom_call.1']
    #allocation4 [shape = 's32[2]{0}', space=sflag, size = 0x8, scoped, tag = 'scoped memory for tpu_custom_call.1']
    #allocation5 [shape = 'u8[16384]{0}', space=vmem, size = 0x4000, scoped, tag = 'input window, operand 1, single buffered']
    #allocation6 [shape = 's32[1]{0}', space=sflag, size = 0x4, scoped, tag = 'scoped memory for tpu_custom_call.1']
    #allocation7 [shape = 'u8[16384]{0}', space=vmem, size = 0x4000, scoped, tag = 'input window, operand 2, single buffered']
    #allocation8 [shape = 'u8[32768]{0}', space=vmem, size = 0x8000, scoped, tag = 'output window, operand 0']
    %8 = vsyncpa [#allocation3], 0
    %s9 = scalar_lea.sflag [#allocation3], 1
    %10 = vsyncpa %s9, 0
    %11 = vsyncpa [#allocation6], 0
    %12 = vsyncpa [#allocation4], 0
    %s13 = scalar_lea.sflag [#allocation4], 1
    %14 = vsyncpa %s13, 0
    loop: start=0, step=1, limit=4
    $region2: #{tpu_custom_call.1} parent=1 // loop_pre_header
      _
    $region3: #{tpu_custom_call.1} parent=1 // loop_header
      %s16 = sphi 0, %s20
      %p17 = scmp.ge.s32.totalorder %s16, 4
      %s26 = sphi 0, %s28
      %s29 = sphi 0, %s26
      %s30 = sphi 0, %s29
      %s46 = sphi 0, %s30
      %s50 = sphi 0, %s50
      %s52 = sphi 0, %s50
      %s53 = sphi 0, %s52
      %s67 = sphi 0, %s53
      %s71 = sphi 0, %s71
      %s73 = sphi 0, %s71
      %s74 = sphi 0, %s73
      %s88 = sphi 0, %s74
      %s94 = sphi 0, %s96
      %s97 = sphi 0, %s94
      %s98 = sphi 0, %s97
      %s114 = sphi 0, %s98
    $region4: #{tpu_custom_call.1} parent=1 // loop_header_branch
      %19 = sbr.rel (%p17) target = $region8
    $region5: #{tpu_custom_call.1} parent=1 // loop_body
      %s21 = ssub.s32 %s16, 1
      %s22 = ssub.s32 %s16, 2
      %s23 = sadd.s32 %s16, 1
      %s24 = ssub.s32 %s16, %s23
      %p25 = scmp.eq.s32.totalorder %s24, 0
      %s27 = sadd.s32 %s26, 1
      %s28 = scalar_select %p25, %s26, %s27
      %p31 = pneg %p25
      %p32 = scmp.eq.s32.totalorder %s16, 1
      %p33 = por %p31, %p32
      %p34 = scmp.ne.s32.totalorder %s26, %s29
      %p35 = scmp.eq.s32.totalorder %s16, 0
      %p36 = por %p34, %p35
      %p37 = scmp.ne.s32.totalorder %s26, %s29
      %p38 = scmp.eq.s32.totalorder %s21, 1
      %p39 = por %p37, %p38
      %p40 = scmp.ne.s32.totalorder %s29, %s30
      %p41 = scmp.eq.s32.totalorder %s21, 0
      %p42 = por %p40, %p41
      %p43 = scmp.ne.s32.totalorder %s29, %s30
      %p44 = scmp.eq.s32.totalorder %s22, 1
      %p45 = por %p43, %p44
      %p47 = scmp.ne.s32.totalorder %s30, %s46
      %p48 = scmp.eq.s32.totalorder %s22, 0
      %p49 = por %p47, %p48
      %s51 = sadd.s32 %s50, 1
      %p54 = scmp.eq.s32.totalorder %s16, 1
      %p55 = scmp.ne.s32.totalorder %s50, %s52
      %p56 = scmp.eq.s32.totalorder %s16, 0
      %p57 = por %p55, %p56
      %p58 = scmp.ne.s32.totalorder %s50, %s52
      %p59 = scmp.eq.s32.totalorder %s21, 1
      %p60 = por %p58, %p59
      %p61 = scmp.ne.s32.totalorder %s52, %s53
      %p62 = scmp.eq.s32.totalorder %s21, 0
      %p63 = por %p61, %p62
      %p64 = scmp.ne.s32.totalorder %s52, %s53
      %p65 = scmp.eq.s32.totalorder %s22, 1
      %p66 = por %p64, %p65
      %p68 = scmp.ne.s32.totalorder %s53, %s67
      %p69 = scmp.eq.s32.totalorder %s22, 0
      %p70 = por %p68, %p69
      %s72 = sadd.s32 %s71, 1
      %p75 = scmp.eq.s32.totalorder %s16, 1
      %p76 = scmp.ne.s32.totalorder %s71, %s73
      %p77 = scmp.eq.s32.totalorder %s16, 0
      %p78 = por %p76, %p77
      %p79 = scmp.ne.s32.totalorder %s71, %s73
      %p80 = scmp.eq.s32.totalorder %s21, 1
      %p81 = por %p79, %p80
      %p82 = scmp.ne.s32.totalorder %s73, %s74
      %p83 = scmp.eq.s32.totalorder %s21, 0
      %p84 = por %p82, %p83
      %p85 = scmp.ne.s32.totalorder %s73, %s74
      %p86 = scmp.eq.s32.totalorder %s22, 1
      %p87 = por %p85, %p86
      %p89 = scmp.ne.s32.totalorder %s74, %s88
      %p90 = scmp.eq.s32.totalorder %s22, 0
      %p91 = por %p89, %p90
      %s92 = ssub.s32 %s16, %s23
      %p93 = scmp.eq.s32.totalorder %s92, 0
      %s95 = sadd.s32 %s94, 1
      %s96 = scalar_select %p93, %s94, %s95
      %p99 = pneg %p93
      %p100 = scmp.eq.s32.totalorder %s16, 1
      %p101 = por %p99, %p100
      %p102 = scmp.ne.s32.totalorder %s94, %s97
      %p103 = scmp.eq.s32.totalorder %s16, 0
      %p104 = por %p102, %p103
      %p105 = scmp.ne.s32.totalorder %s94, %s97
      %p106 = scmp.eq.s32.totalorder %s21, 1
      %p107 = por %p105, %p106
      %p108 = scmp.ne.s32.totalorder %s97, %s98
      %p109 = scmp.eq.s32.totalorder %s21, 0
      %p110 = por %p108, %p109
      %p111 = scmp.ne.s32.totalorder %s97, %s98
      %p112 = scmp.eq.s32.totalorder %s22, 1
      %p113 = por %p111, %p112
      %p115 = scmp.ne.s32.totalorder %s98, %s114
      %p116 = scmp.eq.s32.totalorder %s22, 0
      %p117 = por %p115, %p116
      %p118 = scmp.le.s32.totalorder 1, %s16
      %p119 = scmp.lt.s32.totalorder %s16, 3
      %p120 = pnand %p118, %p119
      %p121 = pneg %p120
      // Predicated region
      $region9: #{tpu_custom_call.1} parent=5 // pred_check
        _
      $region10: #{tpu_custom_call.1} parent=5 // pred_check_branch
        %123 = sbr.rel (%p120) target = $region12
      $region11: #{tpu_custom_call.1} parent=5 // pred_region
        %s124 = ssub.s32 %s16, 1
        // Predicated region
        $region13: #{tpu_custom_call.1} parent=11 // pred_check
          %p125 = pneg %p63
        $region14: #{tpu_custom_call.1} parent=11 // pred_check_branch
          %127 = sbr.rel (%p125) target = $region16
        $region15: #{tpu_custom_call.1} parent=11 // pred_region
          %s129 = ssub.s32 512, 512
          %130 = vsyncadd [#allocation6], %s129
          %s131 = sshll.u32 [#allocation5], 4
          %s132 = int_to_ptr.vmem [resolvable:$true] %s131
          %137 = dma.hbm_to_vmem [thread:$0]  %s1, 512, %s132, [#allocation6], 128, 128, 8
        $region16: #{tpu_custom_call.1} parent=11 // pred_fallthru
          _
        // Predicated region
        $region17: #{tpu_custom_call.1} parent=11 // pred_check
          %p138 = pneg %p84
        $region18: #{tpu_custom_call.1} parent=11 // pred_check_branch
          %140 = sbr.rel (%p138) target = $region20
        $region19: #{tpu_custom_call.1} parent=11 // pred_region
          %s142 = ssub.s32 512, 512
          %143 = vsyncadd [#allocation6], %s142
          %s144 = sshll.u32 [#allocation7], 4
          %s145 = int_to_ptr.vmem [resolvable:$true] %s144
          %150 = dma.hbm_to_vmem [thread:$0]  %s2, 512, %s145, [#allocation6], 256, 256, 16
        $region20: #{tpu_custom_call.1} parent=11 // pred_fallthru
          _
      $region12: #{tpu_custom_call.1} parent=5 // pred_fallthru
        _
      %p151 = scmp.lt.s32.totalorder %s16, 2
      // Predicated region
      $region21: #{tpu_custom_call.1} parent=5 // pred_check
        %p152 = pneg %p151
      $region22: #{tpu_custom_call.1} parent=5 // pred_check_branch
        %154 = sbr.rel (%p152) target = $region24
      $region23: #{tpu_custom_call.1} parent=5 // pred_region
        // Predicated region
        $region25: #{tpu_custom_call.1} parent=23 // pred_check
          %p155 = pneg %p36
        $region26: #{tpu_custom_call.1} parent=23 // pred_check_branch
          %157 = sbr.rel (%p155) target = $region28
        $region27: #{tpu_custom_call.1} parent=23 // pred_region
          %s158 = sand.u32 %s26, 1
          %s159 = scalar_lea.sflag [#allocation3], %s158
          %s160 = sand.u32 %s26, 1
          %s161 = smul.addr %s160, 32
          %s162 = scalar_lea.vmem [#allocation2], %s161
          %s164 = ssub.s32 512, 512
          %165 = vsyncadd %s159, %s164
          %s166 = smul.addr %s16, 4
          %s167 = smul.addr %s166, 128
          %s168 = scalar_lea.hbm %s0, %s167
          %s169 = sshll.u32 %s162, 4
          %s170 = int_to_ptr.vmem [resolvable:$true] %s169
          %175 = dma.hbm_to_vmem [thread:$0]  %s168, 512, %s170, %s159, 256, 256, 16
        $region28: #{tpu_custom_call.1} parent=23 // pred_fallthru
          _
      $region24: #{tpu_custom_call.1} parent=5 // pred_fallthru
        _
      %p176 = scmp.le.s32.totalorder 1, %s16
      %p177 = scmp.lt.s32.totalorder %s16, 3
      %p178 = pnand %p176, %p177
      %p179 = pneg %p178
      // Predicated region
      $region29: #{tpu_custom_call.1} parent=5 // pred_check
        _
      $region30: #{tpu_custom_call.1} parent=5 // pred_check_branch
        %181 = sbr.rel (%p178) target = $region32
      $region31: #{tpu_custom_call.1} parent=5 // pred_region
        %s182 = ssub.s32 %s16, 1
        %s183 = sand.u32 %s29, 1
        %s184 = scalar_lea.sflag [#allocation3], %s183
        %s185 = sand.u32 %s29, 1
        %s186 = smul.addr %s185, 32
        %s187 = scalar_lea.vmem [#allocation2], %s186
        // Predicated region
        $region33: #{tpu_custom_call.1} parent=31 // pred_check
          %p188 = pneg %p42
        $region34: #{tpu_custom_call.1} parent=31 // pred_check_branch
          %190 = sbr.rel (%p188) target = $region36
        $region35: #{tpu_custom_call.1} parent=31 // pred_region
          %191 = dma.done %s184, 512
        $region36: #{tpu_custom_call.1} parent=31 // pred_fallthru
          _
        // Predicated region
        $region37: #{tpu_custom_call.1} parent=31 // pred_check
          %p192 = pneg %p63
        $region38: #{tpu_custom_call.1} parent=31 // pred_check_branch
          %194 = sbr.rel (%p192) target = $region40
        $region39: #{tpu_custom_call.1} parent=31 // pred_region
          %195 = dma.done [#allocation6], 512
        $region40: #{tpu_custom_call.1} parent=31 // pred_fallthru
          _
        // Predicated region
        $region41: #{tpu_custom_call.1} parent=31 // pred_check
          %p196 = pneg %p84
        $region42: #{tpu_custom_call.1} parent=31 // pred_check_branch
          %198 = sbr.rel (%p196) target = $region44
        $region43: #{tpu_custom_call.1} parent=31 // pred_region
          %199 = dma.done [#allocation6], 512
        $region44: #{tpu_custom_call.1} parent=31 // pred_fallthru
          _
        %s200 = sand.u32 %s29, 1
        %s201 = scalar_lea.sflag [#allocation3], %s200
        %s202 = sand.u32 %s29, 1
        %s203 = smul.addr %s202, 32
        %s204 = scalar_lea.vmem [#allocation2], %s203
        %p205 = pneg %p42
        %p206 = pneg %p39
        %p207 = pneg %p63
        %p208 = pneg %p60
        %p209 = pneg %p84
        %p210 = pneg %p81
        %p211 = pneg %p110
        %p212 = pneg %p107
        %s213 = sand.u32 %s97, 1
        %s214 = scalar_lea.sflag [#allocation4], %s213
        %s215 = sand.u32 %s97, 1
        %s216 = smul.addr %s215, 32
        %s217 = scalar_lea.vmem [#allocation8], %s216
        %v218 = vld [vmem:[#allocation5] sm:$0xff]
        %v219 = vld [vmem:[#allocation5 + $0x8] sm:$0xff]
        %v220 = vld [vmem:[#allocation5 + $0x10] sm:$0xff]
        %v221 = vld [vmem:[#allocation5 + $0x18] sm:$0xff]
        %v222 = vld [vmem:[#allocation5] sm:$0xff]
        %v223 = vld [vmem:[#allocation5 + $0x8] sm:$0xff]
        %v224 = vld [vmem:[#allocation7] sm:$0xff]
        %v225 = vld [vmem:[#allocation7 + $0x8] sm:$0xff]
        %v226 = vld [vmem:[#allocation7 + $0x10] sm:$0x1]
        %v227 = vld [vmem:[#allocation7 + $0x18] sm:$0x1]
        %v228 = vld [vmem:[%s187] sm:$0xff]
        %v229 = vld [vmem:[%s187 + $0x8] sm:$0xff]
        %v230 = vld [vmem:[%s187 + $0x10] sm:$0xff]
        %v231 = vld [vmem:[%s187 + $0x18] sm:$0xff]
        %233 = vset.pattern.permute.xlu0 16
        %234 = vperm.xlu0 %233, %v218
        %v235 = vpop.permute.xlu0 %234
        %238 = vset.pattern.permute.xlu0 16
        %239 = vperm.xlu0 %238, %v219
        %v240 = vpop.permute.xlu0 %239
        %243 = vset.pattern.permute.xlu0 16
        %244 = vperm.xlu0 %243, %v220
        %v245 = vpop.permute.xlu0 %244
        %248 = vset.pattern.permute.xlu0 16
        %249 = vperm.xlu0 %248, %v221
        %v250 = vpop.permute.xlu0 %249
        %vm252 = vcmask 130048
        %v253 = vsel %vm252, %v218, 0
        %v255 = vsel %vm252, %v219, 0
        %v257 = vsel %vm252, %v220, 0
        %v259 = vsel %vm252, %v221, 0
        %261 = vmatprep.subr.mxu0 0.0
        %262 = vmatpush1.msra.mxu0 0.0
        %263 = vmatprep.subr.mxu0 0.0
        %264 = vmatpush1.msra.mxu0 0.0
        %265 = vmatprep.subr.mxu0 0.0
        %266 = vmatpush1.msra.mxu0 0.0
        %267 = vmatprep.subr.mxu0 0.0
        %268 = vmatpush1.msra.mxu0 0.0
        %269 = vmatprep.subr.mxu0 0.0
        %270 = vmatpush1.msra.mxu0 0.0
        %271 = vmatprep.subr.mxu0 0.0
        %272 = vmatpush1.msra.mxu0 0.0
        %273 = vmatprep.subr.mxu0 0.0
        %274 = vmatpush1.msra.mxu0 0.0
        %275 = vmatprep.subr.mxu0 0.0
        %276 = vmatpush1.msra.mxu0 0.0
        %277 = vmatprep.subr.mxu0 0.0
        %278 = vmatpush1.msra.mxu0 0.0
        %279 = vmatprep.subr.mxu0 0.0
        %280 = vmatpush1.msra.mxu0 0.0
        %281 = vmatprep.subr.mxu0 0.0
        %282 = vmatpush1.msra.mxu0 0.0
        %283 = vmatprep.subr.mxu0 0.0
        %284 = vmatpush1.msra.mxu0 0.0
        %285 = vmatprep.subr.mxu0 0.0
        %286 = vmatpush1.msra.mxu0 0.0
        %287 = vmatprep.subr.mxu0 0.0
        %288 = vmatpush1.msra.mxu0 0.0
        %v289 = vand.u32 %v231, 4294901760
        %290 = vmatprep.subr.mxu0 %v289
        %v291 = vand.u32 %v230, 4294901760
        %292 = vmatpush1.msra.mxu0 %v291
        %v293 = vand.u32 %v229, 4294901760
        %294 = vmatprep.subr.mxu0 %v293
        %v295 = vand.u32 %v228, 4294901760
        %296 = vmatpush1.msra.mxu0 %v295
        %297 = vmatprep.subr.mxu0 0.0
        %298 = vmatpush2.msra.mxu0 0.0
        %299 = vmatprep.subr.mxu0 0.0
        %300 = vmatpush2.msra.mxu0 0.0
        %301 = vmatprep.subr.mxu0 0.0
        %302 = vmatpush2.msra.mxu0 0.0
        %303 = vmatprep.subr.mxu0 0.0
        %304 = vmatpush2.msra.mxu0 0.0
        %305 = vmatprep.subr.mxu0 0.0
        %306 = vmatpush2.msra.mxu0 0.0
        %307 = vmatprep.subr.mxu0 0.0
        %308 = vmatpush2.msra.mxu0 0.0
        %309 = vmatprep.subr.mxu0 0.0
        %310 = vmatpush2.msra.mxu0 0.0
        %311 = vmatprep.subr.mxu0 0.0
        %312 = vmatpush2.msra.mxu0 0.0
        %313 = vmatprep.subr.mxu0 0.0
        %314 = vmatpush2.msra.mxu0 0.0
        %315 = vmatprep.subr.mxu0 0.0
        %316 = vmatpush2.msra.mxu0 0.0
        %317 = vmatprep.subr.mxu0 0.0
        %318 = vmatpush2.msra.mxu0 0.0
        %319 = vmatprep.subr.mxu0 0.0
        %320 = vmatpush2.msra.mxu0 0.0
        %321 = vmatprep.subr.mxu0 0.0
        %322 = vmatpush2.msra.mxu0 0.0
        %323 = vmatprep.subr.mxu0 0.0
        %324 = vmatpush2.msra.mxu0 0.0
        %325 = vmatprep.subr.mxu0 0.0
        %326 = vmatpush2.msra.mxu0 0.0
        %327 = vmatprep.subr.mxu0 0.0
        %328 = vmatpush2.msra.mxu0 0.0
        %329 = vmatprep.mubr.f32.mxu0 0.0
        %v330 = vand.u32 %v253, 4294901760
        %v331 = vsub.f32 %v253, %v330
        %v332 = vand.u32 %v331, 4294901760
        %v333 = vsub.f32 %v331, %v332
        %v334 = vand.u32 %v333, 4294901760
        %335 = vmatmul.mubr.f32.gmra.mxu0 %v334
        %v336 = vpop.f32.mrf.mxu0
        %v337 = vadd.f32 %v235, %v336
        %v338 = vpop.f32.mrf.mxu0
        %v339 = vadd.f32 %v235, %v338
        %340 = vmatprep.mubr.f32.mxu0 0.0
        %v341 = vand.u32 %v255, 4294901760
        %v342 = vsub.f32 %v255, %v341
        %v343 = vand.u32 %v342, 4294901760
        %v344 = vsub.f32 %v342, %v343
        %v345 = vand.u32 %v344, 4294901760
        %346 = vmatmul.mubr.f32.gmra.mxu0 %v345
        %v347 = vpop.f32.mrf.mxu0
        %v348 = vadd.f32 %v240, %v347
        %v349 = vpop.f32.mrf.mxu0
        %v350 = vadd.f32 %v240, %v349
        %351 = vmatprep.mubr.f32.mxu0 0.0
        %v352 = vand.u32 %v257, 4294901760
        %v353 = vsub.f32 %v257, %v352
        %v354 = vand.u32 %v353, 4294901760
        %v355 = vsub.f32 %v353, %v354
        %v356 = vand.u32 %v355, 4294901760
        %357 = vmatmul.mubr.f32.gmra.mxu0 %v356
        %v358 = vpop.f32.mrf.mxu0
        %v359 = vadd.f32 %v245, %v358
        %v360 = vpop.f32.mrf.mxu0
        %v361 = vadd.f32 %v245, %v360
        %362 = vmatprep.mubr.f32.mxu0 0.0
        %v363 = vand.u32 %v259, 4294901760
        %v364 = vsub.f32 %v259, %v363
        %v365 = vand.u32 %v364, 4294901760
        %v366 = vsub.f32 %v364, %v365
        %v367 = vand.u32 %v366, 4294901760
        %368 = vmatmul.mubr.f32.gmra.mxu0 %v367
        %v369 = vpop.f32.mrf.mxu0
        %v370 = vadd.f32 %v250, %v369
        %v371 = vpop.f32.mrf.mxu0
        %v372 = vadd.f32 %v250, %v371
        %373 = vdwg.mxu0
        %374 = vmatprep.subr.mxu0 0.0
        %375 = vmatpush1.msra.mxu0 0.0
        %376 = vmatprep.subr.mxu0 0.0
        %377 = vmatpush1.msra.mxu0 0.0
        %378 = vmatprep.subr.mxu0 0.0
        %379 = vmatpush1.msra.mxu0 0.0
        %380 = vmatprep.subr.mxu0 0.0
        %381 = vmatpush1.msra.mxu0 0.0
        %382 = vmatprep.subr.mxu0 0.0
        %383 = vmatpush1.msra.mxu0 0.0
        %384 = vmatprep.subr.mxu0 0.0
        %385 = vmatpush1.msra.mxu0 0.0
        %386 = vmatprep.subr.mxu0 0.0
        %387 = vmatpush1.msra.mxu0 0.0
        %388 = vmatprep.subr.mxu0 0.0
        %389 = vmatpush1.msra.mxu0 0.0
        %390 = vmatprep.subr.mxu0 0.0
        %391 = vmatpush1.msra.mxu0 0.0
        %392 = vmatprep.subr.mxu0 0.0
        %393 = vmatpush1.msra.mxu0 0.0
        %394 = vmatprep.subr.mxu0 0.0
        %395 = vmatpush1.msra.mxu0 0.0
        %396 = vmatprep.subr.mxu0 0.0
        %397 = vmatpush1.msra.mxu0 0.0
        %398 = vmatprep.subr.mxu0 0.0
        %399 = vmatpush1.msra.mxu0 0.0
        %400 = vmatprep.subr.mxu0 0.0
        %401 = vmatpush1.msra.mxu0 0.0
        %v402 = vand.u32 %v231, 4294901760
        %v403 = vsub.f32 %v231, %v402
        %v404 = vand.u32 %v403, 4294901760
        %v405 = vsub.f32 %v403, %v404
        %v406 = vand.u32 %v405, 4294901760
        %407 = vmatprep.subr.mxu0 %v406
        %v408 = vand.u32 %v230, 4294901760
        %v409 = vsub.f32 %v230, %v408
        %v410 = vand.u32 %v409, 4294901760
        %v411 = vsub.f32 %v409, %v410
        %v412 = vand.u32 %v411, 4294901760
        %413 = vmatpush1.msra.mxu0 %v412
        %v414 = vand.u32 %v229, 4294901760
        %v415 = vsub.f32 %v229, %v414
        %v416 = vand.u32 %v415, 4294901760
        %v417 = vsub.f32 %v415, %v416
        %v418 = vand.u32 %v417, 4294901760
        %419 = vmatprep.subr.mxu0 %v418
        %v420 = vand.u32 %v228, 4294901760
        %v421 = vsub.f32 %v228, %v420
        %v422 = vand.u32 %v421, 4294901760
        %v423 = vsub.f32 %v421, %v422
        %v424 = vand.u32 %v423, 4294901760
        %425 = vmatpush1.msra.mxu0 %v424
        %426 = vmatprep.subr.mxu0 0.0
        %427 = vmatpush2.msra.mxu0 0.0
        %428 = vmatprep.subr.mxu0 0.0
        %429 = vmatpush2.msra.mxu0 0.0
        %430 = vmatprep.subr.mxu0 0.0
        %431 = vmatpush2.msra.mxu0 0.0
        %432 = vmatprep.subr.mxu0 0.0
        %433 = vmatpush2.msra.mxu0 0.0
        %434 = vmatprep.subr.mxu0 0.0
        %435 = vmatpush2.msra.mxu0 0.0
        %436 = vmatprep.subr.mxu0 0.0
        %437 = vmatpush2.msra.mxu0 0.0
        %438 = vmatprep.subr.mxu0 0.0
        %439 = vmatpush2.msra.mxu0 0.0
        %440 = vmatprep.subr.mxu0 0.0
        %441 = vmatpush2.msra.mxu0 0.0
        %442 = vmatprep.subr.mxu0 0.0
        %443 = vmatpush2.msra.mxu0 0.0
        %444 = vmatprep.subr.mxu0 0.0
        %445 = vmatpush2.msra.mxu0 0.0
        %446 = vmatprep.subr.mxu0 0.0
        %447 = vmatpush2.msra.mxu0 0.0
        %448 = vmatprep.subr.mxu0 0.0
        %449 = vmatpush2.msra.mxu0 0.0
        %450 = vmatprep.subr.mxu0 0.0
        %451 = vmatpush2.msra.mxu0 0.0
        %452 = vmatprep.subr.mxu0 0.0
        %453 = vmatpush2.msra.mxu0 0.0
        %454 = vmatprep.subr.mxu0 0.0
        %455 = vmatpush2.msra.mxu0 0.0
        %456 = vmatprep.subr.mxu0 0.0
        %457 = vmatpush2.msra.mxu0 0.0
        %458 = vmatprep.mubr.f32.mxu0 0.0
        %v459 = vand.u32 %v253, 4294901760
        %460 = vmatmul.mubr.f32.gmra.mxu0 %v459
        %v461 = vpop.f32.mrf.mxu0
        %v462 = vadd.f32 %v337, %v461
        %v463 = vpop.f32.mrf.mxu0
        %v464 = vadd.f32 %v339, %v463
        %465 = vmatprep.mubr.f32.mxu0 0.0
        %v466 = vand.u32 %v255, 4294901760
        %467 = vmatmul.mubr.f32.gmra.mxu0 %v466
        %v468 = vpop.f32.mrf.mxu0
        %v469 = vadd.f32 %v348, %v468
        %v470 = vpop.f32.mrf.mxu0
        %v471 = vadd.f32 %v350, %v470
        %472 = vmatprep.mubr.f32.mxu0 0.0
        %v473 = vand.u32 %v257, 4294901760
        %474 = vmatmul.mubr.f32.gmra.mxu0 %v473
        %v475 = vpop.f32.mrf.mxu0
        %v476 = vadd.f32 %v359, %v475
        %v477 = vpop.f32.mrf.mxu0
        %v478 = vadd.f32 %v361, %v477
        %479 = vmatprep.mubr.f32.mxu0 0.0
        %v480 = vand.u32 %v259, 4294901760
        %481 = vmatmul.mubr.f32.gmra.mxu0 %v480
        %v482 = vpop.f32.mrf.mxu0
        %v483 = vadd.f32 %v370, %v482
        %v484 = vpop.f32.mrf.mxu0
        %v485 = vadd.f32 %v372, %v484
        %486 = vdwg.mxu0
        %487 = vmatprep.subr.mxu0 0.0
        %488 = vmatpush1.msra.mxu0 0.0
        %489 = vmatprep.subr.mxu0 0.0
        %490 = vmatpush1.msra.mxu0 0.0
        %491 = vmatprep.subr.mxu0 0.0
        %492 = vmatpush1.msra.mxu0 0.0
        %493 = vmatprep.subr.mxu0 0.0
        %494 = vmatpush1.msra.mxu0 0.0
        %495 = vmatprep.subr.mxu0 0.0
        %496 = vmatpush1.msra.mxu0 0.0
        %497 = vmatprep.subr.mxu0 0.0
        %498 = vmatpush1.msra.mxu0 0.0
        %499 = vmatprep.subr.mxu0 0.0
        %500 = vmatpush1.msra.mxu0 0.0
        %501 = vmatprep.subr.mxu0 0.0
        %502 = vmatpush1.msra.mxu0 0.0
        %503 = vmatprep.subr.mxu0 0.0
        %504 = vmatpush1.msra.mxu0 0.0
        %505 = vmatprep.subr.mxu0 0.0
        %506 = vmatpush1.msra.mxu0 0.0
        %507 = vmatprep.subr.mxu0 0.0
        %508 = vmatpush1.msra.mxu0 0.0
        %509 = vmatprep.subr.mxu0 0.0
        %510 = vmatpush1.msra.mxu0 0.0
        %511 = vmatprep.subr.mxu0 0.0
        %512 = vmatpush1.msra.mxu0 0.0
        %513 = vmatprep.subr.mxu0 0.0
        %514 = vmatpush1.msra.mxu0 0.0
        %v515 = vand.u32 %v231, 4294901760
        %v516 = vsub.f32 %v231, %v515
        %517 = vmatprep.subr.mxu0 %v516
        %v518 = vand.u32 %v230, 4294901760
        %v519 = vsub.f32 %v230, %v518
        %520 = vmatpush1.msra.mxu0 %v519
        %v521 = vand.u32 %v229, 4294901760
        %v522 = vsub.f32 %v229, %v521
        %523 = vmatprep.subr.mxu0 %v522
        %v524 = vand.u32 %v228, 4294901760
        %v525 = vsub.f32 %v228, %v524
        %526 = vmatpush1.msra.mxu0 %v525
        %527 = vmatprep.subr.mxu0 0.0
        %528 = vmatpush2.msra.mxu0 0.0
        %529 = vmatprep.subr.mxu0 0.0
        %530 = vmatpush2.msra.mxu0 0.0
        %531 = vmatprep.subr.mxu0 0.0
        %532 = vmatpush2.msra.mxu0 0.0
        %533 = vmatprep.subr.mxu0 0.0
        %534 = vmatpush2.msra.mxu0 0.0
        %535 = vmatprep.subr.mxu0 0.0
        %536 = vmatpush2.msra.mxu0 0.0
        %537 = vmatprep.subr.mxu0 0.0
        %538 = vmatpush2.msra.mxu0 0.0
        %539 = vmatprep.subr.mxu0 0.0
        %540 = vmatpush2.msra.mxu0 0.0
        %541 = vmatprep.subr.mxu0 0.0
        %542 = vmatpush2.msra.mxu0 0.0
        %543 = vmatprep.subr.mxu0 0.0
        %544 = vmatpush2.msra.mxu0 0.0
        %545 = vmatprep.subr.mxu0 0.0
        %546 = vmatpush2.msra.mxu0 0.0
        %547 = vmatprep.subr.mxu0 0.0
        %548 = vmatpush2.msra.mxu0 0.0
        %549 = vmatprep.subr.mxu0 0.0
        %550 = vmatpush2.msra.mxu0 0.0
        %551 = vmatprep.subr.mxu0 0.0
        %552 = vmatpush2.msra.mxu0 0.0
        %553 = vmatprep.subr.mxu0 0.0
        %554 = vmatpush2.msra.mxu0 0.0
        %555 = vmatprep.subr.mxu0 0.0
        %556 = vmatpush2.msra.mxu0 0.0
        %557 = vmatprep.subr.mxu0 0.0
        %558 = vmatpush2.msra.mxu0 0.0
        %559 = vmatprep.mubr.f32.mxu0 0.0
        %v560 = vand.u32 %v253, 4294901760
        %v561 = vsub.f32 %v253, %v560
        %562 = vmatmul.mubr.f32.gmra.mxu0 %v561
        %v563 = vpop.f32.mrf.mxu0
        %v564 = vadd.f32 %v462, %v563
        %v565 = vpop.f32.mrf.mxu0
        %v566 = vadd.f32 %v464, %v565
        %567 = vmatprep.mubr.f32.mxu0 0.0
        %v568 = vand.u32 %v255, 4294901760
        %v569 = vsub.f32 %v255, %v568
        %570 = vmatmul.mubr.f32.gmra.mxu0 %v569
        %v571 = vpop.f32.mrf.mxu0
        %v572 = vadd.f32 %v469, %v571
        %v573 = vpop.f32.mrf.mxu0
        %v574 = vadd.f32 %v471, %v573
        %575 = vmatprep.mubr.f32.mxu0 0.0
        %v576 = vand.u32 %v257, 4294901760
        %v577 = vsub.f32 %v257, %v576
        %578 = vmatmul.mubr.f32.gmra.mxu0 %v577
        %v579 = vpop.f32.mrf.mxu0
        %v580 = vadd.f32 %v476, %v579
        %v581 = vpop.f32.mrf.mxu0
        %v582 = vadd.f32 %v478, %v581
        %583 = vmatprep.mubr.f32.mxu0 0.0
        %v584 = vand.u32 %v259, 4294901760
        %v585 = vsub.f32 %v259, %v584
        %586 = vmatmul.mubr.f32.gmra.mxu0 %v585
        %v587 = vpop.f32.mrf.mxu0
        %v588 = vadd.f32 %v483, %v587
        %v589 = vpop.f32.mrf.mxu0
        %v590 = vadd.f32 %v485, %v589
        %591 = vdwg.mxu0
        %592 = vmatprep.subr.mxu0 0.0
        %593 = vmatpush1.msra.mxu0 0.0
        %594 = vmatprep.subr.mxu0 0.0
        %595 = vmatpush1.msra.mxu0 0.0
        %596 = vmatprep.subr.mxu0 0.0
        %597 = vmatpush1.msra.mxu0 0.0
        %598 = vmatprep.subr.mxu0 0.0
        %599 = vmatpush1.msra.mxu0 0.0
        %600 = vmatprep.subr.mxu0 0.0
        %601 = vmatpush1.msra.mxu0 0.0
        %602 = vmatprep.subr.mxu0 0.0
        %603 = vmatpush1.msra.mxu0 0.0
        %604 = vmatprep.subr.mxu0 0.0
        %605 = vmatpush1.msra.mxu0 0.0
        %606 = vmatprep.subr.mxu0 0.0
        %607 = vmatpush1.msra.mxu0 0.0
        %608 = vmatprep.subr.mxu0 0.0
        %609 = vmatpush1.msra.mxu0 0.0
        %610 = vmatprep.subr.mxu0 0.0
        %611 = vmatpush1.msra.mxu0 0.0
        %612 = vmatprep.subr.mxu0 0.0
        %613 = vmatpush1.msra.mxu0 0.0
        %614 = vmatprep.subr.mxu0 0.0
        %615 = vmatpush1.msra.mxu0 0.0
        %616 = vmatprep.subr.mxu0 0.0
        %617 = vmatpush1.msra.mxu0 0.0
        %618 = vmatprep.subr.mxu0 0.0
        %619 = vmatpush1.msra.mxu0 0.0
        %v620 = vand.u32 %v231, 4294901760
        %621 = vmatprep.subr.mxu0 %v620
        %v622 = vand.u32 %v230, 4294901760
        %623 = vmatpush1.msra.mxu0 %v622
        %v624 = vand.u32 %v229, 4294901760
        %625 = vmatprep.subr.mxu0 %v624
        %v626 = vand.u32 %v228, 4294901760
        %627 = vmatpush1.msra.mxu0 %v626
        %628 = vmatprep.subr.mxu0 0.0
        %629 = vmatpush2.msra.mxu0 0.0
        %630 = vmatprep.subr.mxu0 0.0
        %631 = vmatpush2.msra.mxu0 0.0
        %632 = vmatprep.subr.mxu0 0.0
        %633 = vmatpush2.msra.mxu0 0.0
        %634 = vmatprep.subr.mxu0 0.0
        %635 = vmatpush2.msra.mxu0 0.0
        %636 = vmatprep.subr.mxu0 0.0
        %637 = vmatpush2.msra.mxu0 0.0
        %638 = vmatprep.subr.mxu0 0.0
        %639 = vmatpush2.msra.mxu0 0.0
        %640 = vmatprep.subr.mxu0 0.0
        %641 = vmatpush2.msra.mxu0 0.0
        %642 = vmatprep.subr.mxu0 0.0
        %643 = vmatpush2.msra.mxu0 0.0
        %644 = vmatprep.subr.mxu0 0.0
        %645 = vmatpush2.msra.mxu0 0.0
        %646 = vmatprep.subr.mxu0 0.0
        %647 = vmatpush2.msra.mxu0 0.0
        %648 = vmatprep.subr.mxu0 0.0
        %649 = vmatpush2.msra.mxu0 0.0
        %650 = vmatprep.subr.mxu0 0.0
        %651 = vmatpush2.msra.mxu0 0.0
        %652 = vmatprep.subr.mxu0 0.0
        %653 = vmatpush2.msra.mxu0 0.0
        %654 = vmatprep.subr.mxu0 0.0
        %655 = vmatpush2.msra.mxu0 0.0
        %656 = vmatprep.subr.mxu0 0.0
        %657 = vmatpush2.msra.mxu0 0.0
        %658 = vmatprep.subr.mxu0 0.0
        %659 = vmatpush2.msra.mxu0 0.0
        %660 = vmatprep.mubr.f32.mxu0 0.0
        %v661 = vand.u32 %v253, 4294901760
        %v662 = vsub.f32 %v253, %v661
        %v663 = vand.u32 %v662, 4294901760
        %664 = vmatmul.mubr.f32.gmra.mxu0 %v663
        %v665 = vpop.f32.mrf.mxu0
        %v666 = vadd.f32 %v564, %v665
        %v667 = vpop.f32.mrf.mxu0
        %v668 = vadd.f32 %v566, %v667
        %669 = vmatprep.mubr.f32.mxu0 0.0
        %v670 = vand.u32 %v255, 4294901760
        %v671 = vsub.f32 %v255, %v670
        %v672 = vand.u32 %v671, 4294901760
        %673 = vmatmul.mubr.f32.gmra.mxu0 %v672
        %v674 = vpop.f32.mrf.mxu0
        %v675 = vadd.f32 %v572, %v674
        %v676 = vpop.f32.mrf.mxu0
        %v677 = vadd.f32 %v574, %v676
        %678 = vmatprep.mubr.f32.mxu0 0.0
        %v679 = vand.u32 %v257, 4294901760
        %v680 = vsub.f32 %v257, %v679
        %v681 = vand.u32 %v680, 4294901760
        %682 = vmatmul.mubr.f32.gmra.mxu0 %v681
        %v683 = vpop.f32.mrf.mxu0
        %v684 = vadd.f32 %v580, %v683
        %v685 = vpop.f32.mrf.mxu0
        %v686 = vadd.f32 %v582, %v685
        %687 = vmatprep.mubr.f32.mxu0 0.0
        %v688 = vand.u32 %v259, 4294901760
        %v689 = vsub.f32 %v259, %v688
        %v690 = vand.u32 %v689, 4294901760
        %691 = vmatmul.mubr.f32.gmra.mxu0 %v690
        %v692 = vpop.f32.mrf.mxu0
        %v693 = vadd.f32 %v588, %v692
        %v694 = vpop.f32.mrf.mxu0
        %v695 = vadd.f32 %v590, %v694
        %696 = vdwg.mxu0
        %697 = vmatprep.subr.mxu0 0.0
        %698 = vmatpush1.msra.mxu0 0.0
        %699 = vmatprep.subr.mxu0 0.0
        %700 = vmatpush1.msra.mxu0 0.0
        %701 = vmatprep.subr.mxu0 0.0
        %702 = vmatpush1.msra.mxu0 0.0
        %703 = vmatprep.subr.mxu0 0.0
        %704 = vmatpush1.msra.mxu0 0.0
        %705 = vmatprep.subr.mxu0 0.0
        %706 = vmatpush1.msra.mxu0 0.0
        %707 = vmatprep.subr.mxu0 0.0
        %708 = vmatpush1.msra.mxu0 0.0
        %709 = vmatprep.subr.mxu0 0.0
        %710 = vmatpush1.msra.mxu0 0.0
        %711 = vmatprep.subr.mxu0 0.0
        %712 = vmatpush1.msra.mxu0 0.0
        %713 = vmatprep.subr.mxu0 0.0
        %714 = vmatpush1.msra.mxu0 0.0
        %715 = vmatprep.subr.mxu0 0.0
        %716 = vmatpush1.msra.mxu0 0.0
        %717 = vmatprep.subr.mxu0 0.0
        %718 = vmatpush1.msra.mxu0 0.0
        %719 = vmatprep.subr.mxu0 0.0
        %720 = vmatpush1.msra.mxu0 0.0
        %721 = vmatprep.subr.mxu0 0.0
        %722 = vmatpush1.msra.mxu0 0.0
        %723 = vmatprep.subr.mxu0 0.0
        %724 = vmatpush1.msra.mxu0 0.0
        %v725 = vand.u32 %v231, 4294901760
        %v726 = vsub.f32 %v231, %v725
        %v727 = vand.u32 %v726, 4294901760
        %728 = vmatprep.subr.mxu0 %v727
        %v729 = vand.u32 %v230, 4294901760
        %v730 = vsub.f32 %v230, %v729
        %v731 = vand.u32 %v730, 4294901760
        %732 = vmatpush1.msra.mxu0 %v731
        %v733 = vand.u32 %v229, 4294901760
        %v734 = vsub.f32 %v229, %v733
        %v735 = vand.u32 %v734, 4294901760
        %736 = vmatprep.subr.mxu0 %v735
        %v737 = vand.u32 %v228, 4294901760
        %v738 = vsub.f32 %v228, %v737
        %v739 = vand.u32 %v738, 4294901760
        %740 = vmatpush1.msra.mxu0 %v739
        %741 = vmatprep.subr.mxu0 0.0
        %742 = vmatpush2.msra.mxu0 0.0
        %743 = vmatprep.subr.mxu0 0.0
        %744 = vmatpush2.msra.mxu0 0.0
        %745 = vmatprep.subr.mxu0 0.0
        %746 = vmatpush2.msra.mxu0 0.0
        %747 = vmatprep.subr.mxu0 0.0
        %748 = vmatpush2.msra.mxu0 0.0
        %749 = vmatprep.subr.mxu0 0.0
        %750 = vmatpush2.msra.mxu0 0.0
        %751 = vmatprep.subr.mxu0 0.0
        %752 = vmatpush2.msra.mxu0 0.0
        %753 = vmatprep.subr.mxu0 0.0
        %754 = vmatpush2.msra.mxu0 0.0
        %755 = vmatprep.subr.mxu0 0.0
        %756 = vmatpush2.msra.mxu0 0.0
        %757 = vmatprep.subr.mxu0 0.0
        %758 = vmatpush2.msra.mxu0 0.0
        %759 = vmatprep.subr.mxu0 0.0
        %760 = vmatpush2.msra.mxu0 0.0
        %761 = vmatprep.subr.mxu0 0.0
        %762 = vmatpush2.msra.mxu0 0.0
        %763 = vmatprep.subr.mxu0 0.0
        %764 = vmatpush2.msra.mxu0 0.0
        %765 = vmatprep.subr.mxu0 0.0
        %766 = vmatpush2.msra.mxu0 0.0
        %767 = vmatprep.subr.mxu0 0.0
        %768 = vmatpush2.msra.mxu0 0.0
        %769 = vmatprep.subr.mxu0 0.0
        %770 = vmatpush2.msra.mxu0 0.0
        %771 = vmatprep.subr.mxu0 0.0
        %772 = vmatpush2.msra.mxu0 0.0
        %773 = vmatprep.mubr.f32.mxu0 0.0
        %v774 = vand.u32 %v253, 4294901760
        %775 = vmatmul.mubr.f32.gmra.mxu0 %v774
        %v776 = vpop.f32.mrf.mxu0
        %v777 = vadd.f32 %v666, %v776
        %v778 = vpop.f32.mrf.mxu0
        %v779 = vadd.f32 %v668, %v778
        %780 = vmatprep.mubr.f32.mxu0 0.0
        %v781 = vand.u32 %v255, 4294901760
        %782 = vmatmul.mubr.f32.gmra.mxu0 %v781
        %v783 = vpop.f32.mrf.mxu0
        %v784 = vadd.f32 %v675, %v783
        %v785 = vpop.f32.mrf.mxu0
        %v786 = vadd.f32 %v677, %v785
        %787 = vmatprep.mubr.f32.mxu0 0.0
        %v788 = vand.u32 %v257, 4294901760
        %789 = vmatmul.mubr.f32.gmra.mxu0 %v788
        %v790 = vpop.f32.mrf.mxu0
        %v791 = vadd.f32 %v684, %v790
        %v792 = vpop.f32.mrf.mxu0
        %v793 = vadd.f32 %v686, %v792
        %794 = vmatprep.mubr.f32.mxu0 0.0
        %v795 = vand.u32 %v259, 4294901760
        %796 = vmatmul.mubr.f32.gmra.mxu0 %v795
        %v797 = vpop.f32.mrf.mxu0
        %v798 = vadd.f32 %v693, %v797
        %v799 = vpop.f32.mrf.mxu0
        %v800 = vadd.f32 %v695, %v799
        %801 = vdwg.mxu0
        %802 = vmatprep.subr.mxu0 0.0
        %803 = vmatpush1.msra.mxu0 0.0
        %804 = vmatprep.subr.mxu0 0.0
        %805 = vmatpush1.msra.mxu0 0.0
        %806 = vmatprep.subr.mxu0 0.0
        %807 = vmatpush1.msra.mxu0 0.0
        %808 = vmatprep.subr.mxu0 0.0
        %809 = vmatpush1.msra.mxu0 0.0
        %810 = vmatprep.subr.mxu0 0.0
        %811 = vmatpush1.msra.mxu0 0.0
        %812 = vmatprep.subr.mxu0 0.0
        %813 = vmatpush1.msra.mxu0 0.0
        %814 = vmatprep.subr.mxu0 0.0
        %815 = vmatpush1.msra.mxu0 0.0
        %816 = vmatprep.subr.mxu0 0.0
        %817 = vmatpush1.msra.mxu0 0.0
        %818 = vmatprep.subr.mxu0 0.0
        %819 = vmatpush1.msra.mxu0 0.0
        %820 = vmatprep.subr.mxu0 0.0
        %821 = vmatpush1.msra.mxu0 0.0
        %822 = vmatprep.subr.mxu0 0.0
        %823 = vmatpush1.msra.mxu0 0.0
        %824 = vmatprep.subr.mxu0 0.0
        %825 = vmatpush1.msra.mxu0 0.0
        %826 = vmatprep.subr.mxu0 0.0
        %827 = vmatpush1.msra.mxu0 0.0
        %828 = vmatprep.subr.mxu0 0.0
        %829 = vmatpush1.msra.mxu0 0.0
        %v830 = vand.u32 %v231, 4294901760
        %831 = vmatprep.subr.mxu0 %v830
        %v832 = vand.u32 %v230, 4294901760
        %833 = vmatpush1.msra.mxu0 %v832
        %v834 = vand.u32 %v229, 4294901760
        %835 = vmatprep.subr.mxu0 %v834
        %v836 = vand.u32 %v228, 4294901760
        %837 = vmatpush1.msra.mxu0 %v836
        %838 = vmatprep.subr.mxu0 0.0
        %839 = vmatpush2.msra.mxu0 0.0
        %840 = vmatprep.subr.mxu0 0.0
        %841 = vmatpush2.msra.mxu0 0.0
        %842 = vmatprep.subr.mxu0 0.0
        %843 = vmatpush2.msra.mxu0 0.0
        %844 = vmatprep.subr.mxu0 0.0
        %845 = vmatpush2.msra.mxu0 0.0
        %846 = vmatprep.subr.mxu0 0.0
        %847 = vmatpush2.msra.mxu0 0.0
        %848 = vmatprep.subr.mxu0 0.0
        %849 = vmatpush2.msra.mxu0 0.0
        %850 = vmatprep.subr.mxu0 0.0
        %851 = vmatpush2.msra.mxu0 0.0
        %852 = vmatprep.subr.mxu0 0.0
        %853 = vmatpush2.msra.mxu0 0.0
        %854 = vmatprep.subr.mxu0 0.0
        %855 = vmatpush2.msra.mxu0 0.0
        %856 = vmatprep.subr.mxu0 0.0
        %857 = vmatpush2.msra.mxu0 0.0
        %858 = vmatprep.subr.mxu0 0.0
        %859 = vmatpush2.msra.mxu0 0.0
        %860 = vmatprep.subr.mxu0 0.0
        %861 = vmatpush2.msra.mxu0 0.0
        %862 = vmatprep.subr.mxu0 0.0
        %863 = vmatpush2.msra.mxu0 0.0
        %864 = vmatprep.subr.mxu0 0.0
        %865 = vmatpush2.msra.mxu0 0.0
        %866 = vmatprep.subr.mxu0 0.0
        %867 = vmatpush2.msra.mxu0 0.0
        %868 = vmatprep.subr.mxu0 0.0
        %869 = vmatpush2.msra.mxu0 0.0
        %870 = vmatprep.mubr.f32.mxu0 0.0
        %v871 = vand.u32 %v253, 4294901760
        %872 = vmatmul.mubr.f32.gmra.mxu0 %v871
        %v873 = vpop.f32.mrf.mxu0
        %v874 = vadd.f32 %v777, %v873
        %v875 = vpop.f32.mrf.mxu0
        %v876 = vadd.f32 %v779, %v875
        %877 = vmatprep.mubr.f32.mxu0 0.0
        %v878 = vand.u32 %v255, 4294901760
        %879 = vmatmul.mubr.f32.gmra.mxu0 %v878
        %v880 = vpop.f32.mrf.mxu0
        %v881 = vadd.f32 %v784, %v880
        %v882 = vpop.f32.mrf.mxu0
        %v883 = vadd.f32 %v786, %v882
        %884 = vmatprep.mubr.f32.mxu0 0.0
        %v885 = vand.u32 %v257, 4294901760
        %886 = vmatmul.mubr.f32.gmra.mxu0 %v885
        %v887 = vpop.f32.mrf.mxu0
        %v888 = vadd.f32 %v791, %v887
        %v889 = vpop.f32.mrf.mxu0
        %v890 = vadd.f32 %v793, %v889
        %891 = vmatprep.mubr.f32.mxu0 0.0
        %v892 = vand.u32 %v259, 4294901760
        %893 = vmatmul.mubr.f32.gmra.mxu0 %v892
        %v894 = vpop.f32.mrf.mxu0
        %v895 = vadd.f32 %v798, %v894
        %v896 = vpop.f32.mrf.mxu0
        %v897 = vadd.f32 %v800, %v896
        %898 = vdwg.mxu0
        %v899 = vadd.f32 %v874, 3.0
        %v900 = vadd.f32 %v876, 3.0
        %v901 = vadd.f32 %v881, 3.0
        %v902 = vadd.f32 %v883, 3.0
        %v903 = vadd.f32 %v888, 3.0
        %v904 = vadd.f32 %v890, 3.0
        %v905 = vadd.f32 %v895, 3.0
        %v906 = vadd.f32 %v897, 3.0
        %v907 = vmax.f32 %v899, 0.0
        %v908 = vmax.f32 %v900, 0.0
        %v909 = vmax.f32 %v901, 0.0
        %v910 = vmax.f32 %v902, 0.0
        %v911 = vmax.f32 %v903, 0.0
        %v912 = vmax.f32 %v904, 0.0
        %v913 = vmax.f32 %v905, 0.0
        %v914 = vmax.f32 %v906, 0.0
        %v915 = vmin.f32 %v907, 6.0
        %v916 = vmin.f32 %v908, 6.0
        %v917 = vmin.f32 %v909, 6.0
        %v918 = vmin.f32 %v910, 6.0
        %v919 = vmin.f32 %v911, 6.0
        %v920 = vmin.f32 %v912, 6.0
        %v921 = vmin.f32 %v913, 6.0
        %v922 = vmin.f32 %v914, 6.0
        %v923 = vmul.f32 %v915, 0.16666667
        %v924 = vmul.f32 %v916, 0.16666667
        %v925 = vmul.f32 %v917, 0.16666667
        %v926 = vmul.f32 %v918, 0.16666667
        %v927 = vmul.f32 %v919, 0.16666667
        %v928 = vmul.f32 %v920, 0.16666667
        %v929 = vmul.f32 %v921, 0.16666667
        %v930 = vmul.f32 %v922, 0.16666667
        %v931 = vmul.f32 %v874, %v923
        %v932 = vmul.f32 %v876, %v924
        %v933 = vmul.f32 %v881, %v925
        %v934 = vmul.f32 %v883, %v926
        %v935 = vmul.f32 %v888, %v927
        %v936 = vmul.f32 %v890, %v928
        %v937 = vmul.f32 %v895, %v929
        %v938 = vmul.f32 %v897, %v930
        %939 = vrot.lane.b32.xlu0 %v931, 17
        %v940 = vpop.permute.xlu0 %939
        %941 = vrot.lane.b32.xlu0 %v933, 17
        %v942 = vpop.permute.xlu0 %941
        %943 = vrot.lane.b32.xlu0 %v935, 17
        %v944 = vpop.permute.xlu0 %943
        %945 = vrot.lane.b32.xlu0 %v937, 17
        %v946 = vpop.permute.xlu0 %945
        %947 = vrot.lane.b32.xlu0 %v932, 17
        %v948 = vpop.permute.xlu0 %947
        %949 = vrot.lane.b32.xlu0 %v934, 17
        %v950 = vpop.permute.xlu0 %949
        %951 = vrot.lane.b32.xlu0 %v936, 17
        %v952 = vpop.permute.xlu0 %951
        %953 = vrot.lane.b32.xlu0 %v938, 17
        %v954 = vpop.permute.xlu0 %953
        %v955 = vlaneseq
        %v956 = vand.u32 %v955, 127
        %vm957 = vcmp.lt.s32.totalorder %v956, 17
        %v958 = vsel %vm957, %v940, %v948
        %v959 = vsel %vm957, %v942, %v950
        %v960 = vsel %vm957, %v944, %v952
        %v961 = vsel %vm957, %v946, %v954
        %v962 = vsel %vm957, %v948, %v940
        %v963 = vsel %vm957, %v950, %v942
        %v964 = vsel %vm957, %v952, %v944
        %v965 = vsel %vm957, %v954, %v946
        %v966 = vlaneseq
        %v967 = vshrl.u32 %v966, 7
        %v968 = vsub.s32 0, %v967
        %v969 = vrot.slane %v224, %v968
        %v970 = vlaneseq
        %v971 = vshrl.u32 %v970, 7
        %v972 = vsub.s32 0, %v971
        %v973 = vrot.slane %v225, %v972
        %v974 = vmul.f32 %v962, %v969
        %v975 = vmul.f32 %v958, %v973
        %v976 = vmul.f32 %v963, %v969
        %v977 = vmul.f32 %v959, %v973
        %v978 = vmul.f32 %v964, %v969
        %v979 = vmul.f32 %v960, %v973
        %v980 = vmul.f32 %v965, %v969
        %v981 = vmul.f32 %v961, %v973
        %982 = vset.pattern.permute.xlu0 17
        %983 = vperm.xlu0 %982, %v218
        %v984 = vpop.permute.xlu0 %983
        %986 = vset.pattern.permute.xlu0 17
        %987 = vperm.xlu0 %986, %v219
        %v988 = vpop.permute.xlu0 %987
        %990 = vset.pattern.permute.xlu0 17
        %991 = vperm.xlu0 %990, %v220
        %v992 = vpop.permute.xlu0 %991
        %994 = vset.pattern.permute.xlu0 17
        %995 = vperm.xlu0 %994, %v221
        %v996 = vpop.permute.xlu0 %995
        %v998 = vmul.f32 %v984, %v974
        %v999 = vmul.f32 %v984, %v975
        %v1000 = vmul.f32 %v988, %v976
        %v1001 = vmul.f32 %v988, %v977
        %v1002 = vmul.f32 %v992, %v978
        %v1003 = vmul.f32 %v992, %v979
        %v1004 = vmul.f32 %v996, %v980
        %v1005 = vmul.f32 %v996, %v981
        %v1006 = vadd.f32 %v998, 0.0
        %v1007 = vadd.f32 %v999, 0.0
        %v1008 = vadd.f32 %v1000, 0.0
        %v1009 = vadd.f32 %v1001, 0.0
        %v1010 = vadd.f32 %v1002, 0.0
        %v1011 = vadd.f32 %v1003, 0.0
        %v1012 = vadd.f32 %v1004, 0.0
        %v1013 = vadd.f32 %v1005, 0.0
        %1014 = vrot.lane.b32.xlu0 %v931, 16
        %v1015 = vpop.permute.xlu0 %1014
        %1016 = vrot.lane.b32.xlu0 %v933, 16
        %v1017 = vpop.permute.xlu0 %1016
        %1018 = vrot.lane.b32.xlu0 %v935, 16
        %v1019 = vpop.permute.xlu0 %1018
        %1020 = vrot.lane.b32.xlu0 %v937, 16
        %v1021 = vpop.permute.xlu0 %1020
        %1022 = vrot.lane.b32.xlu0 %v932, 16
        %v1023 = vpop.permute.xlu0 %1022
        %1024 = vrot.lane.b32.xlu0 %v934, 16
        %v1025 = vpop.permute.xlu0 %1024
        %1026 = vrot.lane.b32.xlu0 %v936, 16
        %v1027 = vpop.permute.xlu0 %1026
        %1028 = vrot.lane.b32.xlu0 %v938, 16
        %v1029 = vpop.permute.xlu0 %1028
        %vm1030 = vcmp.lt.s32.totalorder %v956, 16
        %v1031 = vsel %vm1030, %v1015, %v1023
        %v1032 = vsel %vm1030, %v1017, %v1025
        %v1033 = vsel %vm1030, %v1019, %v1027
        %v1034 = vsel %vm1030, %v1021, %v1029
        %v1035 = vsel %vm1030, %v1023, %v1015
        %v1036 = vsel %vm1030, %v1025, %v1017
        %v1037 = vsel %vm1030, %v1027, %v1019
        %v1038 = vsel %vm1030, %v1029, %v1021
        %v1039 = vlaneseq
        %v1040 = vshrl.u32 %v1039, 7
        %v1041 = vsub.s32 1, %v1040
        %v1042 = vrot.slane %v224, %v1041
        %v1043 = vlaneseq
        %v1044 = vshrl.u32 %v1043, 7
        %v1045 = vsub.s32 1, %v1044
        %v1046 = vrot.slane %v225, %v1045
        %v1047 = vmul.f32 %v1035, %v1042
        %v1048 = vmul.f32 %v1031, %v1046
        %v1049 = vmul.f32 %v1036, %v1042
        %v1050 = vmul.f32 %v1032, %v1046
        %v1051 = vmul.f32 %v1037, %v1042
        %v1052 = vmul.f32 %v1033, %v1046
        %v1053 = vmul.f32 %v1038, %v1042
        %v1054 = vmul.f32 %v1034, %v1046
        %1055 = vset.pattern.permute.xlu0 18
        %1056 = vperm.xlu0 %1055, %v218
        %v1057 = vpop.permute.xlu0 %1056
        %1059 = vset.pattern.permute.xlu0 18
        %1060 = vperm.xlu0 %1059, %v219
        %v1061 = vpop.permute.xlu0 %1060
        %1063 = vset.pattern.permute.xlu0 18
        %1064 = vperm.xlu0 %1063, %v220
        %v1065 = vpop.permute.xlu0 %1064
        %1067 = vset.pattern.permute.xlu0 18
        %1068 = vperm.xlu0 %1067, %v221
        %v1069 = vpop.permute.xlu0 %1068
        %v1071 = vmul.f32 %v1057, %v1047
        %v1072 = vmul.f32 %v1057, %v1048
        %v1073 = vmul.f32 %v1061, %v1049
        %v1074 = vmul.f32 %v1061, %v1050
        %v1075 = vmul.f32 %v1065, %v1051
        %v1076 = vmul.f32 %v1065, %v1052
        %v1077 = vmul.f32 %v1069, %v1053
        %v1078 = vmul.f32 %v1069, %v1054
        %v1079 = vadd.f32 %v1071, 0.0
        %v1080 = vadd.f32 %v1072, 0.0
        %v1081 = vadd.f32 %v1073, 0.0
        %v1082 = vadd.f32 %v1074, 0.0
        %v1083 = vadd.f32 %v1075, 0.0
        %v1084 = vadd.f32 %v1076, 0.0
        %v1085 = vadd.f32 %v1077, 0.0
        %v1086 = vadd.f32 %v1078, 0.0
        %1087 = vrot.lane.b32.xlu0 %v931, 15
        %v1088 = vpop.permute.xlu0 %1087
        %1089 = vrot.lane.b32.xlu0 %v933, 15
        %v1090 = vpop.permute.xlu0 %1089
        %1091 = vrot.lane.b32.xlu0 %v935, 15
        %v1092 = vpop.permute.xlu0 %1091
        %1093 = vrot.lane.b32.xlu0 %v937, 15
        %v1094 = vpop.permute.xlu0 %1093
        %1095 = vrot.lane.b32.xlu0 %v932, 15
        %v1096 = vpop.permute.xlu0 %1095
        %1097 = vrot.lane.b32.xlu0 %v934, 15
        %v1098 = vpop.permute.xlu0 %1097
        %1099 = vrot.lane.b32.xlu0 %v936, 15
        %v1100 = vpop.permute.xlu0 %1099
        %1101 = vrot.lane.b32.xlu0 %v938, 15
        %v1102 = vpop.permute.xlu0 %1101
        %vm1103 = vcmp.lt.s32.totalorder %v956, 15
        %v1104 = vsel %vm1103, %v1088, %v1096
        %v1105 = vsel %vm1103, %v1090, %v1098
        %v1106 = vsel %vm1103, %v1092, %v1100
        %v1107 = vsel %vm1103, %v1094, %v1102
        %v1108 = vsel %vm1103, %v1096, %v1088
        %v1109 = vsel %vm1103, %v1098, %v1090
        %v1110 = vsel %vm1103, %v1100, %v1092
        %v1111 = vsel %vm1103, %v1102, %v1094
        %v1112 = vlaneseq
        %v1113 = vshrl.u32 %v1112, 7
        %v1114 = vsub.s32 2, %v1113
        %v1115 = vrot.slane %v224, %v1114
        %v1116 = vlaneseq
        %v1117 = vshrl.u32 %v1116, 7
        %v1118 = vsub.s32 2, %v1117
        %v1119 = vrot.slane %v225, %v1118
        %v1120 = vmul.f32 %v1108, %v1115
        %v1121 = vmul.f32 %v1104, %v1119
        %v1122 = vmul.f32 %v1109, %v1115
        %v1123 = vmul.f32 %v1105, %v1119
        %v1124 = vmul.f32 %v1110, %v1115
        %v1125 = vmul.f32 %v1106, %v1119
        %v1126 = vmul.f32 %v1111, %v1115
        %v1127 = vmul.f32 %v1107, %v1119
        %1128 = vset.pattern.permute.xlu0 19
        %1129 = vperm.xlu0 %1128, %v218
        %v1130 = vpop.permute.xlu0 %1129
        %1132 = vset.pattern.permute.xlu0 19
        %1133 = vperm.xlu0 %1132, %v219
        %v1134 = vpop.permute.xlu0 %1133
        %1136 = vset.pattern.permute.xlu0 19
        %1137 = vperm.xlu0 %1136, %v220
        %v1138 = vpop.permute.xlu0 %1137
        %1140 = vset.pattern.permute.xlu0 19
        %1141 = vperm.xlu0 %1140, %v221
        %v1142 = vpop.permute.xlu0 %1141
        %v1144 = vmul.f32 %v1130, %v1120
        %v1145 = vmul.f32 %v1130, %v1121
        %v1146 = vmul.f32 %v1134, %v1122
        %v1147 = vmul.f32 %v1134, %v1123
        %v1148 = vmul.f32 %v1138, %v1124
        %v1149 = vmul.f32 %v1138, %v1125
        %v1150 = vmul.f32 %v1142, %v1126
        %v1151 = vmul.f32 %v1142, %v1127
        %v1152 = vadd.f32 %v1144, 0.0
        %v1153 = vadd.f32 %v1145, 0.0
        %v1154 = vadd.f32 %v1146, 0.0
        %v1155 = vadd.f32 %v1147, 0.0
        %v1156 = vadd.f32 %v1148, 0.0
        %v1157 = vadd.f32 %v1149, 0.0
        %v1158 = vadd.f32 %v1150, 0.0
        %v1159 = vadd.f32 %v1151, 0.0
        %1160 = vrot.lane.b32.xlu0 %v931, 1
        %v1161 = vpop.permute.xlu0 %1160
        %1162 = vrot.lane.b32.xlu0 %v933, 1
        %v1163 = vpop.permute.xlu0 %1162
        %1164 = vrot.lane.b32.xlu0 %v935, 1
        %v1165 = vpop.permute.xlu0 %1164
        %1166 = vrot.lane.b32.xlu0 %v937, 1
        %v1167 = vpop.permute.xlu0 %1166
        %1168 = vrot.lane.b32.xlu0 %v932, 1
        %v1169 = vpop.permute.xlu0 %1168
        %1170 = vrot.lane.b32.xlu0 %v934, 1
        %v1171 = vpop.permute.xlu0 %1170
        %1172 = vrot.lane.b32.xlu0 %v936, 1
        %v1173 = vpop.permute.xlu0 %1172
        %1174 = vrot.lane.b32.xlu0 %v938, 1
        %v1175 = vpop.permute.xlu0 %1174
        %vm1176 = vcmp.lt.s32.totalorder %v956, 1
        %v1177 = vsel %vm1176, %v1161, %v1169
        %v1178 = vsel %vm1176, %v1163, %v1171
        %v1179 = vsel %vm1176, %v1165, %v1173
        %v1180 = vsel %vm1176, %v1167, %v1175
        %v1181 = vsel %vm1176, %v1169, %v1161
        %v1182 = vsel %vm1176, %v1171, %v1163
        %v1183 = vsel %vm1176, %v1173, %v1165
        %v1184 = vsel %vm1176, %v1175, %v1167
        %v1185 = vlaneseq
        %v1186 = vshrl.u32 %v1185, 7
        %v1187 = vsub.s32 3, %v1186
        %v1188 = vrot.slane %v224, %v1187
        %v1189 = vlaneseq
        %v1190 = vshrl.u32 %v1189, 7
        %v1191 = vsub.s32 3, %v1190
        %v1192 = vrot.slane %v225, %v1191
        %v1193 = vmul.f32 %v1181, %v1188
        %v1194 = vmul.f32 %v1177, %v1192
        %v1195 = vmul.f32 %v1182, %v1188
        %v1196 = vmul.f32 %v1178, %v1192
        %v1197 = vmul.f32 %v1183, %v1188
        %v1198 = vmul.f32 %v1179, %v1192
        %v1199 = vmul.f32 %v1184, %v1188
        %v1200 = vmul.f32 %v1180, %v1192
        %1201 = vset.pattern.permute.xlu0 20
        %1202 = vperm.xlu0 %1201, %v218
        %v1203 = vpop.permute.xlu0 %1202
        %1205 = vset.pattern.permute.xlu0 20
        %1206 = vperm.xlu0 %1205, %v219
        %v1207 = vpop.permute.xlu0 %1206
        %1209 = vset.pattern.permute.xlu0 20
        %1210 = vperm.xlu0 %1209, %v220
        %v1211 = vpop.permute.xlu0 %1210
        %1213 = vset.pattern.permute.xlu0 20
        %1214 = vperm.xlu0 %1213, %v221
        %v1215 = vpop.permute.xlu0 %1214
        %v1217 = vmul.f32 %v1203, %v1193
        %v1218 = vmul.f32 %v1203, %v1194
        %v1219 = vmul.f32 %v1207, %v1195
        %v1220 = vmul.f32 %v1207, %v1196
        %v1221 = vmul.f32 %v1211, %v1197
        %v1222 = vmul.f32 %v1211, %v1198
        %v1223 = vmul.f32 %v1215, %v1199
        %v1224 = vmul.f32 %v1215, %v1200
        %v1225 = vadd.f32 %v1006, %v1217
        %v1226 = vadd.f32 %v1007, %v1218
        %v1227 = vadd.f32 %v1008, %v1219
        %v1228 = vadd.f32 %v1009, %v1220
        %v1229 = vadd.f32 %v1010, %v1221
        %v1230 = vadd.f32 %v1011, %v1222
        %v1231 = vadd.f32 %v1012, %v1223
        %v1232 = vadd.f32 %v1013, %v1224
        %1233 = vset.pattern.permute.xlu0 21
        %1234 = vperm.xlu0 %1233, %v218
        %v1235 = vpop.permute.xlu0 %1234
        %1237 = vset.pattern.permute.xlu0 21
        %1238 = vperm.xlu0 %1237, %v219
        %v1239 = vpop.permute.xlu0 %1238
        %1241 = vset.pattern.permute.xlu0 21
        %1242 = vperm.xlu0 %1241, %v220
        %v1243 = vpop.permute.xlu0 %1242
        %1245 = vset.pattern.permute.xlu0 21
        %1246 = vperm.xlu0 %1245, %v221
        %v1247 = vpop.permute.xlu0 %1246
        %v1249 = vmul.f32 %v1235, %v931
        %v1250 = vmul.f32 %v1235, %v932
        %v1251 = vmul.f32 %v1239, %v933
        %v1252 = vmul.f32 %v1239, %v934
        %v1253 = vmul.f32 %v1243, %v935
        %v1254 = vmul.f32 %v1243, %v936
        %v1255 = vmul.f32 %v1247, %v937
        %v1256 = vmul.f32 %v1247, %v938
        %v1257 = vadd.f32 %v1079, %v1249
        %v1258 = vadd.f32 %v1080, %v1250
        %v1259 = vadd.f32 %v1081, %v1251
        %v1260 = vadd.f32 %v1082, %v1252
        %v1261 = vadd.f32 %v1083, %v1253
        %v1262 = vadd.f32 %v1084, %v1254
        %v1263 = vadd.f32 %v1085, %v1255
        %v1264 = vadd.f32 %v1086, %v1256
        %1265 = vrot.lane.b32.xlu0 %v931, 127
        %v1266 = vpop.permute.xlu0 %1265
        %1267 = vrot.lane.b32.xlu0 %v933, 127
        %v1268 = vpop.permute.xlu0 %1267
        %1269 = vrot.lane.b32.xlu0 %v935, 127
        %v1270 = vpop.permute.xlu0 %1269
        %1271 = vrot.lane.b32.xlu0 %v937, 127
        %v1272 = vpop.permute.xlu0 %1271
        %1273 = vrot.lane.b32.xlu0 %v932, 127
        %v1274 = vpop.permute.xlu0 %1273
        %1275 = vrot.lane.b32.xlu0 %v934, 127
        %v1276 = vpop.permute.xlu0 %1275
        %1277 = vrot.lane.b32.xlu0 %v936, 127
        %v1278 = vpop.permute.xlu0 %1277
        %1279 = vrot.lane.b32.xlu0 %v938, 127
        %v1280 = vpop.permute.xlu0 %1279
        %vm1281 = vcmp.lt.s32.totalorder %v956, 127
        %v1282 = vsel %vm1281, %v1266, %v1274
        %v1283 = vsel %vm1281, %v1268, %v1276
        %v1284 = vsel %vm1281, %v1270, %v1278
        %v1285 = vsel %vm1281, %v1272, %v1280
        %v1286 = vsel %vm1281, %v1274, %v1266
        %v1287 = vsel %vm1281, %v1276, %v1268
        %v1288 = vsel %vm1281, %v1278, %v1270
        %v1289 = vsel %vm1281, %v1280, %v1272
        %v1290 = vlaneseq
        %v1291 = vshrl.u32 %v1290, 7
        %v1292 = vsub.s32 5, %v1291
        %v1293 = vrot.slane %v224, %v1292
        %v1294 = vlaneseq
        %v1295 = vshrl.u32 %v1294, 7
        %v1296 = vsub.s32 5, %v1295
        %v1297 = vrot.slane %v225, %v1296
        %v1298 = vmul.f32 %v1282, %v1293
        %v1299 = vmul.f32 %v1286, %v1297
        %v1300 = vmul.f32 %v1283, %v1293
        %v1301 = vmul.f32 %v1287, %v1297
        %v1302 = vmul.f32 %v1284, %v1293
        %v1303 = vmul.f32 %v1288, %v1297
        %v1304 = vmul.f32 %v1285, %v1293
        %v1305 = vmul.f32 %v1289, %v1297
        %1306 = vset.pattern.permute.xlu0 22
        %1307 = vperm.xlu0 %1306, %v218
        %v1308 = vpop.permute.xlu0 %1307
        %1310 = vset.pattern.permute.xlu0 22
        %1311 = vperm.xlu0 %1310, %v219
        %v1312 = vpop.permute.xlu0 %1311
        %1314 = vset.pattern.permute.xlu0 22
        %1315 = vperm.xlu0 %1314, %v220
        %v1316 = vpop.permute.xlu0 %1315
        %1318 = vset.pattern.permute.xlu0 22
        %1319 = vperm.xlu0 %1318, %v221
        %v1320 = vpop.permute.xlu0 %1319
        %v1322 = vmul.f32 %v1308, %v1298
        %v1323 = vmul.f32 %v1308, %v1299
        %v1324 = vmul.f32 %v1312, %v1300
        %v1325 = vmul.f32 %v1312, %v1301
        %v1326 = vmul.f32 %v1316, %v1302
        %v1327 = vmul.f32 %v1316, %v1303
        %v1328 = vmul.f32 %v1320, %v1304
        %v1329 = vmul.f32 %v1320, %v1305
        %v1330 = vadd.f32 %v1152, %v1322
        %v1331 = vadd.f32 %v1153, %v1323
        %v1332 = vadd.f32 %v1154, %v1324
        %v1333 = vadd.f32 %v1155, %v1325
        %v1334 = vadd.f32 %v1156, %v1326
        %v1335 = vadd.f32 %v1157, %v1327
        %v1336 = vadd.f32 %v1158, %v1328
        %v1337 = vadd.f32 %v1159, %v1329
        %1338 = vrot.lane.b32.xlu0 %v931, 113
        %v1339 = vpop.permute.xlu0 %1338
        %1340 = vrot.lane.b32.xlu0 %v933, 113
        %v1341 = vpop.permute.xlu0 %1340
        %1342 = vrot.lane.b32.xlu0 %v935, 113
        %v1343 = vpop.permute.xlu0 %1342
        %1344 = vrot.lane.b32.xlu0 %v937, 113
        %v1345 = vpop.permute.xlu0 %1344
        %1346 = vrot.lane.b32.xlu0 %v932, 113
        %v1347 = vpop.permute.xlu0 %1346
        %1348 = vrot.lane.b32.xlu0 %v934, 113
        %v1349 = vpop.permute.xlu0 %1348
        %1350 = vrot.lane.b32.xlu0 %v936, 113
        %v1351 = vpop.permute.xlu0 %1350
        %1352 = vrot.lane.b32.xlu0 %v938, 113
        %v1353 = vpop.permute.xlu0 %1352
        %vm1354 = vcmp.lt.s32.totalorder %v956, 113
        %v1355 = vsel %vm1354, %v1339, %v1347
        %v1356 = vsel %vm1354, %v1341, %v1349
        %v1357 = vsel %vm1354, %v1343, %v1351
        %v1358 = vsel %vm1354, %v1345, %v1353
        %v1359 = vsel %vm1354, %v1347, %v1339
        %v1360 = vsel %vm1354, %v1349, %v1341
        %v1361 = vsel %vm1354, %v1351, %v1343
        %v1362 = vsel %vm1354, %v1353, %v1345
        %v1363 = vlaneseq
        %v1364 = vshrl.u32 %v1363, 7
        %v1365 = vsub.s32 6, %v1364
        %v1366 = vrot.slane %v224, %v1365
        %v1367 = vlaneseq
        %v1368 = vshrl.u32 %v1367, 7
        %v1369 = vsub.s32 6, %v1368
        %v1370 = vrot.slane %v225, %v1369
        %v1371 = vmul.f32 %v1355, %v1366
        %v1372 = vmul.f32 %v1359, %v1370
        %v1373 = vmul.f32 %v1356, %v1366
        %v1374 = vmul.f32 %v1360, %v1370
        %v1375 = vmul.f32 %v1357, %v1366
        %v1376 = vmul.f32 %v1361, %v1370
        %v1377 = vmul.f32 %v1358, %v1366
        %v1378 = vmul.f32 %v1362, %v1370
        %1379 = vset.pattern.permute.xlu0 23
        %1380 = vperm.xlu0 %1379, %v218
        %v1381 = vpop.permute.xlu0 %1380
        %1383 = vset.pattern.permute.xlu0 23
        %1384 = vperm.xlu0 %1383, %v219
        %v1385 = vpop.permute.xlu0 %1384
        %1387 = vset.pattern.permute.xlu0 23
        %1388 = vperm.xlu0 %1387, %v220
        %v1389 = vpop.permute.xlu0 %1388
        %1391 = vset.pattern.permute.xlu0 23
        %1392 = vperm.xlu0 %1391, %v221
        %v1393 = vpop.permute.xlu0 %1392
        %v1395 = vmul.f32 %v1381, %v1371
        %v1396 = vmul.f32 %v1381, %v1372
        %v1397 = vmul.f32 %v1385, %v1373
        %v1398 = vmul.f32 %v1385, %v1374
        %v1399 = vmul.f32 %v1389, %v1375
        %v1400 = vmul.f32 %v1389, %v1376
        %v1401 = vmul.f32 %v1393, %v1377
        %v1402 = vmul.f32 %v1393, %v1378
        %v1403 = vadd.f32 %v1225, %v1395
        %v1404 = vadd.f32 %v1226, %v1396
        %v1405 = vadd.f32 %v1227, %v1397
        %v1406 = vadd.f32 %v1228, %v1398
        %v1407 = vadd.f32 %v1229, %v1399
        %v1408 = vadd.f32 %v1230, %v1400
        %v1409 = vadd.f32 %v1231, %v1401
        %v1410 = vadd.f32 %v1232, %v1402
        %1411 = vrot.lane.b32.xlu0 %v931, 112
        %v1412 = vpop.permute.xlu0 %1411
        %1413 = vrot.lane.b32.xlu0 %v933, 112
        %v1414 = vpop.permute.xlu0 %1413
        %1415 = vrot.lane.b32.xlu0 %v935, 112
        %v1416 = vpop.permute.xlu0 %1415
        %1417 = vrot.lane.b32.xlu0 %v937, 112
        %v1418 = vpop.permute.xlu0 %1417
        %1419 = vrot.lane.b32.xlu0 %v932, 112
        %v1420 = vpop.permute.xlu0 %1419
        %1421 = vrot.lane.b32.xlu0 %v934, 112
        %v1422 = vpop.permute.xlu0 %1421
        %1423 = vrot.lane.b32.xlu0 %v936, 112
        %v1424 = vpop.permute.xlu0 %1423
        %1425 = vrot.lane.b32.xlu0 %v938, 112
        %v1426 = vpop.permute.xlu0 %1425
        %vm1427 = vcmp.lt.s32.totalorder %v956, 112
        %v1428 = vsel %vm1427, %v1412, %v1420
        %v1429 = vsel %vm1427, %v1414, %v1422
        %v1430 = vsel %vm1427, %v1416, %v1424
        %v1431 = vsel %vm1427, %v1418, %v1426
        %v1432 = vsel %vm1427, %v1420, %v1412
        %v1433 = vsel %vm1427, %v1422, %v1414
        %v1434 = vsel %vm1427, %v1424, %v1416
        %v1435 = vsel %vm1427, %v1426, %v1418
        %v1436 = vlaneseq
        %v1437 = vshrl.u32 %v1436, 7
        %v1438 = vsub.s32 7, %v1437
        %v1439 = vrot.slane %v224, %v1438
        %v1440 = vlaneseq
        %v1441 = vshrl.u32 %v1440, 7
        %v1442 = vsub.s32 7, %v1441
        %v1443 = vrot.slane %v225, %v1442
        %v1444 = vmul.f32 %v1428, %v1439
        %v1445 = vmul.f32 %v1432, %v1443
        %v1446 = vmul.f32 %v1429, %v1439
        %v1447 = vmul.f32 %v1433, %v1443
        %v1448 = vmul.f32 %v1430, %v1439
        %v1449 = vmul.f32 %v1434, %v1443
        %v1450 = vmul.f32 %v1431, %v1439
        %v1451 = vmul.f32 %v1435, %v1443
        %1452 = vset.pattern.permute.xlu0 24
        %1453 = vperm.xlu0 %1452, %v218
        %v1454 = vpop.permute.xlu0 %1453
        %1456 = vset.pattern.permute.xlu0 24
        %1457 = vperm.xlu0 %1456, %v219
        %v1458 = vpop.permute.xlu0 %1457
        %1460 = vset.pattern.permute.xlu0 24
        %1461 = vperm.xlu0 %1460, %v220
        %v1462 = vpop.permute.xlu0 %1461
        %1464 = vset.pattern.permute.xlu0 24
        %1465 = vperm.xlu0 %1464, %v221
        %v1466 = vpop.permute.xlu0 %1465
        %v1468 = vmul.f32 %v1454, %v1444
        %v1469 = vmul.f32 %v1454, %v1445
        %v1470 = vmul.f32 %v1458, %v1446
        %v1471 = vmul.f32 %v1458, %v1447
        %v1472 = vmul.f32 %v1462, %v1448
        %v1473 = vmul.f32 %v1462, %v1449
        %v1474 = vmul.f32 %v1466, %v1450
        %v1475 = vmul.f32 %v1466, %v1451
        %v1476 = vadd.f32 %v1257, %v1468
        %v1477 = vadd.f32 %v1258, %v1469
        %v1478 = vadd.f32 %v1259, %v1470
        %v1479 = vadd.f32 %v1260, %v1471
        %v1480 = vadd.f32 %v1261, %v1472
        %v1481 = vadd.f32 %v1262, %v1473
        %v1482 = vadd.f32 %v1263, %v1474
        %v1483 = vadd.f32 %v1264, %v1475
        %1484 = vrot.lane.b32.xlu0 %v931, 111
        %v1485 = vpop.permute.xlu0 %1484
        %1486 = vrot.lane.b32.xlu0 %v933, 111
        %v1487 = vpop.permute.xlu0 %1486
        %1488 = vrot.lane.b32.xlu0 %v935, 111
        %v1489 = vpop.permute.xlu0 %1488
        %1490 = vrot.lane.b32.xlu0 %v937, 111
        %v1491 = vpop.permute.xlu0 %1490
        %1492 = vrot.lane.b32.xlu0 %v932, 111
        %v1493 = vpop.permute.xlu0 %1492
        %1494 = vrot.lane.b32.xlu0 %v934, 111
        %v1495 = vpop.permute.xlu0 %1494
        %1496 = vrot.lane.b32.xlu0 %v936, 111
        %v1497 = vpop.permute.xlu0 %1496
        %1498 = vrot.lane.b32.xlu0 %v938, 111
        %v1499 = vpop.permute.xlu0 %1498
        %vm1500 = vcmp.lt.s32.totalorder %v956, 111
        %v1501 = vsel %vm1500, %v1485, %v1493
        %v1502 = vsel %vm1500, %v1487, %v1495
        %v1503 = vsel %vm1500, %v1489, %v1497
        %v1504 = vsel %vm1500, %v1491, %v1499
        %v1505 = vsel %vm1500, %v1493, %v1485
        %v1506 = vsel %vm1500, %v1495, %v1487
        %v1507 = vsel %vm1500, %v1497, %v1489
        %v1508 = vsel %vm1500, %v1499, %v1491
        %v1509 = vlaneseq
        %v1510 = vshrl.u32 %v1509, 7
        %v1511 = vsub.s32 0, %v1510
        %v1512 = vrot.slane %v226, %v1511
        %v1513 = vlaneseq
        %v1514 = vshrl.u32 %v1513, 7
        %v1515 = vsub.s32 0, %v1514
        %v1516 = vrot.slane %v227, %v1515
        %v1517 = vmul.f32 %v1501, %v1512
        %v1518 = vmul.f32 %v1505, %v1516
        %v1519 = vmul.f32 %v1502, %v1512
        %v1520 = vmul.f32 %v1506, %v1516
        %v1521 = vmul.f32 %v1503, %v1512
        %v1522 = vmul.f32 %v1507, %v1516
        %v1523 = vmul.f32 %v1504, %v1512
        %v1524 = vmul.f32 %v1508, %v1516
        %1525 = vset.pattern.permute.xlu0 25
        %1526 = vperm.xlu0 %1525, %v218
        %v1527 = vpop.permute.xlu0 %1526
        %1529 = vset.pattern.permute.xlu0 25
        %1530 = vperm.xlu0 %1529, %v219
        %v1531 = vpop.permute.xlu0 %1530
        %1533 = vset.pattern.permute.xlu0 25
        %1534 = vperm.xlu0 %1533, %v220
        %v1535 = vpop.permute.xlu0 %1534
        %1537 = vset.pattern.permute.xlu0 25
        %1538 = vperm.xlu0 %1537, %v221
        %v1539 = vpop.permute.xlu0 %1538
        %v1541 = vmul.f32 %v1527, %v1517
        %v1542 = vmul.f32 %v1527, %v1518
        %v1543 = vmul.f32 %v1531, %v1519
        %v1544 = vmul.f32 %v1531, %v1520
        %v1545 = vmul.f32 %v1535, %v1521
        %v1546 = vmul.f32 %v1535, %v1522
        %v1547 = vmul.f32 %v1539, %v1523
        %v1548 = vmul.f32 %v1539, %v1524
        %v1549 = vadd.f32 %v1330, %v1541
        %v1550 = vadd.f32 %v1331, %v1542
        %v1551 = vadd.f32 %v1332, %v1543
        %v1552 = vadd.f32 %v1333, %v1544
        %v1553 = vadd.f32 %v1334, %v1545
        %v1554 = vadd.f32 %v1335, %v1546
        %v1555 = vadd.f32 %v1336, %v1547
        %v1556 = vadd.f32 %v1337, %v1548
        %v1557 = vadd.f32 %v1403, %v1476
        %v1558 = vadd.f32 %v1404, %v1477
        %v1559 = vadd.f32 %v1405, %v1478
        %v1560 = vadd.f32 %v1406, %v1479
        %v1561 = vadd.f32 %v1407, %v1480
        %v1562 = vadd.f32 %v1408, %v1481
        %v1563 = vadd.f32 %v1409, %v1482
        %v1564 = vadd.f32 %v1410, %v1483
        %1565 = vset.pattern.permute.xlu0 26
        %1566 = vperm.xlu0 %1565, %v218
        %v1567 = vpop.permute.xlu0 %1566
        %1569 = vset.pattern.permute.xlu0 26
        %1570 = vperm.xlu0 %1569, %v219
        %v1571 = vpop.permute.xlu0 %1570
        %1573 = vset.pattern.permute.xlu0 26
        %1574 = vperm.xlu0 %1573, %v220
        %v1575 = vpop.permute.xlu0 %1574
        %1577 = vset.pattern.permute.xlu0 26
        %1578 = vperm.xlu0 %1577, %v221
        %v1579 = vpop.permute.xlu0 %1578
        %v1581 = vadd.f32 %v1549, %v1567
        %v1582 = vadd.f32 %v1550, %v1567
        %v1583 = vadd.f32 %v1551, %v1571
        %v1584 = vadd.f32 %v1552, %v1571
        %v1585 = vadd.f32 %v1553, %v1575
        %v1586 = vadd.f32 %v1554, %v1575
        %v1587 = vadd.f32 %v1555, %v1579
        %v1588 = vadd.f32 %v1556, %v1579
        %v1589 = vadd.f32 %v1557, %v1581
        %v1590 = vadd.f32 %v1558, %v1582
        %v1591 = vadd.f32 %v1559, %v1583
        %v1592 = vadd.f32 %v1560, %v1584
        %v1593 = vadd.f32 %v1561, %v1585
        %v1594 = vadd.f32 %v1562, %v1586
        %v1595 = vadd.f32 %v1563, %v1587
        %v1596 = vadd.f32 %v1564, %v1588
        %v1597 = vadd.f32 %v1589, %v1590
        %1598 = vadd.xlane.f32.xlu0 %v1597
        %v1599 = vpop.xlane.xlu0 %1598
        %v1600 = vadd.f32 %v1591, %v1592
        %1601 = vadd.xlane.f32.xlu0 %v1600
        %v1602 = vpop.xlane.xlu0 %1601
        %v1603 = vadd.f32 %v1593, %v1594
        %1604 = vadd.xlane.f32.xlu0 %v1603
        %v1605 = vpop.xlane.xlu0 %1604
        %v1606 = vadd.f32 %v1595, %v1596
        %1607 = vadd.xlane.f32.xlu0 %v1606
        %v1608 = vpop.xlane.xlu0 %1607
        %v1609 = vrcp.pop 256.0
        %v1610 = vmul.f32 %v1599, %v1609
        %v1611 = vmul.f32 %v1602, %v1609
        %v1612 = vmul.f32 %v1605, %v1609
        %v1613 = vmul.f32 %v1608, %v1609
        %v1614 = vlaneseq
        %v1615 = vshrl.u32 %v1614, 7
        %v1616 = vsub.s32 0, %v1615
        %v1617 = vrot.slane %v1610, %v1616
        %v1618 = vmul.f32 %v222, %v1617
        %v1619 = vlaneseq
        %v1620 = vshrl.u32 %v1619, 7
        %v1621 = vsub.s32 1, %v1620
        %v1622 = vrot.slane %v1610, %v1621
        %v1623 = vmul.f32 %v222, %v1622
        %v1624 = vadd.f32 %v1623, 0.0
        %v1625 = vlaneseq
        %v1626 = vshrl.u32 %v1625, 7
        %v1627 = vsub.s32 2, %v1626
        %v1628 = vrot.slane %v1610, %v1627
        %v1629 = vmul.f32 %v222, %v1628
        %1631 = vrot.lane.b32.xlu0 %v1629, 126
        %v1632 = vpop.permute.xlu0 %1631
        %v1634 = vadd.f32 %v1618, %v1632
        %v1635 = vlaneseq
        %v1636 = vshrl.u32 %v1635, 7
        %v1637 = vsub.s32 3, %v1636
        %v1638 = vrot.slane %v1610, %v1637
        %v1639 = vmul.f32 %v222, %v1638
        %1641 = vrot.lane.b32.xlu0 %v1639, 126
        %v1642 = vpop.permute.xlu0 %1641
        %v1644 = vadd.f32 %v1624, %v1642
        %v1645 = vlaneseq
        %v1646 = vshrl.u32 %v1645, 7
        %v1647 = vsub.s32 4, %v1646
        %v1648 = vrot.slane %v1610, %v1647
        %v1649 = vmul.f32 %v222, %v1648
        %1651 = vrot.lane.b32.xlu0 %v1649, 124
        %v1652 = vpop.permute.xlu0 %1651
        %v1654 = vadd.f32 %v1634, %v1652
        %v1655 = vlaneseq
        %v1656 = vshrl.u32 %v1655, 7
        %v1657 = vsub.s32 5, %v1656
        %v1658 = vrot.slane %v1610, %v1657
        %v1659 = vmul.f32 %v222, %v1658
        %1661 = vrot.lane.b32.xlu0 %v1659, 124
        %v1662 = vpop.permute.xlu0 %1661
        %v1664 = vadd.f32 %v1644, %v1662
        %v1665 = vlaneseq
        %v1666 = vshrl.u32 %v1665, 7
        %v1667 = vsub.s32 6, %v1666
        %v1668 = vrot.slane %v1610, %v1667
        %v1669 = vmul.f32 %v222, %v1668
        %1671 = vrot.lane.b32.xlu0 %v1669, 122
        %v1672 = vpop.permute.xlu0 %1671
        %v1674 = vadd.f32 %v1654, %v1672
        %v1675 = vlaneseq
        %v1676 = vshrl.u32 %v1675, 7
        %v1677 = vsub.s32 7, %v1676
        %v1678 = vrot.slane %v1610, %v1677
        %v1679 = vmul.f32 %v222, %v1678
        %1681 = vrot.lane.b32.xlu0 %v1679, 122
        %v1682 = vpop.permute.xlu0 %1681
        %v1684 = vadd.f32 %v1664, %v1682
        %v1685 = vlaneseq
        %v1686 = vshrl.u32 %v1685, 7
        %v1687 = vsub.s32 0, %v1686
        %v1688 = vrot.slane %v1611, %v1687
        %v1689 = vmul.f32 %v222, %v1688
        %1691 = vrot.lane.b32.xlu0 %v1689, 120
        %v1692 = vpop.permute.xlu0 %1691
        %v1694 = vadd.f32 %v1674, %v1692
        %v1695 = vlaneseq
        %v1696 = vshrl.u32 %v1695, 7
        %v1697 = vsub.s32 1, %v1696
        %v1698 = vrot.slane %v1611, %v1697
        %v1699 = vmul.f32 %v222, %v1698
        %1701 = vrot.lane.b32.xlu0 %v1699, 120
        %v1702 = vpop.permute.xlu0 %1701
        %v1704 = vadd.f32 %v1684, %v1702
        %v1705 = vlaneseq
        %v1706 = vshrl.u32 %v1705, 7
        %v1707 = vsub.s32 2, %v1706
        %v1708 = vrot.slane %v1611, %v1707
        %v1709 = vmul.f32 %v222, %v1708
        %1711 = vrot.lane.b32.xlu0 %v1709, 118
        %v1712 = vpop.permute.xlu0 %1711
        %v1714 = vadd.f32 %v1694, %v1712
        %v1715 = vlaneseq
        %v1716 = vshrl.u32 %v1715, 7
        %v1717 = vsub.s32 3, %v1716
        %v1718 = vrot.slane %v1611, %v1717
        %v1719 = vmul.f32 %v222, %v1718
        %1721 = vrot.lane.b32.xlu0 %v1719, 118
        %v1722 = vpop.permute.xlu0 %1721
        %v1724 = vadd.f32 %v1704, %v1722
        %v1725 = vlaneseq
        %v1726 = vshrl.u32 %v1725, 7
        %v1727 = vsub.s32 4, %v1726
        %v1728 = vrot.slane %v1611, %v1727
        %v1729 = vmul.f32 %v222, %v1728
        %1731 = vrot.lane.b32.xlu0 %v1729, 116
        %v1732 = vpop.permute.xlu0 %1731
        %v1734 = vadd.f32 %v1714, %v1732
        %v1735 = vlaneseq
        %v1736 = vshrl.u32 %v1735, 7
        %v1737 = vsub.s32 5, %v1736
        %v1738 = vrot.slane %v1611, %v1737
        %v1739 = vmul.f32 %v222, %v1738
        %1741 = vrot.lane.b32.xlu0 %v1739, 116
        %v1742 = vpop.permute.xlu0 %1741
        %v1744 = vadd.f32 %v1724, %v1742
        %v1745 = vlaneseq
        %v1746 = vshrl.u32 %v1745, 7
        %v1747 = vsub.s32 6, %v1746
        %v1748 = vrot.slane %v1611, %v1747
        %v1749 = vmul.f32 %v222, %v1748
        %1751 = vrot.lane.b32.xlu0 %v1749, 114
        %v1752 = vpop.permute.xlu0 %1751
        %v1754 = vadd.f32 %v1734, %v1752
        %v1755 = vlaneseq
        %v1756 = vshrl.u32 %v1755, 7
        %v1757 = vsub.s32 7, %v1756
        %v1758 = vrot.slane %v1611, %v1757
        %v1759 = vmul.f32 %v222, %v1758
        %1761 = vrot.lane.b32.xlu0 %v1759, 114
        %v1762 = vpop.permute.xlu0 %1761
        %v1764 = vadd.f32 %v1744, %v1762
        %v1765 = vlaneseq
        %v1766 = vshrl.u32 %v1765, 7
        %v1767 = vsub.s32 0, %v1766
        %v1768 = vrot.slane %v1612, %v1767
        %v1769 = vmul.f32 %v222, %v1768
        %1771 = vrot.lane.b32.xlu0 %v1769, 112
        %v1772 = vpop.permute.xlu0 %1771
        %v1774 = vadd.f32 %v1754, %v1772
        %v1775 = vlaneseq
        %v1776 = vshrl.u32 %v1775, 7
        %v1777 = vsub.s32 1, %v1776
        %v1778 = vrot.slane %v1612, %v1777
        %v1779 = vmul.f32 %v222, %v1778
        %1781 = vrot.lane.b32.xlu0 %v1779, 112
        %v1782 = vpop.permute.xlu0 %1781
        %v1784 = vadd.f32 %v1764, %v1782
        %v1785 = vlaneseq
        %v1786 = vshrl.u32 %v1785, 7
        %v1787 = vsub.s32 2, %v1786
        %v1788 = vrot.slane %v1612, %v1787
        %v1789 = vmul.f32 %v222, %v1788
        %1791 = vrot.lane.b32.xlu0 %v1789, 110
        %v1792 = vpop.permute.xlu0 %1791
        %v1794 = vadd.f32 %v1774, %v1792
        %v1795 = vlaneseq
        %v1796 = vshrl.u32 %v1795, 7
        %v1797 = vsub.s32 3, %v1796
        %v1798 = vrot.slane %v1612, %v1797
        %v1799 = vmul.f32 %v222, %v1798
        %1801 = vrot.lane.b32.xlu0 %v1799, 110
        %v1802 = vpop.permute.xlu0 %1801
        %v1804 = vadd.f32 %v1784, %v1802
        %v1805 = vlaneseq
        %v1806 = vshrl.u32 %v1805, 7
        %v1807 = vsub.s32 4, %v1806
        %v1808 = vrot.slane %v1612, %v1807
        %v1809 = vmul.f32 %v222, %v1808
        %1811 = vrot.lane.b32.xlu0 %v1809, 108
        %v1812 = vpop.permute.xlu0 %1811
        %v1814 = vadd.f32 %v1794, %v1812
        %v1815 = vlaneseq
        %v1816 = vshrl.u32 %v1815, 7
        %v1817 = vsub.s32 5, %v1816
        %v1818 = vrot.slane %v1612, %v1817
        %v1819 = vmul.f32 %v222, %v1818
        %1821 = vrot.lane.b32.xlu0 %v1819, 108
        %v1822 = vpop.permute.xlu0 %1821
        %v1824 = vadd.f32 %v1804, %v1822
        %v1825 = vlaneseq
        %v1826 = vshrl.u32 %v1825, 7
        %v1827 = vsub.s32 6, %v1826
        %v1828 = vrot.slane %v1612, %v1827
        %v1829 = vmul.f32 %v222, %v1828
        %1831 = vrot.lane.b32.xlu0 %v1829, 106
        %v1832 = vpop.permute.xlu0 %1831
        %v1834 = vadd.f32 %v1814, %v1832
        %v1835 = vlaneseq
        %v1836 = vshrl.u32 %v1835, 7
        %v1837 = vsub.s32 7, %v1836
        %v1838 = vrot.slane %v1612, %v1837
        %v1839 = vmul.f32 %v222, %v1838
        %1841 = vrot.lane.b32.xlu0 %v1839, 106
        %v1842 = vpop.permute.xlu0 %1841
        %v1844 = vadd.f32 %v1824, %v1842
        %v1845 = vlaneseq
        %v1846 = vshrl.u32 %v1845, 7
        %v1847 = vsub.s32 0, %v1846
        %v1848 = vrot.slane %v1613, %v1847
        %v1849 = vmul.f32 %v222, %v1848
        %1851 = vrot.lane.b32.xlu0 %v1849, 104
        %v1852 = vpop.permute.xlu0 %1851
        %v1854 = vadd.f32 %v1834, %v1852
        %v1855 = vlaneseq
        %v1856 = vshrl.u32 %v1855, 7
        %v1857 = vsub.s32 1, %v1856
        %v1858 = vrot.slane %v1613, %v1857
        %v1859 = vmul.f32 %v222, %v1858
        %1861 = vrot.lane.b32.xlu0 %v1859, 104
        %v1862 = vpop.permute.xlu0 %1861
        %v1864 = vadd.f32 %v1844, %v1862
        %v1865 = vlaneseq
        %v1866 = vshrl.u32 %v1865, 7
        %v1867 = vsub.s32 2, %v1866
        %v1868 = vrot.slane %v1613, %v1867
        %v1869 = vmul.f32 %v222, %v1868
        %1871 = vrot.lane.b32.xlu0 %v1869, 102
        %v1872 = vpop.permute.xlu0 %1871
        %v1874 = vadd.f32 %v1854, %v1872
        %v1875 = vlaneseq
        %v1876 = vshrl.u32 %v1875, 7
        %v1877 = vsub.s32 3, %v1876
        %v1878 = vrot.slane %v1613, %v1877
        %v1879 = vmul.f32 %v222, %v1878
        %1881 = vrot.lane.b32.xlu0 %v1879, 102
        %v1882 = vpop.permute.xlu0 %1881
        %v1884 = vadd.f32 %v1864, %v1882
        %v1885 = vlaneseq
        %v1886 = vshrl.u32 %v1885, 7
        %v1887 = vsub.s32 4, %v1886
        %v1888 = vrot.slane %v1613, %v1887
        %v1889 = vmul.f32 %v222, %v1888
        %1891 = vrot.lane.b32.xlu0 %v1889, 100
        %v1892 = vpop.permute.xlu0 %1891
        %v1894 = vadd.f32 %v1874, %v1892
        %v1895 = vlaneseq
        %v1896 = vshrl.u32 %v1895, 7
        %v1897 = vsub.s32 5, %v1896
        %v1898 = vrot.slane %v1613, %v1897
        %v1899 = vmul.f32 %v222, %v1898
        %1901 = vrot.lane.b32.xlu0 %v1899, 100
        %v1902 = vpop.permute.xlu0 %1901
        %v1904 = vadd.f32 %v1884, %v1902
        %v1905 = vlaneseq
        %v1906 = vshrl.u32 %v1905, 7
        %v1907 = vsub.s32 6, %v1906
        %v1908 = vrot.slane %v1613, %v1907
        %v1909 = vmul.f32 %v222, %v1908
        %1911 = vrot.lane.b32.xlu0 %v1909, 98
        %v1912 = vpop.permute.xlu0 %1911
        %v1914 = vadd.f32 %v1894, %v1912
        %v1915 = vlaneseq
        %v1916 = vshrl.u32 %v1915, 7
        %v1917 = vsub.s32 7, %v1916
        %v1918 = vrot.slane %v1613, %v1917
        %v1919 = vmul.f32 %v222, %v1918
        %1921 = vrot.lane.b32.xlu0 %v1919, 98
        %v1922 = vpop.permute.xlu0 %1921
        %v1924 = vadd.f32 %v1904, %v1922
        %1926 = vrot.lane.b32.xlu0 %v1924, 127
        %v1927 = vpop.permute.xlu0 %1926
        %v1929 = vadd.f32 %v1914, %v1927
        %1931 = vrot.lane.b32.xlu0 %v222, 96
        %v1932 = vpop.permute.xlu0 %1931
        %v1934 = vadd.f32 %v1929, %v1932
        %v1935 = vmax.f32 %v1934, 0.0
        %v1936 = vlaneseq
        %v1937 = vshrl.u32 %v1936, 7
        %v1938 = vsub.s32 0, %v1937
        %v1939 = vrot.slane %v1935, %v1938
        %1941 = vrot.lane.b32.xlu0 %v1939, 33
        %v1942 = vpop.permute.xlu0 %1941
        %v1944 = vmul.f32 %v218, %v1942
        %v1945 = vmul.f32 %v219, %v1942
        %v1946 = vmul.f32 %v220, %v1942
        %v1947 = vmul.f32 %v221, %v1942
        %v1948 = vlaneseq
        %v1949 = vshrl.u32 %v1948, 7
        %v1950 = vsub.s32 1, %v1949
        %v1951 = vrot.slane %v1935, %v1950
        %1953 = vrot.lane.b32.xlu0 %v1951, 34
        %v1954 = vpop.permute.xlu0 %1953
        %v1956 = vmul.f32 %v218, %v1954
        %v1957 = vmul.f32 %v219, %v1954
        %v1958 = vmul.f32 %v220, %v1954
        %v1959 = vmul.f32 %v221, %v1954
        %v1960 = vadd.f32 %v1956, 0.0
        %v1961 = vadd.f32 %v1957, 0.0
        %v1962 = vadd.f32 %v1958, 0.0
        %v1963 = vadd.f32 %v1959, 0.0
        %v1964 = vlaneseq
        %v1965 = vshrl.u32 %v1964, 7
        %v1966 = vsub.s32 2, %v1965
        %v1967 = vrot.slane %v1935, %v1966
        %1969 = vrot.lane.b32.xlu0 %v1967, 35
        %v1970 = vpop.permute.xlu0 %1969
        %v1972 = vmul.f32 %v218, %v1970
        %v1973 = vmul.f32 %v219, %v1970
        %v1974 = vmul.f32 %v220, %v1970
        %v1975 = vmul.f32 %v221, %v1970
        %1980 = vrot.lane.b32.xlu0 %v1972, 126
        %v1981 = vpop.permute.xlu0 %1980
        %1982 = vrot.lane.b32.xlu0 %v1973, 126
        %v1983 = vpop.permute.xlu0 %1982
        %1984 = vrot.lane.b32.xlu0 %v1974, 126
        %v1985 = vpop.permute.xlu0 %1984
        %1986 = vrot.lane.b32.xlu0 %v1975, 126
        %v1987 = vpop.permute.xlu0 %1986
        %v1992 = vadd.f32 %v1944, %v1981
        %v1993 = vadd.f32 %v1945, %v1983
        %v1994 = vadd.f32 %v1946, %v1985
        %v1995 = vadd.f32 %v1947, %v1987
        %v1996 = vlaneseq
        %v1997 = vshrl.u32 %v1996, 7
        %v1998 = vsub.s32 3, %v1997
        %v1999 = vrot.slane %v1935, %v1998
        %2001 = vrot.lane.b32.xlu0 %v1999, 36
        %v2002 = vpop.permute.xlu0 %2001
        %v2004 = vmul.f32 %v218, %v2002
        %v2005 = vmul.f32 %v219, %v2002
        %v2006 = vmul.f32 %v220, %v2002
        %v2007 = vmul.f32 %v221, %v2002
        %2012 = vrot.lane.b32.xlu0 %v2004, 126
        %v2013 = vpop.permute.xlu0 %2012
        %2014 = vrot.lane.b32.xlu0 %v2005, 126
        %v2015 = vpop.permute.xlu0 %2014
        %2016 = vrot.lane.b32.xlu0 %v2006, 126
        %v2017 = vpop.permute.xlu0 %2016
        %2018 = vrot.lane.b32.xlu0 %v2007, 126
        %v2019 = vpop.permute.xlu0 %2018
        %v2024 = vadd.f32 %v1960, %v2013
        %v2025 = vadd.f32 %v1961, %v2015
        %v2026 = vadd.f32 %v1962, %v2017
        %v2027 = vadd.f32 %v1963, %v2019
        %v2028 = vlaneseq
        %v2029 = vshrl.u32 %v2028, 7
        %v2030 = vsub.s32 4, %v2029
        %v2031 = vrot.slane %v1935, %v2030
        %2033 = vrot.lane.b32.xlu0 %v2031, 37
        %v2034 = vpop.permute.xlu0 %2033
        %v2036 = vmul.f32 %v218, %v2034
        %v2037 = vmul.f32 %v219, %v2034
        %v2038 = vmul.f32 %v220, %v2034
        %v2039 = vmul.f32 %v221, %v2034
        %2044 = vrot.lane.b32.xlu0 %v2036, 124
        %v2045 = vpop.permute.xlu0 %2044
        %2046 = vrot.lane.b32.xlu0 %v2037, 124
        %v2047 = vpop.permute.xlu0 %2046
        %2048 = vrot.lane.b32.xlu0 %v2038, 124
        %v2049 = vpop.permute.xlu0 %2048
        %2050 = vrot.lane.b32.xlu0 %v2039, 124
        %v2051 = vpop.permute.xlu0 %2050
        %v2056 = vadd.f32 %v1992, %v2045
        %v2057 = vadd.f32 %v1993, %v2047
        %v2058 = vadd.f32 %v1994, %v2049
        %v2059 = vadd.f32 %v1995, %v2051
        %v2060 = vlaneseq
        %v2061 = vshrl.u32 %v2060, 7
        %v2062 = vsub.s32 5, %v2061
        %v2063 = vrot.slane %v1935, %v2062
        %2065 = vrot.lane.b32.xlu0 %v2063, 38
        %v2066 = vpop.permute.xlu0 %2065
        %v2068 = vmul.f32 %v218, %v2066
        %v2069 = vmul.f32 %v219, %v2066
        %v2070 = vmul.f32 %v220, %v2066
        %v2071 = vmul.f32 %v221, %v2066
        %2076 = vrot.lane.b32.xlu0 %v2068, 124
        %v2077 = vpop.permute.xlu0 %2076
        %2078 = vrot.lane.b32.xlu0 %v2069, 124
        %v2079 = vpop.permute.xlu0 %2078
        %2080 = vrot.lane.b32.xlu0 %v2070, 124
        %v2081 = vpop.permute.xlu0 %2080
        %2082 = vrot.lane.b32.xlu0 %v2071, 124
        %v2083 = vpop.permute.xlu0 %2082
        %v2088 = vadd.f32 %v2024, %v2077
        %v2089 = vadd.f32 %v2025, %v2079
        %v2090 = vadd.f32 %v2026, %v2081
        %v2091 = vadd.f32 %v2027, %v2083
        %v2092 = vlaneseq
        %v2093 = vshrl.u32 %v2092, 7
        %v2094 = vsub.s32 6, %v2093
        %v2095 = vrot.slane %v1935, %v2094
        %2097 = vrot.lane.b32.xlu0 %v2095, 39
        %v2098 = vpop.permute.xlu0 %2097
        %v2100 = vmul.f32 %v218, %v2098
        %v2101 = vmul.f32 %v219, %v2098
        %v2102 = vmul.f32 %v220, %v2098
        %v2103 = vmul.f32 %v221, %v2098
        %2108 = vrot.lane.b32.xlu0 %v2100, 122
        %v2109 = vpop.permute.xlu0 %2108
        %2110 = vrot.lane.b32.xlu0 %v2101, 122
        %v2111 = vpop.permute.xlu0 %2110
        %2112 = vrot.lane.b32.xlu0 %v2102, 122
        %v2113 = vpop.permute.xlu0 %2112
        %2114 = vrot.lane.b32.xlu0 %v2103, 122
        %v2115 = vpop.permute.xlu0 %2114
        %v2120 = vadd.f32 %v2056, %v2109
        %v2121 = vadd.f32 %v2057, %v2111
        %v2122 = vadd.f32 %v2058, %v2113
        %v2123 = vadd.f32 %v2059, %v2115
        %v2124 = vlaneseq
        %v2125 = vshrl.u32 %v2124, 7
        %v2126 = vsub.s32 7, %v2125
        %v2127 = vrot.slane %v1935, %v2126
        %2129 = vrot.lane.b32.xlu0 %v2127, 40
        %v2130 = vpop.permute.xlu0 %2129
        %v2132 = vmul.f32 %v218, %v2130
        %v2133 = vmul.f32 %v219, %v2130
        %v2134 = vmul.f32 %v220, %v2130
        %v2135 = vmul.f32 %v221, %v2130
        %2140 = vrot.lane.b32.xlu0 %v2132, 122
        %v2141 = vpop.permute.xlu0 %2140
        %2142 = vrot.lane.b32.xlu0 %v2133, 122
        %v2143 = vpop.permute.xlu0 %2142
        %2144 = vrot.lane.b32.xlu0 %v2134, 122
        %v2145 = vpop.permute.xlu0 %2144
        %2146 = vrot.lane.b32.xlu0 %v2135, 122
        %v2147 = vpop.permute.xlu0 %2146
        %v2152 = vadd.f32 %v2088, %v2141
        %v2153 = vadd.f32 %v2089, %v2143
        %v2154 = vadd.f32 %v2090, %v2145
        %v2155 = vadd.f32 %v2091, %v2147
        %2160 = vrot.lane.b32.xlu0 %v2152, 127
        %v2161 = vpop.permute.xlu0 %2160
        %2162 = vrot.lane.b32.xlu0 %v2153, 127
        %v2163 = vpop.permute.xlu0 %2162
        %2164 = vrot.lane.b32.xlu0 %v2154, 127
        %v2165 = vpop.permute.xlu0 %2164
        %2166 = vrot.lane.b32.xlu0 %v2155, 127
        %v2167 = vpop.permute.xlu0 %2166
        %v2172 = vadd.f32 %v2120, %v2161
        %v2173 = vadd.f32 %v2121, %v2163
        %v2174 = vadd.f32 %v2122, %v2165
        %v2175 = vadd.f32 %v2123, %v2167
        %2176 = vrot.lane.b32.xlu0 %v218, 120
        %v2177 = vpop.permute.xlu0 %2176
        %2178 = vrot.lane.b32.xlu0 %v219, 120
        %v2179 = vpop.permute.xlu0 %2178
        %2180 = vrot.lane.b32.xlu0 %v220, 120
        %v2181 = vpop.permute.xlu0 %2180
        %2182 = vrot.lane.b32.xlu0 %v221, 120
        %v2183 = vpop.permute.xlu0 %2182
        %v2188 = vadd.f32 %v2172, %v2177
        %v2189 = vadd.f32 %v2173, %v2179
        %v2190 = vadd.f32 %v2174, %v2181
        %v2191 = vadd.f32 %v2175, %v2183
        %v2192 = vadd.f32 %v2188, 3.0
        %v2193 = vadd.f32 %v2189, 3.0
        %v2194 = vadd.f32 %v2190, 3.0
        %v2195 = vadd.f32 %v2191, 3.0
        %v2196 = vmax.f32 %v2192, 0.0
        %v2197 = vmax.f32 %v2193, 0.0
        %v2198 = vmax.f32 %v2194, 0.0
        %v2199 = vmax.f32 %v2195, 0.0
        %v2200 = vmin.f32 %v2196, 6.0
        %v2201 = vmin.f32 %v2197, 6.0
        %v2202 = vmin.f32 %v2198, 6.0
        %v2203 = vmin.f32 %v2199, 6.0
        %v2204 = vmul.f32 %v2200, 0.16666667
        %v2205 = vmul.f32 %v2201, 0.16666667
        %v2206 = vmul.f32 %v2202, 0.16666667
        %v2207 = vmul.f32 %v2203, 0.16666667
        %2209 = vset.pattern.permute.xlu0 93
        %2210 = vperm.xlu0 %2209, %v2204
        %v2211 = vpop.permute.xlu0 %2210
        %2214 = vset.pattern.permute.xlu0 93
        %2215 = vperm.xlu0 %2214, %v2205
        %v2216 = vpop.permute.xlu0 %2215
        %2219 = vset.pattern.permute.xlu0 93
        %2220 = vperm.xlu0 %2219, %v2206
        %v2221 = vpop.permute.xlu0 %2220
        %2224 = vset.pattern.permute.xlu0 93
        %2225 = vperm.xlu0 %2224, %v2207
        %v2226 = vpop.permute.xlu0 %2225
        %v2228 = vmul.f32 %v1589, %v2211
        %v2229 = vmul.f32 %v1590, %v2211
        %v2230 = vmul.f32 %v1591, %v2216
        %v2231 = vmul.f32 %v1592, %v2216
        %v2232 = vmul.f32 %v1593, %v2221
        %v2233 = vmul.f32 %v1594, %v2221
        %v2234 = vmul.f32 %v1595, %v2226
        %v2235 = vmul.f32 %v1596, %v2226
        %v2236 = vadd.f32 %v2228, 3.0
        %v2237 = vadd.f32 %v2229, 3.0
        %v2238 = vadd.f32 %v2230, 3.0
        %v2239 = vadd.f32 %v2231, 3.0
        %v2240 = vadd.f32 %v2232, 3.0
        %v2241 = vadd.f32 %v2233, 3.0
        %v2242 = vadd.f32 %v2234, 3.0
        %v2243 = vadd.f32 %v2235, 3.0
        %v2244 = vmax.f32 %v2236, 0.0
        %v2245 = vmax.f32 %v2237, 0.0
        %v2246 = vmax.f32 %v2238, 0.0
        %v2247 = vmax.f32 %v2239, 0.0
        %v2248 = vmax.f32 %v2240, 0.0
        %v2249 = vmax.f32 %v2241, 0.0
        %v2250 = vmax.f32 %v2242, 0.0
        %v2251 = vmax.f32 %v2243, 0.0
        %v2252 = vmin.f32 %v2244, 6.0
        %v2253 = vmin.f32 %v2245, 6.0
        %v2254 = vmin.f32 %v2246, 6.0
        %v2255 = vmin.f32 %v2247, 6.0
        %v2256 = vmin.f32 %v2248, 6.0
        %v2257 = vmin.f32 %v2249, 6.0
        %v2258 = vmin.f32 %v2250, 6.0
        %v2259 = vmin.f32 %v2251, 6.0
        %v2260 = vmul.f32 %v2252, 0.16666667
        %v2261 = vmul.f32 %v2253, 0.16666667
        %v2262 = vmul.f32 %v2254, 0.16666667
        %v2263 = vmul.f32 %v2255, 0.16666667
        %v2264 = vmul.f32 %v2256, 0.16666667
        %v2265 = vmul.f32 %v2257, 0.16666667
        %v2266 = vmul.f32 %v2258, 0.16666667
        %v2267 = vmul.f32 %v2259, 0.16666667
        %v2268 = vmul.f32 %v2228, %v2260
        %v2269 = vmul.f32 %v2229, %v2261
        %v2270 = vmul.f32 %v2230, %v2262
        %v2271 = vmul.f32 %v2231, %v2263
        %v2272 = vmul.f32 %v2232, %v2264
        %v2273 = vmul.f32 %v2233, %v2265
        %v2274 = vmul.f32 %v2234, %v2266
        %v2275 = vmul.f32 %v2235, %v2267
        %2276 = vset.pattern.permute.xlu0 59
        %2277 = vperm.xlu0 %2276, %v222
        %v2278 = vpop.permute.xlu0 %2277
        %2281 = vset.pattern.permute.xlu0 59
        %2282 = vperm.xlu0 %2281, %v223
        %v2283 = vpop.permute.xlu0 %2282
        %2285 = vrot.lane.b32.xlu0 %v222, 101
        %v2286 = vpop.permute.xlu0 %2285
        %2287 = vrot.lane.b32.xlu0 %v223, 101
        %v2288 = vpop.permute.xlu0 %2287
        %vm2289 = vcmask 261120
        %v2290 = vsel %vm2289, %v2286, 0
        %v2292 = vsel %vm2289, %v2288, 0
        %2294 = vmatprep.subr.mxu0 0.0
        %2295 = vmatpush1.msra.mxu0 0.0
        %2296 = vmatprep.subr.mxu0 0.0
        %2297 = vmatpush1.msra.mxu0 0.0
        %2298 = vmatprep.subr.mxu0 0.0
        %2299 = vmatpush1.msra.mxu0 0.0
        %2300 = vmatprep.subr.mxu0 0.0
        %2301 = vmatpush1.msra.mxu0 0.0
        %2302 = vmatprep.subr.mxu0 0.0
        %2303 = vmatpush1.msra.mxu0 0.0
        %2304 = vmatprep.subr.mxu0 0.0
        %2305 = vmatpush1.msra.mxu0 0.0
        %2306 = vmatprep.subr.mxu0 0.0
        %2307 = vmatpush1.msra.mxu0 0.0
        %2308 = vmatprep.subr.mxu0 0.0
        %2309 = vmatpush1.msra.mxu0 0.0
        %2310 = vmatprep.subr.mxu0 0.0
        %2311 = vmatpush1.msra.mxu0 0.0
        %2312 = vmatprep.subr.mxu0 0.0
        %2313 = vmatpush1.msra.mxu0 0.0
        %2314 = vmatprep.subr.mxu0 0.0
        %2315 = vmatpush1.msra.mxu0 0.0
        %2316 = vmatprep.subr.mxu0 0.0
        %2317 = vmatpush1.msra.mxu0 0.0
        %v2318 = vand.u32 %v2275, 4294901760
        %2319 = vmatprep.subr.mxu0 %v2318
        %v2320 = vand.u32 %v2274, 4294901760
        %2321 = vmatpush1.msra.mxu0 %v2320
        %v2322 = vand.u32 %v2273, 4294901760
        %2323 = vmatprep.subr.mxu0 %v2322
        %v2324 = vand.u32 %v2272, 4294901760
        %2325 = vmatpush1.msra.mxu0 %v2324
        %v2326 = vand.u32 %v2271, 4294901760
        %2327 = vmatprep.subr.mxu0 %v2326
        %v2328 = vand.u32 %v2270, 4294901760
        %2329 = vmatpush1.msra.mxu0 %v2328
        %v2330 = vand.u32 %v2269, 4294901760
        %2331 = vmatprep.subr.mxu0 %v2330
        %v2332 = vand.u32 %v2268, 4294901760
        %2333 = vmatpush1.msra.mxu0 %v2332
        %2334 = vmatprep.subr.mxu0 0.0
        %2335 = vmatpush2.msra.mxu0 0.0
        %2336 = vmatprep.subr.mxu0 0.0
        %2337 = vmatpush2.msra.mxu0 0.0
        %2338 = vmatprep.subr.mxu0 0.0
        %2339 = vmatpush2.msra.mxu0 0.0
        %2340 = vmatprep.subr.mxu0 0.0
        %2341 = vmatpush2.msra.mxu0 0.0
        %2342 = vmatprep.subr.mxu0 0.0
        %2343 = vmatpush2.msra.mxu0 0.0
        %2344 = vmatprep.subr.mxu0 0.0
        %2345 = vmatpush2.msra.mxu0 0.0
        %2346 = vmatprep.subr.mxu0 0.0
        %2347 = vmatpush2.msra.mxu0 0.0
        %2348 = vmatprep.subr.mxu0 0.0
        %2349 = vmatpush2.msra.mxu0 0.0
        %2350 = vmatprep.subr.mxu0 0.0
        %2351 = vmatpush2.msra.mxu0 0.0
        %2352 = vmatprep.subr.mxu0 0.0
        %2353 = vmatpush2.msra.mxu0 0.0
        %2354 = vmatprep.subr.mxu0 0.0
        %2355 = vmatpush2.msra.mxu0 0.0
        %2356 = vmatprep.subr.mxu0 0.0
        %2357 = vmatpush2.msra.mxu0 0.0
        %2358 = vmatprep.subr.mxu0 0.0
        %2359 = vmatpush2.msra.mxu0 0.0
        %2360 = vmatprep.subr.mxu0 0.0
        %2361 = vmatpush2.msra.mxu0 0.0
        %2362 = vmatprep.subr.mxu0 0.0
        %2363 = vmatpush2.msra.mxu0 0.0
        %2364 = vmatprep.subr.mxu0 0.0
        %2365 = vmatpush2.msra.mxu0 0.0
        %2366 = vmatprep.mubr.f32.mxu0 0.0
        %v2367 = vand.u32 %v2290, 4294901760
        %v2368 = vsub.f32 %v2290, %v2367
        %v2369 = vand.u32 %v2368, 4294901760
        %v2370 = vsub.f32 %v2368, %v2369
        %v2371 = vand.u32 %v2370, 4294901760
        %2372 = vmatmul.mubr.f32.gmra.mxu0 %v2371
        %v2373 = vpop.f32.mrf.mxu0
        %v2374 = vadd.f32 %v2278, %v2373
        %v2375 = vpop.f32.mrf.mxu0
        %v2376 = vadd.f32 %v2278, %v2375
        %2377 = vmatprep.mubr.f32.mxu0 0.0
        %v2378 = vand.u32 %v2292, 4294901760
        %v2379 = vsub.f32 %v2292, %v2378
        %v2380 = vand.u32 %v2379, 4294901760
        %v2381 = vsub.f32 %v2379, %v2380
        %v2382 = vand.u32 %v2381, 4294901760
        %2383 = vmatmul.mubr.f32.gmra.mxu0 %v2382
        %v2384 = vpop.f32.mrf.mxu0
        %v2385 = vadd.f32 %v2283, %v2384
        %v2386 = vpop.f32.mrf.mxu0
        %v2387 = vadd.f32 %v2283, %v2386
        %2388 = vdwg.mxu0
        %2389 = vmatprep.subr.mxu0 0.0
        %2390 = vmatpush1.msra.mxu0 0.0
        %2391 = vmatprep.subr.mxu0 0.0
        %2392 = vmatpush1.msra.mxu0 0.0
        %2393 = vmatprep.subr.mxu0 0.0
        %2394 = vmatpush1.msra.mxu0 0.0
        %2395 = vmatprep.subr.mxu0 0.0
        %2396 = vmatpush1.msra.mxu0 0.0
        %2397 = vmatprep.subr.mxu0 0.0
        %2398 = vmatpush1.msra.mxu0 0.0
        %2399 = vmatprep.subr.mxu0 0.0
        %2400 = vmatpush1.msra.mxu0 0.0
        %2401 = vmatprep.subr.mxu0 0.0
        %2402 = vmatpush1.msra.mxu0 0.0
        %2403 = vmatprep.subr.mxu0 0.0
        %2404 = vmatpush1.msra.mxu0 0.0
        %2405 = vmatprep.subr.mxu0 0.0
        %2406 = vmatpush1.msra.mxu0 0.0
        %2407 = vmatprep.subr.mxu0 0.0
        %2408 = vmatpush1.msra.mxu0 0.0
        %2409 = vmatprep.subr.mxu0 0.0
        %2410 = vmatpush1.msra.mxu0 0.0
        %2411 = vmatprep.subr.mxu0 0.0
        %2412 = vmatpush1.msra.mxu0 0.0
        %v2413 = vand.u32 %v2275, 4294901760
        %v2414 = vsub.f32 %v2275, %v2413
        %v2415 = vand.u32 %v2414, 4294901760
        %v2416 = vsub.f32 %v2414, %v2415
        %v2417 = vand.u32 %v2416, 4294901760
        %2418 = vmatprep.subr.mxu0 %v2417
        %v2419 = vand.u32 %v2274, 4294901760
        %v2420 = vsub.f32 %v2274, %v2419
        %v2421 = vand.u32 %v2420, 4294901760
        %v2422 = vsub.f32 %v2420, %v2421
        %v2423 = vand.u32 %v2422, 4294901760
        %2424 = vmatpush1.msra.mxu0 %v2423
        %v2425 = vand.u32 %v2273, 4294901760
        %v2426 = vsub.f32 %v2273, %v2425
        %v2427 = vand.u32 %v2426, 4294901760
        %v2428 = vsub.f32 %v2426, %v2427
        %v2429 = vand.u32 %v2428, 4294901760
        %2430 = vmatprep.subr.mxu0 %v2429
        %v2431 = vand.u32 %v2272, 4294901760
        %v2432 = vsub.f32 %v2272, %v2431
        %v2433 = vand.u32 %v2432, 4294901760
        %v2434 = vsub.f32 %v2432, %v2433
        %v2435 = vand.u32 %v2434, 4294901760
        %2436 = vmatpush1.msra.mxu0 %v2435
        %v2437 = vand.u32 %v2271, 4294901760
        %v2438 = vsub.f32 %v2271, %v2437
        %v2439 = vand.u32 %v2438, 4294901760
        %v2440 = vsub.f32 %v2438, %v2439
        %v2441 = vand.u32 %v2440, 4294901760
        %2442 = vmatprep.subr.mxu0 %v2441
        %v2443 = vand.u32 %v2270, 4294901760
        %v2444 = vsub.f32 %v2270, %v2443
        %v2445 = vand.u32 %v2444, 4294901760
        %v2446 = vsub.f32 %v2444, %v2445
        %v2447 = vand.u32 %v2446, 4294901760
        %2448 = vmatpush1.msra.mxu0 %v2447
        %v2449 = vand.u32 %v2269, 4294901760
        %v2450 = vsub.f32 %v2269, %v2449
        %v2451 = vand.u32 %v2450, 4294901760
        %v2452 = vsub.f32 %v2450, %v2451
        %v2453 = vand.u32 %v2452, 4294901760
        %2454 = vmatprep.subr.mxu0 %v2453
        %v2455 = vand.u32 %v2268, 4294901760
        %v2456 = vsub.f32 %v2268, %v2455
        %v2457 = vand.u32 %v2456, 4294901760
        %v2458 = vsub.f32 %v2456, %v2457
        %v2459 = vand.u32 %v2458, 4294901760
        %2460 = vmatpush1.msra.mxu0 %v2459
        %2461 = vmatprep.subr.mxu0 0.0
        %2462 = vmatpush2.msra.mxu0 0.0
        %2463 = vmatprep.subr.mxu0 0.0
        %2464 = vmatpush2.msra.mxu0 0.0
        %2465 = vmatprep.subr.mxu0 0.0
        %2466 = vmatpush2.msra.mxu0 0.0
        %2467 = vmatprep.subr.mxu0 0.0
        %2468 = vmatpush2.msra.mxu0 0.0
        %2469 = vmatprep.subr.mxu0 0.0
        %2470 = vmatpush2.msra.mxu0 0.0
        %2471 = vmatprep.subr.mxu0 0.0
        %2472 = vmatpush2.msra.mxu0 0.0
        %2473 = vmatprep.subr.mxu0 0.0
        %2474 = vmatpush2.msra.mxu0 0.0
        %2475 = vmatprep.subr.mxu0 0.0
        %2476 = vmatpush2.msra.mxu0 0.0
        %2477 = vmatprep.subr.mxu0 0.0
        %2478 = vmatpush2.msra.mxu0 0.0
        %2479 = vmatprep.subr.mxu0 0.0
        %2480 = vmatpush2.msra.mxu0 0.0
        %2481 = vmatprep.subr.mxu0 0.0
        %2482 = vmatpush2.msra.mxu0 0.0
        %2483 = vmatprep.subr.mxu0 0.0
        %2484 = vmatpush2.msra.mxu0 0.0
        %2485 = vmatprep.subr.mxu0 0.0
        %2486 = vmatpush2.msra.mxu0 0.0
        %2487 = vmatprep.subr.mxu0 0.0
        %2488 = vmatpush2.msra.mxu0 0.0
        %2489 = vmatprep.subr.mxu0 0.0
        %2490 = vmatpush2.msra.mxu0 0.0
        %2491 = vmatprep.subr.mxu0 0.0
        %2492 = vmatpush2.msra.mxu0 0.0
        %2493 = vmatprep.mubr.f32.mxu0 0.0
        %v2494 = vand.u32 %v2290, 4294901760
        %2495 = vmatmul.mubr.f32.gmra.mxu0 %v2494
        %v2496 = vpop.f32.mrf.mxu0
        %v2497 = vadd.f32 %v2374, %v2496
        %v2498 = vpop.f32.mrf.mxu0
        %v2499 = vadd.f32 %v2376, %v2498
        %2500 = vmatprep.mubr.f32.mxu0 0.0
        %v2501 = vand.u32 %v2292, 4294901760
        %2502 = vmatmul.mubr.f32.gmra.mxu0 %v2501
        %v2503 = vpop.f32.mrf.mxu0
        %v2504 = vadd.f32 %v2385, %v2503
        %v2505 = vpop.f32.mrf.mxu0
        %v2506 = vadd.f32 %v2387, %v2505
        %2507 = vdwg.mxu0
        %2508 = vmatprep.subr.mxu0 0.0
        %2509 = vmatpush1.msra.mxu0 0.0
        %2510 = vmatprep.subr.mxu0 0.0
        %2511 = vmatpush1.msra.mxu0 0.0
        %2512 = vmatprep.subr.mxu0 0.0
        %2513 = vmatpush1.msra.mxu0 0.0
        %2514 = vmatprep.subr.mxu0 0.0
        %2515 = vmatpush1.msra.mxu0 0.0
        %2516 = vmatprep.subr.mxu0 0.0
        %2517 = vmatpush1.msra.mxu0 0.0
        %2518 = vmatprep.subr.mxu0 0.0
        %2519 = vmatpush1.msra.mxu0 0.0
        %2520 = vmatprep.subr.mxu0 0.0
        %2521 = vmatpush1.msra.mxu0 0.0
        %2522 = vmatprep.subr.mxu0 0.0
        %2523 = vmatpush1.msra.mxu0 0.0
        %2524 = vmatprep.subr.mxu0 0.0
        %2525 = vmatpush1.msra.mxu0 0.0
        %2526 = vmatprep.subr.mxu0 0.0
        %2527 = vmatpush1.msra.mxu0 0.0
        %2528 = vmatprep.subr.mxu0 0.0
        %2529 = vmatpush1.msra.mxu0 0.0
        %2530 = vmatprep.subr.mxu0 0.0
        %2531 = vmatpush1.msra.mxu0 0.0
        %v2532 = vand.u32 %v2275, 4294901760
        %v2533 = vsub.f32 %v2275, %v2532
        %2534 = vmatprep.subr.mxu0 %v2533
        %v2535 = vand.u32 %v2274, 4294901760
        %v2536 = vsub.f32 %v2274, %v2535
        %2537 = vmatpush1.msra.mxu0 %v2536
        %v2538 = vand.u32 %v2273, 4294901760
        %v2539 = vsub.f32 %v2273, %v2538
        %2540 = vmatprep.subr.mxu0 %v2539
        %v2541 = vand.u32 %v2272, 4294901760
        %v2542 = vsub.f32 %v2272, %v2541
        %2543 = vmatpush1.msra.mxu0 %v2542
        %v2544 = vand.u32 %v2271, 4294901760
        %v2545 = vsub.f32 %v2271, %v2544
        %2546 = vmatprep.subr.mxu0 %v2545
        %v2547 = vand.u32 %v2270, 4294901760
        %v2548 = vsub.f32 %v2270, %v2547
        %2549 = vmatpush1.msra.mxu0 %v2548
        %v2550 = vand.u32 %v2269, 4294901760
        %v2551 = vsub.f32 %v2269, %v2550
        %2552 = vmatprep.subr.mxu0 %v2551
        %v2553 = vand.u32 %v2268, 4294901760
        %v2554 = vsub.f32 %v2268, %v2553
        %2555 = vmatpush1.msra.mxu0 %v2554
        %2556 = vmatprep.subr.mxu0 0.0
        %2557 = vmatpush2.msra.mxu0 0.0
        %2558 = vmatprep.subr.mxu0 0.0
        %2559 = vmatpush2.msra.mxu0 0.0
        %2560 = vmatprep.subr.mxu0 0.0
        %2561 = vmatpush2.msra.mxu0 0.0
        %2562 = vmatprep.subr.mxu0 0.0
        %2563 = vmatpush2.msra.mxu0 0.0
        %2564 = vmatprep.subr.mxu0 0.0
        %2565 = vmatpush2.msra.mxu0 0.0
        %2566 = vmatprep.subr.mxu0 0.0
        %2567 = vmatpush2.msra.mxu0 0.0
        %2568 = vmatprep.subr.mxu0 0.0
        %2569 = vmatpush2.msra.mxu0 0.0
        %2570 = vmatprep.subr.mxu0 0.0
        %2571 = vmatpush2.msra.mxu0 0.0
        %2572 = vmatprep.subr.mxu0 0.0
        %2573 = vmatpush2.msra.mxu0 0.0
        %2574 = vmatprep.subr.mxu0 0.0
        %2575 = vmatpush2.msra.mxu0 0.0
        %2576 = vmatprep.subr.mxu0 0.0
        %2577 = vmatpush2.msra.mxu0 0.0
        %2578 = vmatprep.subr.mxu0 0.0
        %2579 = vmatpush2.msra.mxu0 0.0
        %2580 = vmatprep.subr.mxu0 0.0
        %2581 = vmatpush2.msra.mxu0 0.0
        %2582 = vmatprep.subr.mxu0 0.0
        %2583 = vmatpush2.msra.mxu0 0.0
        %2584 = vmatprep.subr.mxu0 0.0
        %2585 = vmatpush2.msra.mxu0 0.0
        %2586 = vmatprep.subr.mxu0 0.0
        %2587 = vmatpush2.msra.mxu0 0.0
        %2588 = vmatprep.mubr.f32.mxu0 0.0
        %v2589 = vand.u32 %v2290, 4294901760
        %v2590 = vsub.f32 %v2290, %v2589
        %2591 = vmatmul.mubr.f32.gmra.mxu0 %v2590
        %v2592 = vpop.f32.mrf.mxu0
        %v2593 = vadd.f32 %v2497, %v2592
        %v2594 = vpop.f32.mrf.mxu0
        %v2595 = vadd.f32 %v2499, %v2594
        %2596 = vmatprep.mubr.f32.mxu0 0.0
        %v2597 = vand.u32 %v2292, 4294901760
        %v2598 = vsub.f32 %v2292, %v2597
        %2599 = vmatmul.mubr.f32.gmra.mxu0 %v2598
        %v2600 = vpop.f32.mrf.mxu0
        %v2601 = vadd.f32 %v2504, %v2600
        %v2602 = vpop.f32.mrf.mxu0
        %v2603 = vadd.f32 %v2506, %v2602
        %2604 = vdwg.mxu0
        %2605 = vmatprep.subr.mxu0 0.0
        %2606 = vmatpush1.msra.mxu0 0.0
        %2607 = vmatprep.subr.mxu0 0.0
        %2608 = vmatpush1.msra.mxu0 0.0
        %2609 = vmatprep.subr.mxu0 0.0
        %2610 = vmatpush1.msra.mxu0 0.0
        %2611 = vmatprep.subr.mxu0 0.0
        %2612 = vmatpush1.msra.mxu0 0.0
        %2613 = vmatprep.subr.mxu0 0.0
        %2614 = vmatpush1.msra.mxu0 0.0
        %2615 = vmatprep.subr.mxu0 0.0
        %2616 = vmatpush1.msra.mxu0 0.0
        %2617 = vmatprep.subr.mxu0 0.0
        %2618 = vmatpush1.msra.mxu0 0.0
        %2619 = vmatprep.subr.mxu0 0.0
        %2620 = vmatpush1.msra.mxu0 0.0
        %2621 = vmatprep.subr.mxu0 0.0
        %2622 = vmatpush1.msra.mxu0 0.0
        %2623 = vmatprep.subr.mxu0 0.0
        %2624 = vmatpush1.msra.mxu0 0.0
        %2625 = vmatprep.subr.mxu0 0.0
        %2626 = vmatpush1.msra.mxu0 0.0
        %2627 = vmatprep.subr.mxu0 0.0
        %2628 = vmatpush1.msra.mxu0 0.0
        %v2629 = vand.u32 %v2275, 4294901760
        %2630 = vmatprep.subr.mxu0 %v2629
        %v2631 = vand.u32 %v2274, 4294901760
        %2632 = vmatpush1.msra.mxu0 %v2631
        %v2633 = vand.u32 %v2273, 4294901760
        %2634 = vmatprep.subr.mxu0 %v2633
        %v2635 = vand.u32 %v2272, 4294901760
        %2636 = vmatpush1.msra.mxu0 %v2635
        %v2637 = vand.u32 %v2271, 4294901760
        %2638 = vmatprep.subr.mxu0 %v2637
        %v2639 = vand.u32 %v2270, 4294901760
        %2640 = vmatpush1.msra.mxu0 %v2639
        %v2641 = vand.u32 %v2269, 4294901760
        %2642 = vmatprep.subr.mxu0 %v2641
        %v2643 = vand.u32 %v2268, 4294901760
        %2644 = vmatpush1.msra.mxu0 %v2643
        %2645 = vmatprep.subr.mxu0 0.0
        %2646 = vmatpush2.msra.mxu0 0.0
        %2647 = vmatprep.subr.mxu0 0.0
        %2648 = vmatpush2.msra.mxu0 0.0
        %2649 = vmatprep.subr.mxu0 0.0
        %2650 = vmatpush2.msra.mxu0 0.0
        %2651 = vmatprep.subr.mxu0 0.0
        %2652 = vmatpush2.msra.mxu0 0.0
        %2653 = vmatprep.subr.mxu0 0.0
        %2654 = vmatpush2.msra.mxu0 0.0
        %2655 = vmatprep.subr.mxu0 0.0
        %2656 = vmatpush2.msra.mxu0 0.0
        %2657 = vmatprep.subr.mxu0 0.0
        %2658 = vmatpush2.msra.mxu0 0.0
        %2659 = vmatprep.subr.mxu0 0.0
        %2660 = vmatpush2.msra.mxu0 0.0
        %2661 = vmatprep.subr.mxu0 0.0
        %2662 = vmatpush2.msra.mxu0 0.0
        %2663 = vmatprep.subr.mxu0 0.0
        %2664 = vmatpush2.msra.mxu0 0.0
        %2665 = vmatprep.subr.mxu0 0.0
        %2666 = vmatpush2.msra.mxu0 0.0
        %2667 = vmatprep.subr.mxu0 0.0
        %2668 = vmatpush2.msra.mxu0 0.0
        %2669 = vmatprep.subr.mxu0 0.0
        %2670 = vmatpush2.msra.mxu0 0.0
        %2671 = vmatprep.subr.mxu0 0.0
        %2672 = vmatpush2.msra.mxu0 0.0
        %2673 = vmatprep.subr.mxu0 0.0
        %2674 = vmatpush2.msra.mxu0 0.0
        %2675 = vmatprep.subr.mxu0 0.0
        %2676 = vmatpush2.msra.mxu0 0.0
        %2677 = vmatprep.mubr.f32.mxu0 0.0
        %v2678 = vand.u32 %v2290, 4294901760
        %v2679 = vsub.f32 %v2290, %v2678
        %v2680 = vand.u32 %v2679, 4294901760
        %2681 = vmatmul.mubr.f32.gmra.mxu0 %v2680
        %v2682 = vpop.f32.mrf.mxu0
        %v2683 = vadd.f32 %v2593, %v2682
        %v2684 = vpop.f32.mrf.mxu0
        %v2685 = vadd.f32 %v2595, %v2684
        %2686 = vmatprep.mubr.f32.mxu0 0.0
        %v2687 = vand.u32 %v2292, 4294901760
        %v2688 = vsub.f32 %v2292, %v2687
        %v2689 = vand.u32 %v2688, 4294901760
        %2690 = vmatmul.mubr.f32.gmra.mxu0 %v2689
        %v2691 = vpop.f32.mrf.mxu0
        %v2692 = vadd.f32 %v2601, %v2691
        %v2693 = vpop.f32.mrf.mxu0
        %v2694 = vadd.f32 %v2603, %v2693
        %2695 = vdwg.mxu0
        %2696 = vmatprep.subr.mxu0 0.0
        %2697 = vmatpush1.msra.mxu0 0.0
        %2698 = vmatprep.subr.mxu0 0.0
        %2699 = vmatpush1.msra.mxu0 0.0
        %2700 = vmatprep.subr.mxu0 0.0
        %2701 = vmatpush1.msra.mxu0 0.0
        %2702 = vmatprep.subr.mxu0 0.0
        %2703 = vmatpush1.msra.mxu0 0.0
        %2704 = vmatprep.subr.mxu0 0.0
        %2705 = vmatpush1.msra.mxu0 0.0
        %2706 = vmatprep.subr.mxu0 0.0
        %2707 = vmatpush1.msra.mxu0 0.0
        %2708 = vmatprep.subr.mxu0 0.0
        %2709 = vmatpush1.msra.mxu0 0.0
        %2710 = vmatprep.subr.mxu0 0.0
        %2711 = vmatpush1.msra.mxu0 0.0
        %2712 = vmatprep.subr.mxu0 0.0
        %2713 = vmatpush1.msra.mxu0 0.0
        %2714 = vmatprep.subr.mxu0 0.0
        %2715 = vmatpush1.msra.mxu0 0.0
        %2716 = vmatprep.subr.mxu0 0.0
        %2717 = vmatpush1.msra.mxu0 0.0
        %2718 = vmatprep.subr.mxu0 0.0
        %2719 = vmatpush1.msra.mxu0 0.0
        %v2720 = vand.u32 %v2275, 4294901760
        %v2721 = vsub.f32 %v2275, %v2720
        %v2722 = vand.u32 %v2721, 4294901760
        %2723 = vmatprep.subr.mxu0 %v2722
        %v2724 = vand.u32 %v2274, 4294901760
        %v2725 = vsub.f32 %v2274, %v2724
        %v2726 = vand.u32 %v2725, 4294901760
        %2727 = vmatpush1.msra.mxu0 %v2726
        %v2728 = vand.u32 %v2273, 4294901760
        %v2729 = vsub.f32 %v2273, %v2728
        %v2730 = vand.u32 %v2729, 4294901760
        %2731 = vmatprep.subr.mxu0 %v2730
        %v2732 = vand.u32 %v2272, 4294901760
        %v2733 = vsub.f32 %v2272, %v2732
        %v2734 = vand.u32 %v2733, 4294901760
        %2735 = vmatpush1.msra.mxu0 %v2734
        %v2736 = vand.u32 %v2271, 4294901760
        %v2737 = vsub.f32 %v2271, %v2736
        %v2738 = vand.u32 %v2737, 4294901760
        %2739 = vmatprep.subr.mxu0 %v2738
        %v2740 = vand.u32 %v2270, 4294901760
        %v2741 = vsub.f32 %v2270, %v2740
        %v2742 = vand.u32 %v2741, 4294901760
        %2743 = vmatpush1.msra.mxu0 %v2742
        %v2744 = vand.u32 %v2269, 4294901760
        %v2745 = vsub.f32 %v2269, %v2744
        %v2746 = vand.u32 %v2745, 4294901760
        %2747 = vmatprep.subr.mxu0 %v2746
        %v2748 = vand.u32 %v2268, 4294901760
        %v2749 = vsub.f32 %v2268, %v2748
        %v2750 = vand.u32 %v2749, 4294901760
        %2751 = vmatpush1.msra.mxu0 %v2750
        %2752 = vmatprep.subr.mxu0 0.0
        %2753 = vmatpush2.msra.mxu0 0.0
        %2754 = vmatprep.subr.mxu0 0.0
        %2755 = vmatpush2.msra.mxu0 0.0
        %2756 = vmatprep.subr.mxu0 0.0
        %2757 = vmatpush2.msra.mxu0 0.0
        %2758 = vmatprep.subr.mxu0 0.0
        %2759 = vmatpush2.msra.mxu0 0.0
        %2760 = vmatprep.subr.mxu0 0.0
        %2761 = vmatpush2.msra.mxu0 0.0
        %2762 = vmatprep.subr.mxu0 0.0
        %2763 = vmatpush2.msra.mxu0 0.0
        %2764 = vmatprep.subr.mxu0 0.0
        %2765 = vmatpush2.msra.mxu0 0.0
        %2766 = vmatprep.subr.mxu0 0.0
        %2767 = vmatpush2.msra.mxu0 0.0
        %2768 = vmatprep.subr.mxu0 0.0
        %2769 = vmatpush2.msra.mxu0 0.0
        %2770 = vmatprep.subr.mxu0 0.0
        %2771 = vmatpush2.msra.mxu0 0.0
        %2772 = vmatprep.subr.mxu0 0.0
        %2773 = vmatpush2.msra.mxu0 0.0
        %2774 = vmatprep.subr.mxu0 0.0
        %2775 = vmatpush2.msra.mxu0 0.0
        %2776 = vmatprep.subr.mxu0 0.0
        %2777 = vmatpush2.msra.mxu0 0.0
        %2778 = vmatprep.subr.mxu0 0.0
        %2779 = vmatpush2.msra.mxu0 0.0
        %2780 = vmatprep.subr.mxu0 0.0
        %2781 = vmatpush2.msra.mxu0 0.0
        %2782 = vmatprep.subr.mxu0 0.0
        %2783 = vmatpush2.msra.mxu0 0.0
        %2784 = vmatprep.mubr.f32.mxu0 0.0
        %v2785 = vand.u32 %v2290, 4294901760
        %2786 = vmatmul.mubr.f32.gmra.mxu0 %v2785
        %v2787 = vpop.f32.mrf.mxu0
        %v2788 = vadd.f32 %v2683, %v2787
        %v2789 = vpop.f32.mrf.mxu0
        %v2790 = vadd.f32 %v2685, %v2789
        %2791 = vmatprep.mubr.f32.mxu0 0.0
        %v2792 = vand.u32 %v2292, 4294901760
        %2793 = vmatmul.mubr.f32.gmra.mxu0 %v2792
        %v2794 = vpop.f32.mrf.mxu0
        %v2795 = vadd.f32 %v2692, %v2794
        %v2796 = vpop.f32.mrf.mxu0
        %v2797 = vadd.f32 %v2694, %v2796
        %2798 = vdwg.mxu0
        %2799 = vmatprep.subr.mxu0 0.0
        %2800 = vmatpush1.msra.mxu0 0.0
        %2801 = vmatprep.subr.mxu0 0.0
        %2802 = vmatpush1.msra.mxu0 0.0
        %2803 = vmatprep.subr.mxu0 0.0
        %2804 = vmatpush1.msra.mxu0 0.0
        %2805 = vmatprep.subr.mxu0 0.0
        %2806 = vmatpush1.msra.mxu0 0.0
        %2807 = vmatprep.subr.mxu0 0.0
        %2808 = vmatpush1.msra.mxu0 0.0
        %2809 = vmatprep.subr.mxu0 0.0
        %2810 = vmatpush1.msra.mxu0 0.0
        %2811 = vmatprep.subr.mxu0 0.0
        %2812 = vmatpush1.msra.mxu0 0.0
        %2813 = vmatprep.subr.mxu0 0.0
        %2814 = vmatpush1.msra.mxu0 0.0
        %2815 = vmatprep.subr.mxu0 0.0
        %2816 = vmatpush1.msra.mxu0 0.0
        %2817 = vmatprep.subr.mxu0 0.0
        %2818 = vmatpush1.msra.mxu0 0.0
        %2819 = vmatprep.subr.mxu0 0.0
        %2820 = vmatpush1.msra.mxu0 0.0
        %2821 = vmatprep.subr.mxu0 0.0
        %2822 = vmatpush1.msra.mxu0 0.0
        %v2823 = vand.u32 %v2275, 4294901760
        %2824 = vmatprep.subr.mxu0 %v2823
        %v2825 = vand.u32 %v2274, 4294901760
        %2826 = vmatpush1.msra.mxu0 %v2825
        %v2827 = vand.u32 %v2273, 4294901760
        %2828 = vmatprep.subr.mxu0 %v2827
        %v2829 = vand.u32 %v2272, 4294901760
        %2830 = vmatpush1.msra.mxu0 %v2829
        %v2831 = vand.u32 %v2271, 4294901760
        %2832 = vmatprep.subr.mxu0 %v2831
        %v2833 = vand.u32 %v2270, 4294901760
        %2834 = vmatpush1.msra.mxu0 %v2833
        %v2835 = vand.u32 %v2269, 4294901760
        %2836 = vmatprep.subr.mxu0 %v2835
        %v2837 = vand.u32 %v2268, 4294901760
        %2838 = vmatpush1.msra.mxu0 %v2837
        %2839 = vmatprep.subr.mxu0 0.0
        %2840 = vmatpush2.msra.mxu0 0.0
        %2841 = vmatprep.subr.mxu0 0.0
        %2842 = vmatpush2.msra.mxu0 0.0
        %2843 = vmatprep.subr.mxu0 0.0
        %2844 = vmatpush2.msra.mxu0 0.0
        %2845 = vmatprep.subr.mxu0 0.0
        %2846 = vmatpush2.msra.mxu0 0.0
        %2847 = vmatprep.subr.mxu0 0.0
        %2848 = vmatpush2.msra.mxu0 0.0
        %2849 = vmatprep.subr.mxu0 0.0
        %2850 = vmatpush2.msra.mxu0 0.0
        %2851 = vmatprep.subr.mxu0 0.0
        %2852 = vmatpush2.msra.mxu0 0.0
        %2853 = vmatprep.subr.mxu0 0.0
        %2854 = vmatpush2.msra.mxu0 0.0
        %2855 = vmatprep.subr.mxu0 0.0
        %2856 = vmatpush2.msra.mxu0 0.0
        %2857 = vmatprep.subr.mxu0 0.0
        %2858 = vmatpush2.msra.mxu0 0.0
        %2859 = vmatprep.subr.mxu0 0.0
        %2860 = vmatpush2.msra.mxu0 0.0
        %2861 = vmatprep.subr.mxu0 0.0
        %2862 = vmatpush2.msra.mxu0 0.0
        %2863 = vmatprep.subr.mxu0 0.0
        %2864 = vmatpush2.msra.mxu0 0.0
        %2865 = vmatprep.subr.mxu0 0.0
        %2866 = vmatpush2.msra.mxu0 0.0
        %2867 = vmatprep.subr.mxu0 0.0
        %2868 = vmatpush2.msra.mxu0 0.0
        %2869 = vmatprep.subr.mxu0 0.0
        %2870 = vmatpush2.msra.mxu0 0.0
        %2871 = vmatprep.mubr.f32.mxu0 0.0
        %v2872 = vand.u32 %v2290, 4294901760
        %2873 = vmatmul.mubr.f32.gmra.mxu0 %v2872
        %v2874 = vpop.f32.mrf.mxu0
        %v2875 = vadd.f32 %v2788, %v2874
        %v2876 = vpop.f32.mrf.mxu0
        %v2877 = vadd.f32 %v2790, %v2876
        %2878 = vmatprep.mubr.f32.mxu0 0.0
        %v2879 = vand.u32 %v2292, 4294901760
        %2880 = vmatmul.mubr.f32.gmra.mxu0 %v2879
        %v2881 = vpop.f32.mrf.mxu0
        %v2882 = vadd.f32 %v2795, %v2881
        %v2883 = vpop.f32.mrf.mxu0
        %v2884 = vadd.f32 %v2797, %v2883
        %2885 = vdwg.mxu0
        %v2886 = vadd.f32 %v2875, %v228
        %v2887 = vadd.f32 %v2877, %v229
        %v2888 = vadd.f32 %v2882, %v230
        %v2889 = vadd.f32 %v2884, %v231
        %2890 = vst [vmem:[%s217] sm:$0xff] %v2886
        %2891 = vst [vmem:[%s217 + $0x8] sm:$0xff] %v2887
        %2892 = vst [vmem:[%s217 + $0x10] sm:$0xff] %v2888
        %2893 = vst [vmem:[%s217 + $0x18] sm:$0xff] %v2889
        %s2894 = sand.u32 %s97, 1
        %s2895 = scalar_lea.sflag [#allocation4], %s2894
        %s2896 = sand.u32 %s97, 1
        %s2897 = smul.addr %s2896, 32
        %s2898 = scalar_lea.vmem [#allocation8], %s2897
        // Predicated region
        $region45: #{tpu_custom_call.1} parent=31 // pred_check
          %p2899 = pneg %p107
        $region46: #{tpu_custom_call.1} parent=31 // pred_check_branch
          %2901 = sbr.rel (%p2899) target = $region48
        $region47: #{tpu_custom_call.1} parent=31 // pred_region
          %s2903 = ssub.s32 512, 512
          %2904 = vsyncadd %s2895, %s2903
          %s2905 = smul.addr %s21, 4
          %s2906 = smul.addr %s2905, 128
          %s2907 = scalar_lea.hbm %s3, %s2906
          %s2908 = sshll.u32 %s2898, 4
          %s2909 = int_to_ptr.vmem [resolvable:$true] %s2908
          %2914 = dma.vmem_to_hbm [thread:$0]  %s2909, 512, %s2907, %s2895, 256, 256, 16
        $region48: #{tpu_custom_call.1} parent=31 // pred_fallthru
          _
      $region32: #{tpu_custom_call.1} parent=5 // pred_fallthru
        _
      %p2915 = scmp.le.s32.totalorder 2, %s16
      // Predicated region
      $region49: #{tpu_custom_call.1} parent=5 // pred_check
        %p2916 = pneg %p2915
      $region50: #{tpu_custom_call.1} parent=5 // pred_check_branch
        %2918 = sbr.rel (%p2916) target = $region52
      $region51: #{tpu_custom_call.1} parent=5 // pred_region
        %s2919 = ssub.s32 %s16, 2
        // Predicated region
        $region53: #{tpu_custom_call.1} parent=51 // pred_check
          %p2920 = pneg %p113
        $region54: #{tpu_custom_call.1} parent=51 // pred_check_branch
          %2922 = sbr.rel (%p2920) target = $region56
        $region55: #{tpu_custom_call.1} parent=51 // pred_region
          %s2923 = sand.u32 %s98, 1
          %s2924 = scalar_lea.sflag [#allocation4], %s2923
          %s2925 = sand.u32 %s98, 1
          %s2926 = smul.addr %s2925, 32
          %s2927 = scalar_lea.vmem [#allocation8], %s2926
          %2928 = dma.done %s2924, 512
        $region56: #{tpu_custom_call.1} parent=51 // pred_fallthru
          _
      $region52: #{tpu_custom_call.1} parent=5 // pred_fallthru
        _
    $region6: #{tpu_custom_call.1} parent=1 // loop_footer
      %s20 = sadd.s32 1, %s16
    $region7: #{tpu_custom_call.1} parent=1 // loop_footer_branch
      %15 = sbr.rel target = $region3
    $region8: #{tpu_custom_call.1} parent=1 // loop_exit
      _
    %2929 = vsyncpa [#allocation3], 1
    %s2930 = scalar_lea.sflag [#allocation3], 1
    %2931 = vsyncpa %s2930, 1
    %2932 = vsyncpa [#allocation6], 1
    %2933 = vsyncpa [#allocation4], 1
    %s2934 = scalar_lea.sflag [#allocation4], 1
    %2935 = vsyncpa %s2934, 1

</llo_original>
